<compile_context>
chip_gen: v7x
topology: tpu7x:2x2x1
jax: 0.10.0
libtpu: 0.0.40
codegen_flags: <defaults>
</compile_context>

<pallas_src>
import jax
import jax.numpy as jnp
from jax.experimental import pallas as pl
from jax.experimental.pallas import tpu as pltpu

N_ACTIONS = 9
N_STATE = 4
N_TILE = 20
STATE_LEN = 4
BN_EPS = 1e-5

CPAD = 128          # padded channel width (lane dim) for all conv stages
OH1 = 8             # conv1 output spatial (36 -> 8, k=8 s=4)
OH2 = 3             # conv2 output spatial (8 -> 3, k=4 s=2)
K2 = 4
HID = 8 * 8 * 8 + N_TILE * N_STATE      # 592
HID_PAD = 640
FC1_W = 512


def _pad8(n):
    return ((n + 7) // 8) * 8


def _spec(shape):
    n = len(shape)
    return pl.BlockSpec(shape, lambda i, _n=n: (0,) * _n)


# ----------------------------------------------------------------------------
# Host glue: conv1 im2col with phase-major row permutation.
# Row order (rh, rw, qh, qw, b)  where oh = 2*qh + rh, ow = 2*qw + rw.
# With this ordering every conv2 weight position reads ONE contiguous slice.
# ----------------------------------------------------------------------------
def im2col_conv1(x):
    """x: [B, 36, 36, 4] -> P1: [B*64, 256]; cols ordered (kh, kw, ci)."""
    B = x.shape[0]
    k, s, oh = 8, 4, OH1
    cols = []
    for i in range(k):
        for j in range(k):
            cols.append(x[:, i:i + (oh - 1) * s + 1:s,
                          j:j + (oh - 1) * s + 1:s, :])        # [B, 8, 8, 4]
    p = jnp.concatenate(cols, axis=-1)                          # [B, 8, 8, 256]
    p = p.reshape(B, 4, 2, 4, 2, k * k * STATE_LEN)             # (b,qh,rh,qw,rw,f)
    p = jnp.transpose(p, (2, 4, 1, 3, 0, 5))                    # (rh,rw,qh,qw,b,f)
    return p.reshape(B * oh * oh, k * k * STATE_LEN)


# ----------------------------------------------------------------------------
# Fused forward kernel (conv1/2/3 + BN-fold + ReLU + fc1/fc2/fc3)
# ----------------------------------------------------------------------------
def _make_kernel(B, RF, R1, R1P):
    bf16 = jnp.bfloat16
    f32 = jnp.float32
    RB = 16 * B            # conv2 rows per weight position (4x4 q-grid x batch)

    def kernel(p1_ref, state_ref, w1_ref, b1_ref, w2_ref, b2_ref,
               w3_ref, b3_ref, wf1_ref, bf1_ref, wf2_ref, bf2_ref,
               wf3_ref, bf3_ref, o_ref, y1_ref, y2_ref, h0_ref):
        # ---- conv1 (+ folded BN + /255) + ReLU -> bf16 VMEM scratch ---------
        y1 = jnp.dot(p1_ref[...], w1_ref[...], preferred_element_type=f32)
        y1_ref[0:R1, :] = jnp.maximum(y1 + b1_ref[...], 0.0).astype(bf16)
        # Tail rows are touched by the shifted conv2 slices but only ever feed
        # junk output rows; zero them (one aligned store) so all math is finite.
        y1_ref[R1:R1P, :] = jnp.zeros((R1P - R1, CPAD), bf16)

        # ---- conv2: 16 accumulated matmuls over contiguous shifted slices ---
        # y1 rows are (rh, rw, qh, qw, b); weight position kh=2*ah+rh,
        # kw=2*aw+rw needs exactly the contiguous RB-row slice starting at
        # ((rh*2+rw)*16 + ah*4 + aw)*B.  Output rows are (q=oi*4+oj, b);
        # rows with q in {3,7,11..15} are junk and are never read downstream.
        y2 = None
        for kh in range(K2):
            rh, ah = kh % 2, kh // 2
            for kw in range(K2):
                rw, aw = kw % 2, kw // 2
                start = ((rh * 2 + rw) * 16 + ah * 4 + aw) * B
                blk = (kh * K2 + kw) * CPAD
                t = jnp.dot(y1_ref[start:start + RB, :],
                            w2_ref[blk:blk + CPAD, :],
                            preferred_element_type=f32)
                y2 = t if y2 is None else y2 + t
        y2_ref[...] = jnp.maximum(y2 + b2_ref[...], 0.0).astype(bf16)

        # ---- conv3 (3x3 -> 1x1): 9 accumulated matmuls, contiguous slices ---
        y3 = None
        for pi in range(OH2):
            for pj in range(OH2):
                start = (pi * 4 + pj) * B
                blk = (pi * OH2 + pj) * CPAD
                t = jnp.dot(y2_ref[start:start + RF, :],
                            w3_ref[blk:blk + CPAD, :],
                            preferred_element_type=f32)
                y3 = t if y3 is None else y3 + t
        y3 = jnp.maximum(y3 + b3_ref[...], 0.0)       # [RF, 128]; rows >= B junk

        # ---- fc stack: fused concat(conv_feat | tiled_state) in one block ---
        h0_ref[:, 0:CPAD] = y3.astype(bf16)
        h0_ref[:, CPAD:2 * CPAD] = state_ref[...]
        h1 = jnp.dot(h0_ref[...], wf1_ref[...], preferred_element_type=f32)
        h1 = jnp.maximum(h1 + bf1_ref[...], 0.0)                    # [RF, 512]
        h2 = jnp.dot(h1.astype(bf16), wf2_ref[...], preferred_element_type=f32)
        h2 = jnp.maximum(h2 + bf2_ref[...], 0.0)                    # [RF, 640]
        o_ref[...] = (jnp.dot(h2.astype(bf16), wf3_ref[...],
                              preferred_element_type=f32) + bf3_ref[...])

    return kernel


# ----------------------------------------------------------------------------
# Parameter init (matches the torch module's init scheme), with BN folding,
# /255 folding, lane/sublane padding and bf16 weight storage.
# ----------------------------------------------------------------------------
def init_params(key):
    ks = jax.random.split(key, 6)

    def xavier_conv(k, kh, kw, cin, cout):
        fan_in, fan_out = cin * kh * kw, cout * kh * kw
        std = (2.0 / (fan_in + fan_out)) ** 0.5
        return jax.random.normal(k, (kh * kw * cin, cout), jnp.float32) * std

    def kaiming_linear(k, fin, fout):
        std = (2.0 / fin) ** 0.5
        return jax.random.normal(k, (fin, fout), jnp.float32) * std

    # eval-mode BN fold: gamma=1, beta=0, running mean=0, var=1, conv bias=0
    bn_scale = 1.0 / (1.0 + BN_EPS) ** 0.5

    # conv1: fold BN AND the /255 input scaling into the weight
    w_c1 = xavier_conv(ks[0], 8, 8, STATE_LEN, 32) * (bn_scale / 255.0)
    w_c1 = jnp.pad(w_c1, ((0, 0), (0, CPAD - 32)))                   # [256, 128]

    # conv2: 16 stacked [128, 128] blocks, one per (kh, kw)
    w_c2 = xavier_conv(ks[1], 4, 4, 32, 64) * bn_scale               # [512, 64]
    w_c2 = w_c2.reshape(16, 32, 64)
    w_c2 = jnp.pad(w_c2, ((0, 0), (0, CPAD - 32), (0, CPAD - 64)))
    w_c2 = w_c2.reshape(16 * CPAD, CPAD)                              # [2048, 128]

    # conv3: 9 stacked [128, 128] blocks, one per (pi, pj)
    w_c3 = xavier_conv(ks[2], 3, 3, 64, 64)                           # [576, 64]
    w_c3 = w_c3.reshape(9, 64, 64)
    w_c3 = jnp.pad(w_c3, ((0, 0), (0, CPAD - 64), (0, CPAD - 64)))
    w_c3 = w_c3.reshape(9 * CPAD, CPAD)                               # [1152, 128]

    # fc1: fused concat weight [256, 512]; rows 0..63 <- conv feats,
    #      rows 128..207 <- tiled state, zero elsewhere
    w_f1_raw = kaiming_linear(ks[3], 64 + N_TILE * N_STATE, FC1_W)    # [144, 512]
    w_f1 = jnp.zeros((2 * CPAD, FC1_W), jnp.float32)
    w_f1 = w_f1.at[:64, :].set(w_f1_raw[:64])
    w_f1 = w_f1.at[CPAD:CPAD + N_TILE * N_STATE, :].set(w_f1_raw[64:])

    w_f2 = jnp.pad(kaiming_linear(ks[4], FC1_W, HID),
                   ((0, 0), (0, HID_PAD - HID)))                      # [512, 640]
    w_f3 = jnp.pad(kaiming_linear(ks[5], HID, N_ACTIONS),
                   ((0, HID_PAD - HID), (0, CPAD - N_ACTIONS)))       # [640, 128]

    return {
        "w_c1": w_c1.astype(jnp.bfloat16),
        "w_c2": w_c2.astype(jnp.bfloat16),
        "w_c3": w_c3.astype(jnp.bfloat16),
        "w_f1": w_f1.astype(jnp.bfloat16),
        "w_f2": w_f2.astype(jnp.bfloat16),
        "w_f3": w_f3.astype(jnp.bfloat16),
        # folded BN shifts / biases (all zero for this init scheme)
        "b_c1": jnp.zeros((1, CPAD), jnp.float32),
        "b_c2": jnp.zeros((1, CPAD), jnp.float32),
        "b_c3": jnp.zeros((1, CPAD), jnp.float32),
        "b_f1": jnp.zeros((1, FC1_W), jnp.float32),
        "b_f2": jnp.zeros((1, HID_PAD), jnp.float32),
        "b_f3": jnp.zeros((1, CPAD), jnp.float32),
    }


# ----------------------------------------------------------------------------
# Forward pass (mirrors ConvNet.forward)
# ----------------------------------------------------------------------------
def convnet_forward(params, x, state):
    # x: [B, C, 36, 36] (NCHW, like PyTorch), state: [B, >=N_STATE]
    B = x.shape[0]
    x = x[:, -STATE_LEN:, :, :].astype(jnp.float32)    # /255 folded into w_c1
    state = state[:, -N_STATE:].astype(jnp.float32)
    x = jnp.transpose(x, (0, 2, 3, 1))                 # NHWC

    p1 = im2col_conv1(x).astype(jnp.bfloat16)          # [B*64, 256]

    R1 = B * OH1 * OH1                                 # conv1 rows
    R1P = R1 + _pad8(5 * B)                            # + shift-tail rows for conv2
    RF = max(B, min(8, 6 * B))                         # conv3 / fc row count

    # tiled state packed into a padded 128-lane bf16 block (cols 0..79 valid)
    st = jnp.tile(state, (1, N_TILE))                  # [B, 80]
    state_block = jnp.zeros((RF, CPAD), jnp.bfloat16)
    state_block = state_block.at[:B, :N_TILE * N_STATE].set(st.astype(jnp.bfloat16))

    worder = ("w_c1", "b_c1", "w_c2", "b_c2", "w_c3", "b_c3",
              "w_f1", "b_f1", "w_f2", "b_f2", "w_f3", "b_f3")
    args = (p1, state_block) + tuple(params[k] for k in worder)

    out = pl.pallas_call(
        _make_kernel(B, RF, R1, R1P),
        out_shape=jax.ShapeDtypeStruct((RF, CPAD), jnp.float32),
        grid=(1,),
        in_specs=[_spec(a.shape) for a in args],
        out_specs=_spec((RF, CPAD)),
        scratch_shapes=[
            pltpu.VMEM((R1P, CPAD), jnp.bfloat16),     # conv1 activations (+tail)
            pltpu.VMEM((16 * B, CPAD), jnp.bfloat16),  # conv2 activations (4x4 q-grid)
            pltpu.VMEM((RF, 2 * CPAD), jnp.bfloat16),  # fused fc1 input block
        ],
        compiler_params=pltpu.CompilerParams(
            dimension_semantics=("arbitrary",)),
    )(*args)

    return out[:B, :N_ACTIONS]                         # [B, 9]


if __name__ == "__main__":
    key = jax.random.PRNGKey(0)
    k_param, k_x, k_s = jax.random.split(key, 3)

    params = init_params(k_param)

    B = 2
    # 36x36 spatial is implied by the module: conv stack -> 64 feats,
    # 64 + N_TILE*N_STATE (80) = 144 = fc1 input size.
    x = jax.random.uniform(k_x, (B, STATE_LEN, 36, 36),
                           jnp.float32, 0.0, 255.0)
    state = jax.random.uniform(k_s, (B, N_STATE), jnp.float32, -1.0, 1.0)

    fwd = jax.jit(convnet_forward)
    out = jax.block_until_ready(fwd(params, x, state))
    assert out.shape == (B, N_ACTIONS) and out.dtype == jnp.float32
    print("KERNEL_OK")
</pallas_src>

<mosaic_0001>
module attributes {stable_mosaic.version = 11 : i64} {
  func.func @kernel(%arg0: i32, %arg1: memref<128x256xbf16, #tpu.memory_space<vmem>>, %arg2: memref<8x128xbf16, #tpu.memory_space<vmem>>, %arg3: memref<256x128xbf16, #tpu.memory_space<vmem>>, %arg4: memref<1x128xf32, #tpu.memory_space<vmem>>, %arg5: memref<2048x128xbf16, #tpu.memory_space<vmem>>, %arg6: memref<1x128xf32, #tpu.memory_space<vmem>>, %arg7: memref<1152x128xbf16, #tpu.memory_space<vmem>>, %arg8: memref<1x128xf32, #tpu.memory_space<vmem>>, %arg9: memref<256x512xbf16, #tpu.memory_space<vmem>>, %arg10: memref<1x512xf32, #tpu.memory_space<vmem>>, %arg11: memref<512x640xbf16, #tpu.memory_space<vmem>>, %arg12: memref<1x640xf32, #tpu.memory_space<vmem>>, %arg13: memref<640x128xbf16, #tpu.memory_space<vmem>>, %arg14: memref<1x128xf32, #tpu.memory_space<vmem>>, %arg15: memref<8x128xf32, #tpu.memory_space<vmem>>, %arg16: memref<144x128xbf16, #tpu.memory_space<vmem>>, %arg17: memref<32x128xbf16, #tpu.memory_space<vmem>>, %arg18: memref<8x256xbf16, #tpu.memory_space<vmem>>) attributes {dimension_semantics = [#tpu.dimension_semantics<arbitrary>], iteration_bounds = array<i64: 1>, scalar_prefetch = 0 : i64, scratch_operands = 3 : i64, tpu.core_type = #tpu.core_type<tc>, window_params = [{pipeline_mode = #tpu.pipeline_mode<synchronous>, transform_indices = @transform_0, window_bounds = array<i64: 128, 256>}, {pipeline_mode = #tpu.pipeline_mode<synchronous>, transform_indices = @transform_1, window_bounds = array<i64: 8, 128>}, {pipeline_mode = #tpu.pipeline_mode<synchronous>, transform_indices = @transform_2, window_bounds = array<i64: 256, 128>}, {pipeline_mode = #tpu.pipeline_mode<synchronous>, transform_indices = @transform_3, window_bounds = array<i64: 1, 128>}, {pipeline_mode = #tpu.pipeline_mode<synchronous>, transform_indices = @transform_4, window_bounds = array<i64: 2048, 128>}, {pipeline_mode = #tpu.pipeline_mode<synchronous>, transform_indices = @transform_5, window_bounds = array<i64: 1, 128>}, {pipeline_mode = #tpu.pipeline_mode<synchronous>, transform_indices = @transform_6, window_bounds = array<i64: 1152, 128>}, {pipeline_mode = #tpu.pipeline_mode<synchronous>, transform_indices = @transform_7, window_bounds = array<i64: 1, 128>}, {pipeline_mode = #tpu.pipeline_mode<synchronous>, transform_indices = @transform_8, window_bounds = array<i64: 256, 512>}, {pipeline_mode = #tpu.pipeline_mode<synchronous>, transform_indices = @transform_9, window_bounds = array<i64: 1, 512>}, {pipeline_mode = #tpu.pipeline_mode<synchronous>, transform_indices = @transform_10, window_bounds = array<i64: 512, 640>}, {pipeline_mode = #tpu.pipeline_mode<synchronous>, transform_indices = @transform_11, window_bounds = array<i64: 1, 640>}, {pipeline_mode = #tpu.pipeline_mode<synchronous>, transform_indices = @transform_12, window_bounds = array<i64: 640, 128>}, {pipeline_mode = #tpu.pipeline_mode<synchronous>, transform_indices = @transform_13, window_bounds = array<i64: 1, 128>}, {pipeline_mode = #tpu.pipeline_mode<synchronous>, transform_indices = @transform_14, window_bounds = array<i64: 8, 128>}]} {
    %c0 = arith.constant 0 : index
    %c0_0 = arith.constant 0 : index
    %0 = vector.load %arg1[%c0, %c0_0] : memref<128x256xbf16, #tpu.memory_space<vmem>>, vector<128x256xbf16>
    %c0_1 = arith.constant 0 : index
    %c0_2 = arith.constant 0 : index
    %1 = vector.load %arg3[%c0_1, %c0_2] : memref<256x128xbf16, #tpu.memory_space<vmem>>, vector<256x128xbf16>
    %cst = arith.constant dense<0.000000e+00> : vector<128x128xf32>
    %2 = tpu.matmul %0, %1, %cst {dimension_numbers = #tpu.dot_dimension_numbers<[1], [0], [0], [1], [0, 0, 1, 1], [], []>} : vector<128x256xbf16>, vector<256x128xbf16>, vector<128x128xf32> -> vector<128x128xf32>
    %c0_3 = arith.constant 0 : index
    %c0_4 = arith.constant 0 : index
    %3 = vector.load %arg4[%c0_3, %c0_4] : memref<1x128xf32, #tpu.memory_space<vmem>>, vector<1x128xf32>
    %4 = vector.broadcast %3 : vector<1x128xf32> to vector<128x128xf32>
    %5 = arith.addf %2, %4 : vector<128x128xf32>
    %cst_5 = arith.constant 0.000000e+00 : f32
    %6 = vector.broadcast %cst_5 : f32 to vector<128x128xf32>
    %7 = arith.maximumf %5, %6 : vector<128x128xf32>
    %8 = arith.truncf %7 : vector<128x128xf32> to vector<128x128xbf16>
    %c0_6 = arith.constant 0 : index
    %c0_7 = arith.constant 0 : index
    %9 = vector.load %arg16[%c0_6, %c0_7] : memref<144x128xbf16, #tpu.memory_space<vmem>>, vector<128x128xbf16>
    tpu.vector_store %arg16[%c0_6, %c0_7], %8 {strides = array<i32>} : memref<144x128xbf16, #tpu.memory_space<vmem>>, vector<128x128xbf16>,
    %cst_8 = arith.constant 0.000000e+00 : bf16
    %10 = vector.broadcast %cst_8 : bf16 to vector<16x128xbf16>
    %c128 = arith.constant 128 : index
    %c0_9 = arith.constant 0 : index
    %11 = vector.load %arg16[%c128, %c0_9] : memref<144x128xbf16, #tpu.memory_space<vmem>>, vector<16x128xbf16>
    tpu.vector_store %arg16[%c128, %c0_9], %10 {strides = array<i32>} : memref<144x128xbf16, #tpu.memory_space<vmem>>, vector<16x128xbf16>,
    %c0_10 = arith.constant 0 : index
    %c0_11 = arith.constant 0 : index
    %12 = vector.load %arg16[%c0_10, %c0_11] : memref<144x128xbf16, #tpu.memory_space<vmem>>, vector<32x128xbf16>
    %c0_12 = arith.constant 0 : index
    %c0_13 = arith.constant 0 : index
    %13 = vector.load %arg5[%c0_12, %c0_13] : memref<2048x128xbf16, #tpu.memory_space<vmem>>, vector<128x128xbf16>
    %cst_14 = arith.constant dense<0.000000e+00> : vector<32x128xf32>
    %14 = tpu.matmul %12, %13, %cst_14 {dimension_numbers = #tpu.dot_dimension_numbers<[1], [0], [0], [1], [0, 0, 1, 1], [], []>} : vector<32x128xbf16>, vector<128x128xbf16>, vector<32x128xf32> -> vector<32x128xf32>
    %c32 = arith.constant 32 : index
    %c0_15 = arith.constant 0 : index
    %15 = vector.load %arg16[%c32, %c0_15] : memref<144x128xbf16, #tpu.memory_space<vmem>>, vector<32x128xbf16>
    %c128_16 = arith.constant 128 : index
    %c0_17 = arith.constant 0 : index
    %16 = vector.load %arg5[%c128_16, %c0_17] : memref<2048x128xbf16, #tpu.memory_space<vmem>>, vector<128x128xbf16>
    %cst_18 = arith.constant dense<0.000000e+00> : vector<32x128xf32>
    %17 = tpu.matmul %15, %16, %cst_18 {dimension_numbers = #tpu.dot_dimension_numbers<[1], [0], [0], [1], [0, 0, 1, 1], [], []>} : vector<32x128xbf16>, vector<128x128xbf16>, vector<32x128xf32> -> vector<32x128xf32>
    %18 = arith.addf %14, %17 : vector<32x128xf32>
    %c2 = arith.constant 2 : index
    %c0_19 = arith.constant 0 : index
    %19 = vector.load %arg16[%c2, %c0_19] : memref<144x128xbf16, #tpu.memory_space<vmem>>, vector<32x128xbf16>
    %c256 = arith.constant 256 : index
    %c0_20 = arith.constant 0 : index
    %20 = vector.load %arg5[%c256, %c0_20] : memref<2048x128xbf16, #tpu.memory_space<vmem>>, vector<128x128xbf16>
    %cst_21 = arith.constant dense<0.000000e+00> : vector<32x128xf32>
    %21 = tpu.matmul %19, %20, %cst_21 {dimension_numbers = #tpu.dot_dimension_numbers<[1], [0], [0], [1], [0, 0, 1, 1], [], []>} : vector<32x128xbf16>, vector<128x128xbf16>, vector<32x128xf32> -> vector<32x128xf32>
    %22 = arith.addf %18, %21 : vector<32x128xf32>
    %c34 = arith.constant 34 : index
    %c0_22 = arith.constant 0 : index
    %23 = vector.load %arg16[%c34, %c0_22] : memref<144x128xbf16, #tpu.memory_space<vmem>>, vector<32x128xbf16>
    %c384 = arith.constant 384 : index
    %c0_23 = arith.constant 0 : index
    %24 = vector.load %arg5[%c384, %c0_23] : memref<2048x128xbf16, #tpu.memory_space<vmem>>, vector<128x128xbf16>
    %cst_24 = arith.constant dense<0.000000e+00> : vector<32x128xf32>
    %25 = tpu.matmul %23, %24, %cst_24 {dimension_numbers = #tpu.dot_dimension_numbers<[1], [0], [0], [1], [0, 0, 1, 1], [], []>} : vector<32x128xbf16>, vector<128x128xbf16>, vector<32x128xf32> -> vector<32x128xf32>
    %26 = arith.addf %22, %25 : vector<32x128xf32>
    %c64 = arith.constant 64 : index
    %c0_25 = arith.constant 0 : index
    %27 = vector.load %arg16[%c64, %c0_25] : memref<144x128xbf16, #tpu.memory_space<vmem>>, vector<32x128xbf16>
    %c512 = arith.constant 512 : index
    %c0_26 = arith.constant 0 : index
    %28 = vector.load %arg5[%c512, %c0_26] : memref<2048x128xbf16, #tpu.memory_space<vmem>>, vector<128x128xbf16>
    %cst_27 = arith.constant dense<0.000000e+00> : vector<32x128xf32>
    %29 = tpu.matmul %27, %28, %cst_27 {dimension_numbers = #tpu.dot_dimension_numbers<[1], [0], [0], [1], [0, 0, 1, 1], [], []>} : vector<32x128xbf16>, vector<128x128xbf16>, vector<32x128xf32> -> vector<32x128xf32>
    %30 = arith.addf %26, %29 : vector<32x128xf32>
    %c96 = arith.constant 96 : index
    %c0_28 = arith.constant 0 : index
    %31 = vector.load %arg16[%c96, %c0_28] : memref<144x128xbf16, #tpu.memory_space<vmem>>, vector<32x128xbf16>
    %c640 = arith.constant 640 : index
    %c0_29 = arith.constant 0 : index
    %32 = vector.load %arg5[%c640, %c0_29] : memref<2048x128xbf16, #tpu.memory_space<vmem>>, vector<128x128xbf16>
    %cst_30 = arith.constant dense<0.000000e+00> : vector<32x128xf32>
    %33 = tpu.matmul %31, %32, %cst_30 {dimension_numbers = #tpu.dot_dimension_numbers<[1], [0], [0], [1], [0, 0, 1, 1], [], []>} : vector<32x128xbf16>, vector<128x128xbf16>, vector<32x128xf32> -> vector<32x128xf32>
    %34 = arith.addf %30, %33 : vector<32x128xf32>
    %c66 = arith.constant 66 : index
    %c0_31 = arith.constant 0 : index
    %35 = vector.load %arg16[%c66, %c0_31] : memref<144x128xbf16, #tpu.memory_space<vmem>>, vector<32x128xbf16>
    %c768 = arith.constant 768 : index
    %c0_32 = arith.constant 0 : index
    %36 = vector.load %arg5[%c768, %c0_32] : memref<2048x128xbf16, #tpu.memory_space<vmem>>, vector<128x128xbf16>
    %cst_33 = arith.constant dense<0.000000e+00> : vector<32x128xf32>
    %37 = tpu.matmul %35, %36, %cst_33 {dimension_numbers = #tpu.dot_dimension_numbers<[1], [0], [0], [1], [0, 0, 1, 1], [], []>} : vector<32x128xbf16>, vector<128x128xbf16>, vector<32x128xf32> -> vector<32x128xf32>
    %38 = arith.addf %34, %37 : vector<32x128xf32>
    %c98 = arith.constant 98 : index
    %c0_34 = arith.constant 0 : index
    %39 = vector.load %arg16[%c98, %c0_34] : memref<144x128xbf16, #tpu.memory_space<vmem>>, vector<32x128xbf16>
    %c896 = arith.constant 896 : index
    %c0_35 = arith.constant 0 : index
    %40 = vector.load %arg5[%c896, %c0_35] : memref<2048x128xbf16, #tpu.memory_space<vmem>>, vector<128x128xbf16>
    %cst_36 = arith.constant dense<0.000000e+00> : vector<32x128xf32>
    %41 = tpu.matmul %39, %40, %cst_36 {dimension_numbers = #tpu.dot_dimension_numbers<[1], [0], [0], [1], [0, 0, 1, 1], [], []>} : vector<32x128xbf16>, vector<128x128xbf16>, vector<32x128xf32> -> vector<32x128xf32>
    %42 = arith.addf %38, %41 : vector<32x128xf32>
    %c8 = arith.constant 8 : index
    %c0_37 = arith.constant 0 : index
    %43 = vector.load %arg16[%c8, %c0_37] : memref<144x128xbf16, #tpu.memory_space<vmem>>, vector<32x128xbf16>
    %c1024 = arith.constant 1024 : index
    %c0_38 = arith.constant 0 : index
    %44 = vector.load %arg5[%c1024, %c0_38] : memref<2048x128xbf16, #tpu.memory_space<vmem>>, vector<128x128xbf16>
    %cst_39 = arith.constant dense<0.000000e+00> : vector<32x128xf32>
    %45 = tpu.matmul %43, %44, %cst_39 {dimension_numbers = #tpu.dot_dimension_numbers<[1], [0], [0], [1], [0, 0, 1, 1], [], []>} : vector<32x128xbf16>, vector<128x128xbf16>, vector<32x128xf32> -> vector<32x128xf32>
    %46 = arith.addf %42, %45 : vector<32x128xf32>
    %c40 = arith.constant 40 : index
    %c0_40 = arith.constant 0 : index
    %47 = vector.load %arg16[%c40, %c0_40] : memref<144x128xbf16, #tpu.memory_space<vmem>>, vector<32x128xbf16>
    %c1152 = arith.constant 1152 : index
    %c0_41 = arith.constant 0 : index
    %48 = vector.load %arg5[%c1152, %c0_41] : memref<2048x128xbf16, #tpu.memory_space<vmem>>, vector<128x128xbf16>
    %cst_42 = arith.constant dense<0.000000e+00> : vector<32x128xf32>
    %49 = tpu.matmul %47, %48, %cst_42 {dimension_numbers = #tpu.dot_dimension_numbers<[1], [0], [0], [1], [0, 0, 1, 1], [], []>} : vector<32x128xbf16>, vector<128x128xbf16>, vector<32x128xf32> -> vector<32x128xf32>
    %50 = arith.addf %46, %49 : vector<32x128xf32>
    %c10 = arith.constant 10 : index
    %c0_43 = arith.constant 0 : index
    %51 = vector.load %arg16[%c10, %c0_43] : memref<144x128xbf16, #tpu.memory_space<vmem>>, vector<32x128xbf16>
    %c1280 = arith.constant 1280 : index
    %c0_44 = arith.constant 0 : index
    %52 = vector.load %arg5[%c1280, %c0_44] : memref<2048x128xbf16, #tpu.memory_space<vmem>>, vector<128x128xbf16>
    %cst_45 = arith.constant dense<0.000000e+00> : vector<32x128xf32>
    %53 = tpu.matmul %51, %52, %cst_45 {dimension_numbers = #tpu.dot_dimension_numbers<[1], [0], [0], [1], [0, 0, 1, 1], [], []>} : vector<32x128xbf16>, vector<128x128xbf16>, vector<32x128xf32> -> vector<32x128xf32>
    %54 = arith.addf %50, %53 : vector<32x128xf32>
    %c42 = arith.constant 42 : index
    %c0_46 = arith.constant 0 : index
    %55 = vector.load %arg16[%c42, %c0_46] : memref<144x128xbf16, #tpu.memory_space<vmem>>, vector<32x128xbf16>
    %c1408 = arith.constant 1408 : index
    %c0_47 = arith.constant 0 : index
    %56 = vector.load %arg5[%c1408, %c0_47] : memref<2048x128xbf16, #tpu.memory_space<vmem>>, vector<128x128xbf16>
    %cst_48 = arith.constant dense<0.000000e+00> : vector<32x128xf32>
    %57 = tpu.matmul %55, %56, %cst_48 {dimension_numbers = #tpu.dot_dimension_numbers<[1], [0], [0], [1], [0, 0, 1, 1], [], []>} : vector<32x128xbf16>, vector<128x128xbf16>, vector<32x128xf32> -> vector<32x128xf32>
    %58 = arith.addf %54, %57 : vector<32x128xf32>
    %c72 = arith.constant 72 : index
    %c0_49 = arith.constant 0 : index
    %59 = vector.load %arg16[%c72, %c0_49] : memref<144x128xbf16, #tpu.memory_space<vmem>>, vector<32x128xbf16>
    %c1536 = arith.constant 1536 : index
    %c0_50 = arith.constant 0 : index
    %60 = vector.load %arg5[%c1536, %c0_50] : memref<2048x128xbf16, #tpu.memory_space<vmem>>, vector<128x128xbf16>
    %cst_51 = arith.constant dense<0.000000e+00> : vector<32x128xf32>
    %61 = tpu.matmul %59, %60, %cst_51 {dimension_numbers = #tpu.dot_dimension_numbers<[1], [0], [0], [1], [0, 0, 1, 1], [], []>} : vector<32x128xbf16>, vector<128x128xbf16>, vector<32x128xf32> -> vector<32x128xf32>
    %62 = arith.addf %58, %61 : vector<32x128xf32>
    %c104 = arith.constant 104 : index
    %c0_52 = arith.constant 0 : index
    %63 = vector.load %arg16[%c104, %c0_52] : memref<144x128xbf16, #tpu.memory_space<vmem>>, vector<32x128xbf16>
    %c1664 = arith.constant 1664 : index
    %c0_53 = arith.constant 0 : index
    %64 = vector.load %arg5[%c1664, %c0_53] : memref<2048x128xbf16, #tpu.memory_space<vmem>>, vector<128x128xbf16>
    %cst_54 = arith.constant dense<0.000000e+00> : vector<32x128xf32>
    %65 = tpu.matmul %63, %64, %cst_54 {dimension_numbers = #tpu.dot_dimension_numbers<[1], [0], [0], [1], [0, 0, 1, 1], [], []>} : vector<32x128xbf16>, vector<128x128xbf16>, vector<32x128xf32> -> vector<32x128xf32>
    %66 = arith.addf %62, %65 : vector<32x128xf32>
    %c74 = arith.constant 74 : index
    %c0_55 = arith.constant 0 : index
    %67 = vector.load %arg16[%c74, %c0_55] : memref<144x128xbf16, #tpu.memory_space<vmem>>, vector<32x128xbf16>
    %c1792 = arith.constant 1792 : index
    %c0_56 = arith.constant 0 : index
    %68 = vector.load %arg5[%c1792, %c0_56] : memref<2048x128xbf16, #tpu.memory_space<vmem>>, vector<128x128xbf16>
    %cst_57 = arith.constant dense<0.000000e+00> : vector<32x128xf32>
    %69 = tpu.matmul %67, %68, %cst_57 {dimension_numbers = #tpu.dot_dimension_numbers<[1], [0], [0], [1], [0, 0, 1, 1], [], []>} : vector<32x128xbf16>, vector<128x128xbf16>, vector<32x128xf32> -> vector<32x128xf32>
    %70 = arith.addf %66, %69 : vector<32x128xf32>
    %c106 = arith.constant 106 : index
    %c0_58 = arith.constant 0 : index
    %71 = vector.load %arg16[%c106, %c0_58] : memref<144x128xbf16, #tpu.memory_space<vmem>>, vector<32x128xbf16>
    %c1920 = arith.constant 1920 : index
    %c0_59 = arith.constant 0 : index
    %72 = vector.load %arg5[%c1920, %c0_59] : memref<2048x128xbf16, #tpu.memory_space<vmem>>, vector<128x128xbf16>
    %cst_60 = arith.constant dense<0.000000e+00> : vector<32x128xf32>
    %73 = tpu.matmul %71, %72, %cst_60 {dimension_numbers = #tpu.dot_dimension_numbers<[1], [0], [0], [1], [0, 0, 1, 1], [], []>} : vector<32x128xbf16>, vector<128x128xbf16>, vector<32x128xf32> -> vector<32x128xf32>
    %74 = arith.addf %70, %73 : vector<32x128xf32>
    %c0_61 = arith.constant 0 : index
    %c0_62 = arith.constant 0 : index
    %75 = vector.load %arg6[%c0_61, %c0_62] : memref<1x128xf32, #tpu.memory_space<vmem>>, vector<1x128xf32>
    %76 = vector.broadcast %75 : vector<1x128xf32> to vector<32x128xf32>
    %77 = arith.addf %74, %76 : vector<32x128xf32>
    %cst_63 = arith.constant 0.000000e+00 : f32
    %78 = vector.broadcast %cst_63 : f32 to vector<32x128xf32>
    %79 = arith.maximumf %77, %78 : vector<32x128xf32>
    %80 = arith.truncf %79 : vector<32x128xf32> to vector<32x128xbf16>
    %c0_64 = arith.constant 0 : index
    %c0_65 = arith.constant 0 : index
    %81 = vector.load %arg17[%c0_64, %c0_65] : memref<32x128xbf16, #tpu.memory_space<vmem>>, vector<32x128xbf16>
    tpu.vector_store %arg17[%c0_64, %c0_65], %80 {strides = array<i32>} : memref<32x128xbf16, #tpu.memory_space<vmem>>, vector<32x128xbf16>,
    %c0_66 = arith.constant 0 : index
    %c0_67 = arith.constant 0 : index
    %82 = vector.load %arg17[%c0_66, %c0_67] : memref<32x128xbf16, #tpu.memory_space<vmem>>, vector<8x128xbf16>
    %c0_68 = arith.constant 0 : index
    %c0_69 = arith.constant 0 : index
    %83 = vector.load %arg7[%c0_68, %c0_69] : memref<1152x128xbf16, #tpu.memory_space<vmem>>, vector<128x128xbf16>
    %cst_70 = arith.constant dense<0.000000e+00> : vector<8x128xf32>
    %84 = tpu.matmul %82, %83, %cst_70 {dimension_numbers = #tpu.dot_dimension_numbers<[1], [0], [0], [1], [0, 0, 1, 1], [], []>} : vector<8x128xbf16>, vector<128x128xbf16>, vector<8x128xf32> -> vector<8x128xf32>
    %c2_71 = arith.constant 2 : index
    %c0_72 = arith.constant 0 : index
    %85 = vector.load %arg17[%c2_71, %c0_72] : memref<32x128xbf16, #tpu.memory_space<vmem>>, vector<8x128xbf16>
    %c128_73 = arith.constant 128 : index
    %c0_74 = arith.constant 0 : index
    %86 = vector.load %arg7[%c128_73, %c0_74] : memref<1152x128xbf16, #tpu.memory_space<vmem>>, vector<128x128xbf16>
    %cst_75 = arith.constant dense<0.000000e+00> : vector<8x128xf32>
    %87 = tpu.matmul %85, %86, %cst_75 {dimension_numbers = #tpu.dot_dimension_numbers<[1], [0], [0], [1], [0, 0, 1, 1], [], []>} : vector<8x128xbf16>, vector<128x128xbf16>, vector<8x128xf32> -> vector<8x128xf32>
    %88 = arith.addf %84, %87 : vector<8x128xf32>
    %c4 = arith.constant 4 : index
    %c0_76 = arith.constant 0 : index
    %89 = vector.load %arg17[%c4, %c0_76] : memref<32x128xbf16, #tpu.memory_space<vmem>>, vector<8x128xbf16>
    %c256_77 = arith.constant 256 : index
    %c0_78 = arith.constant 0 : index
    %90 = vector.load %arg7[%c256_77, %c0_78] : memref<1152x128xbf16, #tpu.memory_space<vmem>>, vector<128x128xbf16>
    %cst_79 = arith.constant dense<0.000000e+00> : vector<8x128xf32>
    %91 = tpu.matmul %89, %90, %cst_79 {dimension_numbers = #tpu.dot_dimension_numbers<[1], [0], [0], [1], [0, 0, 1, 1], [], []>} : vector<8x128xbf16>, vector<128x128xbf16>, vector<8x128xf32> -> vector<8x128xf32>
    %92 = arith.addf %88, %91 : vector<8x128xf32>
    %c8_80 = arith.constant 8 : index
    %c0_81 = arith.constant 0 : index
    %93 = vector.load %arg17[%c8_80, %c0_81] : memref<32x128xbf16, #tpu.memory_space<vmem>>, vector<8x128xbf16>
    %c384_82 = arith.constant 384 : index
    %c0_83 = arith.constant 0 : index
    %94 = vector.load %arg7[%c384_82, %c0_83] : memref<1152x128xbf16, #tpu.memory_space<vmem>>, vector<128x128xbf16>
    %cst_84 = arith.constant dense<0.000000e+00> : vector<8x128xf32>
    %95 = tpu.matmul %93, %94, %cst_84 {dimension_numbers = #tpu.dot_dimension_numbers<[1], [0], [0], [1], [0, 0, 1, 1], [], []>} : vector<8x128xbf16>, vector<128x128xbf16>, vector<8x128xf32> -> vector<8x128xf32>
    %96 = arith.addf %92, %95 : vector<8x128xf32>
    %c10_85 = arith.constant 10 : index
    %c0_86 = arith.constant 0 : index
    %97 = vector.load %arg17[%c10_85, %c0_86] : memref<32x128xbf16, #tpu.memory_space<vmem>>, vector<8x128xbf16>
    %c512_87 = arith.constant 512 : index
    %c0_88 = arith.constant 0 : index
    %98 = vector.load %arg7[%c512_87, %c0_88] : memref<1152x128xbf16, #tpu.memory_space<vmem>>, vector<128x128xbf16>
    %cst_89 = arith.constant dense<0.000000e+00> : vector<8x128xf32>
    %99 = tpu.matmul %97, %98, %cst_89 {dimension_numbers = #tpu.dot_dimension_numbers<[1], [0], [0], [1], [0, 0, 1, 1], [], []>} : vector<8x128xbf16>, vector<128x128xbf16>, vector<8x128xf32> -> vector<8x128xf32>
    %100 = arith.addf %96, %99 : vector<8x128xf32>
    %c12 = arith.constant 12 : index
    %c0_90 = arith.constant 0 : index
    %101 = vector.load %arg17[%c12, %c0_90] : memref<32x128xbf16, #tpu.memory_space<vmem>>, vector<8x128xbf16>
    %c640_91 = arith.constant 640 : index
    %c0_92 = arith.constant 0 : index
    %102 = vector.load %arg7[%c640_91, %c0_92] : memref<1152x128xbf16, #tpu.memory_space<vmem>>, vector<128x128xbf16>
    %cst_93 = arith.constant dense<0.000000e+00> : vector<8x128xf32>
    %103 = tpu.matmul %101, %102, %cst_93 {dimension_numbers = #tpu.dot_dimension_numbers<[1], [0], [0], [1], [0, 0, 1, 1], [], []>} : vector<8x128xbf16>, vector<128x128xbf16>, vector<8x128xf32> -> vector<8x128xf32>
    %104 = arith.addf %100, %103 : vector<8x128xf32>
    %c16 = arith.constant 16 : index
    %c0_94 = arith.constant 0 : index
    %105 = vector.load %arg17[%c16, %c0_94] : memref<32x128xbf16, #tpu.memory_space<vmem>>, vector<8x128xbf16>
    %c768_95 = arith.constant 768 : index
    %c0_96 = arith.constant 0 : index
    %106 = vector.load %arg7[%c768_95, %c0_96] : memref<1152x128xbf16, #tpu.memory_space<vmem>>, vector<128x128xbf16>
    %cst_97 = arith.constant dense<0.000000e+00> : vector<8x128xf32>
    %107 = tpu.matmul %105, %106, %cst_97 {dimension_numbers = #tpu.dot_dimension_numbers<[1], [0], [0], [1], [0, 0, 1, 1], [], []>} : vector<8x128xbf16>, vector<128x128xbf16>, vector<8x128xf32> -> vector<8x128xf32>
    %108 = arith.addf %104, %107 : vector<8x128xf32>
    %c18 = arith.constant 18 : index
    %c0_98 = arith.constant 0 : index
    %109 = vector.load %arg17[%c18, %c0_98] : memref<32x128xbf16, #tpu.memory_space<vmem>>, vector<8x128xbf16>
    %c896_99 = arith.constant 896 : index
    %c0_100 = arith.constant 0 : index
    %110 = vector.load %arg7[%c896_99, %c0_100] : memref<1152x128xbf16, #tpu.memory_space<vmem>>, vector<128x128xbf16>
    %cst_101 = arith.constant dense<0.000000e+00> : vector<8x128xf32>
    %111 = tpu.matmul %109, %110, %cst_101 {dimension_numbers = #tpu.dot_dimension_numbers<[1], [0], [0], [1], [0, 0, 1, 1], [], []>} : vector<8x128xbf16>, vector<128x128xbf16>, vector<8x128xf32> -> vector<8x128xf32>
    %112 = arith.addf %108, %111 : vector<8x128xf32>
    %c20 = arith.constant 20 : index
    %c0_102 = arith.constant 0 : index
    %113 = vector.load %arg17[%c20, %c0_102] : memref<32x128xbf16, #tpu.memory_space<vmem>>, vector<8x128xbf16>
    %c1024_103 = arith.constant 1024 : index
    %c0_104 = arith.constant 0 : index
    %114 = vector.load %arg7[%c1024_103, %c0_104] : memref<1152x128xbf16, #tpu.memory_space<vmem>>, vector<128x128xbf16>
    %cst_105 = arith.constant dense<0.000000e+00> : vector<8x128xf32>
    %115 = tpu.matmul %113, %114, %cst_105 {dimension_numbers = #tpu.dot_dimension_numbers<[1], [0], [0], [1], [0, 0, 1, 1], [], []>} : vector<8x128xbf16>, vector<128x128xbf16>, vector<8x128xf32> -> vector<8x128xf32>
    %116 = arith.addf %112, %115 : vector<8x128xf32>
    %c0_106 = arith.constant 0 : index
    %c0_107 = arith.constant 0 : index
    %117 = vector.load %arg8[%c0_106, %c0_107] : memref<1x128xf32, #tpu.memory_space<vmem>>, vector<1x128xf32>
    %118 = vector.broadcast %117 : vector<1x128xf32> to vector<8x128xf32>
    %119 = arith.addf %116, %118 : vector<8x128xf32>
    %cst_108 = arith.constant 0.000000e+00 : f32
    %120 = vector.broadcast %cst_108 : f32 to vector<8x128xf32>
    %121 = arith.maximumf %119, %120 : vector<8x128xf32>
    %122 = arith.truncf %121 : vector<8x128xf32> to vector<8x128xbf16>
    %c0_109 = arith.constant 0 : index
    %c0_110 = arith.constant 0 : index
    %123 = vector.load %arg18[%c0_109, %c0_110] : memref<8x256xbf16, #tpu.memory_space<vmem>>, vector<8x128xbf16>
    tpu.vector_store %arg18[%c0_109, %c0_110], %122 {strides = array<i32>} : memref<8x256xbf16, #tpu.memory_space<vmem>>, vector<8x128xbf16>,
    %c0_111 = arith.constant 0 : index
    %c0_112 = arith.constant 0 : index
    %124 = vector.load %arg2[%c0_111, %c0_112] : memref<8x128xbf16, #tpu.memory_space<vmem>>, vector<8x128xbf16>
    %c0_113 = arith.constant 0 : index
    %c128_114 = arith.constant 128 : index
    %125 = vector.load %arg18[%c0_113, %c128_114] : memref<8x256xbf16, #tpu.memory_space<vmem>>, vector<8x128xbf16>
    tpu.vector_store %arg18[%c0_113, %c128_114], %124 {strides = array<i32>} : memref<8x256xbf16, #tpu.memory_space<vmem>>, vector<8x128xbf16>,
    %c0_115 = arith.constant 0 : index
    %c0_116 = arith.constant 0 : index
    %126 = vector.load %arg18[%c0_115, %c0_116] : memref<8x256xbf16, #tpu.memory_space<vmem>>, vector<8x256xbf16>
    %c0_117 = arith.constant 0 : index
    %c0_118 = arith.constant 0 : index
    %127 = vector.load %arg9[%c0_117, %c0_118] : memref<256x512xbf16, #tpu.memory_space<vmem>>, vector<256x512xbf16>
    %cst_119 = arith.constant dense<0.000000e+00> : vector<8x512xf32>
    %128 = tpu.matmul %126, %127, %cst_119 {dimension_numbers = #tpu.dot_dimension_numbers<[1], [0], [0], [1], [0, 0, 1, 1], [], []>} : vector<8x256xbf16>, vector<256x512xbf16>, vector<8x512xf32> -> vector<8x512xf32>
    %c0_120 = arith.constant 0 : index
    %c0_121 = arith.constant 0 : index
    %129 = vector.load %arg10[%c0_120, %c0_121] : memref<1x512xf32, #tpu.memory_space<vmem>>, vector<1x512xf32>
    %130 = vector.broadcast %129 : vector<1x512xf32> to vector<8x512xf32>
    %131 = arith.addf %128, %130 : vector<8x512xf32>
    %cst_122 = arith.constant 0.000000e+00 : f32
    %132 = vector.broadcast %cst_122 : f32 to vector<8x512xf32>
    %133 = arith.maximumf %131, %132 : vector<8x512xf32>
    %134 = arith.truncf %133 : vector<8x512xf32> to vector<8x512xbf16>
    %c0_123 = arith.constant 0 : index
    %c0_124 = arith.constant 0 : index
    %135 = vector.load %arg11[%c0_123, %c0_124] : memref<512x640xbf16, #tpu.memory_space<vmem>>, vector<512x640xbf16>
    %cst_125 = arith.constant dense<0.000000e+00> : vector<8x640xf32>
    %136 = tpu.matmul %134, %135, %cst_125 {dimension_numbers = #tpu.dot_dimension_numbers<[1], [0], [0], [1], [0, 0, 1, 1], [], []>} : vector<8x512xbf16>, vector<512x640xbf16>, vector<8x640xf32> -> vector<8x640xf32>
    %c0_126 = arith.constant 0 : index
    %c0_127 = arith.constant 0 : index
    %137 = vector.load %arg12[%c0_126, %c0_127] : memref<1x640xf32, #tpu.memory_space<vmem>>, vector<1x640xf32>
    %138 = vector.broadcast %137 : vector<1x640xf32> to vector<8x640xf32>
    %139 = arith.addf %136, %138 : vector<8x640xf32>
    %cst_128 = arith.constant 0.000000e+00 : f32
    %140 = vector.broadcast %cst_128 : f32 to vector<8x640xf32>
    %141 = arith.maximumf %139, %140 : vector<8x640xf32>
    %142 = arith.truncf %141 : vector<8x640xf32> to vector<8x640xbf16>
    %c0_129 = arith.constant 0 : index
    %c0_130 = arith.constant 0 : index
    %143 = vector.load %arg13[%c0_129, %c0_130] : memref<640x128xbf16, #tpu.memory_space<vmem>>, vector<640x128xbf16>
    %cst_131 = arith.constant dense<0.000000e+00> : vector<8x128xf32>
    %144 = tpu.matmul %142, %143, %cst_131 {dimension_numbers = #tpu.dot_dimension_numbers<[1], [0], [0], [1], [0, 0, 1, 1], [], []>} : vector<8x640xbf16>, vector<640x128xbf16>, vector<8x128xf32> -> vector<8x128xf32>
    %c0_132 = arith.constant 0 : index
    %c0_133 = arith.constant 0 : index
    %145 = vector.load %arg14[%c0_132, %c0_133] : memref<1x128xf32, #tpu.memory_space<vmem>>, vector<1x128xf32>
    %146 = vector.broadcast %145 : vector<1x128xf32> to vector<8x128xf32>
    %147 = arith.addf %144, %146 : vector<8x128xf32>
    %c0_134 = arith.constant 0 : index
    %c0_135 = arith.constant 0 : index
    %148 = vector.load %arg15[%c0_134, %c0_135] : memref<8x128xf32, #tpu.memory_space<vmem>>, vector<8x128xf32>
    tpu.vector_store %arg15[%c0_134, %c0_135], %147 {strides = array<i32>} : memref<8x128xf32, #tpu.memory_space<vmem>>, vector<8x128xf32>,
    return
  }
  func.func @transform_0(%arg0: i32) -> (i32, i32) {
    %c0_i32 = arith.constant 0 : i32
    %c0_i32_0 = arith.constant 0 : i32
    %c0_i32_1 = arith.constant 0 : i32
    return %c0_i32, %c0_i32_0 : i32, i32
  }
  func.func @transform_1(%arg0: i32) -> (i32, i32) {
    %c0_i32 = arith.constant 0 : i32
    %c0_i32_0 = arith.constant 0 : i32
    %c0_i32_1 = arith.constant 0 : i32
    return %c0_i32, %c0_i32_0 : i32, i32
  }
  func.func @transform_2(%arg0: i32) -> (i32, i32) {
    %c0_i32 = arith.constant 0 : i32
    %c0_i32_0 = arith.constant 0 : i32
    %c0_i32_1 = arith.constant 0 : i32
    return %c0_i32, %c0_i32_0 : i32, i32
  }
  func.func @transform_3(%arg0: i32) -> (i32, i32) {
    %c0_i32 = arith.constant 0 : i32
    %c0_i32_0 = arith.constant 0 : i32
    %c0_i32_1 = arith.constant 0 : i32
    return %c0_i32, %c0_i32_0 : i32, i32
  }
  func.func @transform_4(%arg0: i32) -> (i32, i32) {
    %c0_i32 = arith.constant 0 : i32
    %c0_i32_0 = arith.constant 0 : i32
    %c0_i32_1 = arith.constant 0 : i32
    return %c0_i32, %c0_i32_0 : i32, i32
  }
  func.func @transform_5(%arg0: i32) -> (i32, i32) {
    %c0_i32 = arith.constant 0 : i32
    %c0_i32_0 = arith.constant 0 : i32
    %c0_i32_1 = arith.constant 0 : i32
    return %c0_i32, %c0_i32_0 : i32, i32
  }
  func.func @transform_6(%arg0: i32) -> (i32, i32) {
    %c0_i32 = arith.constant 0 : i32
    %c0_i32_0 = arith.constant 0 : i32
    %c0_i32_1 = arith.constant 0 : i32
    return %c0_i32, %c0_i32_0 : i32, i32
  }
  func.func @transform_7(%arg0: i32) -> (i32, i32) {
    %c0_i32 = arith.constant 0 : i32
    %c0_i32_0 = arith.constant 0 : i32
    %c0_i32_1 = arith.constant 0 : i32
    return %c0_i32, %c0_i32_0 : i32, i32
  }
  func.func @transform_8(%arg0: i32) -> (i32, i32) {
    %c0_i32 = arith.constant 0 : i32
    %c0_i32_0 = arith.constant 0 : i32
    %c0_i32_1 = arith.constant 0 : i32
    return %c0_i32, %c0_i32_0 : i32, i32
  }
  func.func @transform_9(%arg0: i32) -> (i32, i32) {
    %c0_i32 = arith.constant 0 : i32
    %c0_i32_0 = arith.constant 0 : i32
    %c0_i32_1 = arith.constant 0 : i32
    return %c0_i32, %c0_i32_0 : i32, i32
  }
  func.func @transform_10(%arg0: i32) -> (i32, i32) {
    %c0_i32 = arith.constant 0 : i32
    %c0_i32_0 = arith.constant 0 : i32
    %c0_i32_1 = arith.constant 0 : i32
    return %c0_i32, %c0_i32_0 : i32, i32
  }
  func.func @transform_11(%arg0: i32) -> (i32, i32) {
    %c0_i32 = arith.constant 0 : i32
    %c0_i32_0 = arith.constant 0 : i32
    %c0_i32_1 = arith.constant 0 : i32
    return %c0_i32, %c0_i32_0 : i32, i32
  }
  func.func @transform_12(%arg0: i32) -> (i32, i32) {
    %c0_i32 = arith.constant 0 : i32
    %c0_i32_0 = arith.constant 0 : i32
    %c0_i32_1 = arith.constant 0 : i32
    return %c0_i32, %c0_i32_0 : i32, i32
  }
  func.func @transform_13(%arg0: i32) -> (i32, i32) {
    %c0_i32 = arith.constant 0 : i32
    %c0_i32_0 = arith.constant 0 : i32
    %c0_i32_1 = arith.constant 0 : i32
    return %c0_i32, %c0_i32_0 : i32, i32
  }
  func.func @transform_14(%arg0: i32) -> (i32, i32) {
    %c0_i32 = arith.constant 0 : i32
    %c0_i32_0 = arith.constant 0 : i32
    %c0_i32_1 = arith.constant 0 : i32
    return %c0_i32, %c0_i32_0 : i32, i32
  }
}

</mosaic_0001>

<llo_original>
// kernel: convnet_forward.1
$region0: #{convnet_forward.1}
  #allocation0 [shape = 'u32[]', space=smem, size = 0x4, offset = 0x4, fixed_abs, tag = 'smem constant byte address 0x4 - core index']
  #allocation1 [shape = 'u32[144,128]{1,0:T(1,128)}', space=vmem, size = 0x12000, scoped, tag = 'internal scratch']
  #allocation2 [shape = 'bf16[144,128]{1,0:T(16,128)(2,1)}', space=vmem, size = 0x9000, scoped, tag = 'scratch operand']
  #allocation3 [shape = 'bf16[32,128]{1,0:T(16,128)(2,1)}', space=vmem, size = 0x2000, scoped, tag = 'scratch operand']
  #allocation4 [shape = 'bf16[8,256]{1,0:T(8,128)(2,1)}', space=vmem, size = 0x1000, scoped, tag = 'scratch operand']
  %s0 = inlined_call_operand.vmem [shape: bf16[128,256], index: 0, kind: input, shape index: {}]
  %s1 = inlined_call_operand.vmem [shape: bf16[8,128], index: 1, kind: input, shape index: {}]
  %s2 = inlined_call_operand.vmem [shape: bf16[256,128], index: 2, kind: input, shape index: {}]
  %s3 = inlined_call_operand.vmem [shape: f32[1,128], index: 3, kind: input, shape index: {}]
  %s4 = inlined_call_operand.vmem [shape: bf16[2048,128], index: 4, kind: input, shape index: {}]
  %s5 = inlined_call_operand.vmem [shape: f32[1,128], index: 5, kind: input, shape index: {}]
  %s6 = inlined_call_operand.vmem [shape: bf16[1152,128], index: 6, kind: input, shape index: {}]
  %s7 = inlined_call_operand.vmem [shape: f32[1,128], index: 7, kind: input, shape index: {}]
  %s8 = inlined_call_operand.vmem [shape: bf16[256,512], index: 8, kind: input, shape index: {}]
  %s9 = inlined_call_operand.vmem [shape: f32[1,512], index: 9, kind: input, shape index: {}]
  %s10 = inlined_call_operand.vmem [shape: bf16[512,640], index: 10, kind: input, shape index: {}]
  %s11 = inlined_call_operand.vmem [shape: f32[1,640], index: 11, kind: input, shape index: {}]
  %s12 = inlined_call_operand.vmem [shape: bf16[640,128], index: 12, kind: input, shape index: {}]
  %s13 = inlined_call_operand.vmem [shape: f32[1,128], index: 13, kind: input, shape index: {}]
  %s14 = inlined_call_operand.vmem [shape: f32[8,128], index: 14, kind: output, shape index: {}]
  %s15 = sld [smem:[#allocation0]]
  $region66: #{convnet_forward.1} parent=0
    _
  %s17 = ssub.s32 1, %s15
  %s18 = scalar_select 0, %s17, %s15
  // Predicated region
  $region2: #{convnet_forward.1} parent=0 // pred_check
    _
  $region3: #{convnet_forward.1} parent=0 // pred_check_branch
    %20 = sbr.rel (0) target = $region5
  $region4: #{convnet_forward.1} parent=0 // pred_region
    _
  $region5: #{convnet_forward.1} parent=0 // pred_fallthru
    _
  // Predicated region
  $region6: #{convnet_forward.1} parent=0 // pred_check
    _
  $region7: #{convnet_forward.1} parent=0 // pred_check_branch
    %22 = sbr.rel (0) target = $region9
  $region8: #{convnet_forward.1} parent=0 // pred_region
    _
  $region9: #{convnet_forward.1} parent=0 // pred_fallthru
    _
  // Predicated region
  $region10: #{convnet_forward.1} parent=0 // pred_check
    _
  $region11: #{convnet_forward.1} parent=0 // pred_check_branch
    %24 = sbr.rel (0) target = $region13
  $region12: #{convnet_forward.1} parent=0 // pred_region
    _
  $region13: #{convnet_forward.1} parent=0 // pred_fallthru
    _
  // Predicated region
  $region14: #{convnet_forward.1} parent=0 // pred_check
    _
  $region15: #{convnet_forward.1} parent=0 // pred_check_branch
    %26 = sbr.rel (0) target = $region17
  $region16: #{convnet_forward.1} parent=0 // pred_region
    _
  $region17: #{convnet_forward.1} parent=0 // pred_fallthru
    _
  // Predicated region
  $region18: #{convnet_forward.1} parent=0 // pred_check
    _
  $region19: #{convnet_forward.1} parent=0 // pred_check_branch
    %28 = sbr.rel (0) target = $region21
  $region20: #{convnet_forward.1} parent=0 // pred_region
    _
  $region21: #{convnet_forward.1} parent=0 // pred_fallthru
    _
  // Predicated region
  $region22: #{convnet_forward.1} parent=0 // pred_check
    _
  $region23: #{convnet_forward.1} parent=0 // pred_check_branch
    %30 = sbr.rel (0) target = $region25
  $region24: #{convnet_forward.1} parent=0 // pred_region
    _
  $region25: #{convnet_forward.1} parent=0 // pred_fallthru
    _
  // Predicated region
  $region26: #{convnet_forward.1} parent=0 // pred_check
    _
  $region27: #{convnet_forward.1} parent=0 // pred_check_branch
    %32 = sbr.rel (0) target = $region29
  $region28: #{convnet_forward.1} parent=0 // pred_region
    _
  $region29: #{convnet_forward.1} parent=0 // pred_fallthru
    _
  // Predicated region
  $region30: #{convnet_forward.1} parent=0 // pred_check
    _
  $region31: #{convnet_forward.1} parent=0 // pred_check_branch
    %34 = sbr.rel (0) target = $region33
  $region32: #{convnet_forward.1} parent=0 // pred_region
    _
  $region33: #{convnet_forward.1} parent=0 // pred_fallthru
    _
  // Predicated region
  $region34: #{convnet_forward.1} parent=0 // pred_check
    _
  $region35: #{convnet_forward.1} parent=0 // pred_check_branch
    %36 = sbr.rel (0) target = $region37
  $region36: #{convnet_forward.1} parent=0 // pred_region
    _
  $region37: #{convnet_forward.1} parent=0 // pred_fallthru
    _
  // Predicated region
  $region38: #{convnet_forward.1} parent=0 // pred_check
    _
  $region39: #{convnet_forward.1} parent=0 // pred_check_branch
    %38 = sbr.rel (0) target = $region41
  $region40: #{convnet_forward.1} parent=0 // pred_region
    _
  $region41: #{convnet_forward.1} parent=0 // pred_fallthru
    _
  // Predicated region
  $region42: #{convnet_forward.1} parent=0 // pred_check
    _
  $region43: #{convnet_forward.1} parent=0 // pred_check_branch
    %40 = sbr.rel (0) target = $region45
  $region44: #{convnet_forward.1} parent=0 // pred_region
    _
  $region45: #{convnet_forward.1} parent=0 // pred_fallthru
    _
  // Predicated region
  $region46: #{convnet_forward.1} parent=0 // pred_check
    _
  $region47: #{convnet_forward.1} parent=0 // pred_check_branch
    %42 = sbr.rel (0) target = $region49
  $region48: #{convnet_forward.1} parent=0 // pred_region
    _
  $region49: #{convnet_forward.1} parent=0 // pred_fallthru
    _
  // Predicated region
  $region50: #{convnet_forward.1} parent=0 // pred_check
    _
  $region51: #{convnet_forward.1} parent=0 // pred_check_branch
    %44 = sbr.rel (0) target = $region53
  $region52: #{convnet_forward.1} parent=0 // pred_region
    _
  $region53: #{convnet_forward.1} parent=0 // pred_fallthru
    _
  // Predicated region
  $region54: #{convnet_forward.1} parent=0 // pred_check
    _
  $region55: #{convnet_forward.1} parent=0 // pred_check_branch
    %46 = sbr.rel (0) target = $region57
  $region56: #{convnet_forward.1} parent=0 // pred_region
    _
  $region57: #{convnet_forward.1} parent=0 // pred_fallthru
    _
  %v48 = vld [vmem:[%s0] sm:$0xff]
  %v49 = vld [vmem:[%s0 + $0x8] sm:$0xff]
  %v50 = vld [vmem:[%s0 + $0x10] sm:$0xff]
  %v51 = vld [vmem:[%s0 + $0x18] sm:$0xff]
  %v52 = vld [vmem:[%s0 + $0x20] sm:$0xff]
  %v53 = vld [vmem:[%s0 + $0x28] sm:$0xff]
  %v54 = vld [vmem:[%s0 + $0x30] sm:$0xff]
  %v55 = vld [vmem:[%s0 + $0x38] sm:$0xff]
  %v56 = vld [vmem:[%s0 + $0x40] sm:$0xff]
  %v57 = vld [vmem:[%s0 + $0x48] sm:$0xff]
  %v58 = vld [vmem:[%s0 + $0x50] sm:$0xff]
  %v59 = vld [vmem:[%s0 + $0x58] sm:$0xff]
  %v60 = vld [vmem:[%s0 + $0x60] sm:$0xff]
  %v61 = vld [vmem:[%s0 + $0x68] sm:$0xff]
  %v62 = vld [vmem:[%s0 + $0x70] sm:$0xff]
  %v63 = vld [vmem:[%s0 + $0x78] sm:$0xff]
  %v64 = vld [vmem:[%s2] sm:$0xf]
  %v65 = vld [vmem:[%s2 + $0x4] sm:$0xf]
  %v66 = vld [vmem:[%s2 + $0x8] sm:$0xf]
  %v67 = vld [vmem:[%s2 + $0xc] sm:$0xf]
  %v68 = vld [vmem:[%s2 + $0x10] sm:$0xf]
  %v69 = vld [vmem:[%s2 + $0x14] sm:$0xf]
  %v70 = vld [vmem:[%s2 + $0x18] sm:$0xf]
  %v71 = vld [vmem:[%s2 + $0x1c] sm:$0xf]
  %v72 = vld [vmem:[%s2 + $0x20] sm:$0xf]
  %v73 = vld [vmem:[%s2 + $0x24] sm:$0xf]
  %v74 = vld [vmem:[%s2 + $0x28] sm:$0xf]
  %v75 = vld [vmem:[%s2 + $0x2c] sm:$0xf]
  %v76 = vld [vmem:[%s2 + $0x30] sm:$0xf]
  %v77 = vld [vmem:[%s2 + $0x34] sm:$0xf]
  %v78 = vld [vmem:[%s2 + $0x38] sm:$0xf]
  %v79 = vld [vmem:[%s2 + $0x3c] sm:$0xf]
  %v80 = vld [vmem:[%s2 + $0x40] sm:$0xf]
  %v81 = vld [vmem:[%s2 + $0x44] sm:$0xf]
  %v82 = vld [vmem:[%s2 + $0x48] sm:$0xf]
  %v83 = vld [vmem:[%s2 + $0x4c] sm:$0xf]
  %v84 = vld [vmem:[%s2 + $0x50] sm:$0xf]
  %v85 = vld [vmem:[%s2 + $0x54] sm:$0xf]
  %v86 = vld [vmem:[%s2 + $0x58] sm:$0xf]
  %v87 = vld [vmem:[%s2 + $0x5c] sm:$0xf]
  %v88 = vld [vmem:[%s2 + $0x60] sm:$0xf]
  %v89 = vld [vmem:[%s2 + $0x64] sm:$0xf]
  %v90 = vld [vmem:[%s2 + $0x68] sm:$0xf]
  %v91 = vld [vmem:[%s2 + $0x6c] sm:$0xf]
  %v92 = vld [vmem:[%s2 + $0x70] sm:$0xf]
  %v93 = vld [vmem:[%s2 + $0x74] sm:$0xf]
  %v94 = vld [vmem:[%s2 + $0x78] sm:$0xf]
  %v95 = vld [vmem:[%s2 + $0x7c] sm:$0xf]
  %v96 = vld [vmem:[%s3] sm:$0x1]
  %v98 = vlaneseq
  %v99 = vshrl.u32 %v98, 7
  %v100 = vsub.s32 0, %v99
  %v101 = vrot.slane %v96, %v100
  %v119 = vunpack.c.l.b16 %v48
  %v120 = vunpack.c.h.b16 %v48
  %v121 = vunpack.c.l.b16 %v49
  %v122 = vunpack.c.h.b16 %v49
  %v123 = vunpack.c.l.b16 %v50
  %v124 = vunpack.c.h.b16 %v50
  %v125 = vunpack.c.l.b16 %v51
  %v126 = vunpack.c.h.b16 %v51
  %v127 = vunpack.c.l.b16 %v52
  %v128 = vunpack.c.h.b16 %v52
  %v129 = vunpack.c.l.b16 %v53
  %v130 = vunpack.c.h.b16 %v53
  %v131 = vunpack.c.l.b16 %v54
  %v132 = vunpack.c.h.b16 %v54
  %v133 = vunpack.c.l.b16 %v55
  %v134 = vunpack.c.h.b16 %v55
  %v135 = vunpack.c.l.b16 %v56
  %v136 = vunpack.c.h.b16 %v56
  %v137 = vunpack.c.l.b16 %v57
  %v138 = vunpack.c.h.b16 %v57
  %v139 = vunpack.c.l.b16 %v58
  %v140 = vunpack.c.h.b16 %v58
  %v141 = vunpack.c.l.b16 %v59
  %v142 = vunpack.c.h.b16 %v59
  %v143 = vunpack.c.l.b16 %v60
  %v144 = vunpack.c.h.b16 %v60
  %v145 = vunpack.c.l.b16 %v61
  %v146 = vunpack.c.h.b16 %v61
  %v147 = vunpack.c.l.b16 %v62
  %v148 = vunpack.c.h.b16 %v62
  %v149 = vunpack.c.l.b16 %v63
  %v150 = vunpack.c.h.b16 %v63
  %v151 = vpack.c.b16 %v121, %v119
  %v152 = vpack.c.b16 %v122, %v120
  %v153 = vpack.c.b16 %v125, %v123
  %v154 = vpack.c.b16 %v126, %v124
  %v155 = vpack.c.b16 %v129, %v127
  %v156 = vpack.c.b16 %v130, %v128
  %v157 = vpack.c.b16 %v133, %v131
  %v158 = vpack.c.b16 %v134, %v132
  %v159 = vpack.c.b16 %v137, %v135
  %v160 = vpack.c.b16 %v138, %v136
  %v161 = vpack.c.b16 %v141, %v139
  %v162 = vpack.c.b16 %v142, %v140
  %v163 = vpack.c.b16 %v145, %v143
  %v164 = vpack.c.b16 %v146, %v144
  %v165 = vpack.c.b16 %v149, %v147
  %v166 = vpack.c.b16 %v150, %v148
  %v215 = vunpack.c.l.b16 %v64
  %v216 = vunpack.c.l.b16 %v65
  %v217 = vunpack.c.l.b16 %v66
  %v218 = vunpack.c.l.b16 %v67
  %v219 = vunpack.c.l.b16 %v68
  %v220 = vunpack.c.l.b16 %v69
  %v221 = vunpack.c.l.b16 %v70
  %v222 = vunpack.c.l.b16 %v71
  %v223 = vunpack.c.l.b16 %v72
  %v224 = vunpack.c.l.b16 %v73
  %v225 = vunpack.c.l.b16 %v74
  %v226 = vunpack.c.l.b16 %v75
  %v227 = vunpack.c.l.b16 %v76
  %v228 = vunpack.c.l.b16 %v77
  %v229 = vunpack.c.l.b16 %v78
  %v230 = vunpack.c.l.b16 %v79
  %v231 = vunpack.c.l.b16 %v80
  %v232 = vunpack.c.l.b16 %v81
  %v233 = vunpack.c.l.b16 %v82
  %v234 = vunpack.c.l.b16 %v83
  %v235 = vunpack.c.l.b16 %v84
  %v236 = vunpack.c.l.b16 %v85
  %v237 = vunpack.c.l.b16 %v86
  %v238 = vunpack.c.l.b16 %v87
  %v239 = vunpack.c.l.b16 %v88
  %v240 = vunpack.c.l.b16 %v89
  %v241 = vunpack.c.l.b16 %v90
  %v242 = vunpack.c.l.b16 %v91
  %v243 = vunpack.c.l.b16 %v92
  %v244 = vunpack.c.l.b16 %v93
  %v245 = vunpack.c.l.b16 %v94
  %v246 = vunpack.c.l.b16 %v95
  %v247 = vpack.c.b16 %v216, %v215
  %v248 = vpack.c.b16 %v218, %v217
  %v249 = vpack.c.b16 %v220, %v219
  %v250 = vpack.c.b16 %v222, %v221
  %v251 = vpack.c.b16 %v224, %v223
  %v252 = vpack.c.b16 %v226, %v225
  %v253 = vpack.c.b16 %v228, %v227
  %v254 = vpack.c.b16 %v230, %v229
  %v255 = vpack.c.b16 %v232, %v231
  %v256 = vpack.c.b16 %v234, %v233
  %v257 = vpack.c.b16 %v236, %v235
  %v258 = vpack.c.b16 %v238, %v237
  %v259 = vpack.c.b16 %v240, %v239
  %v260 = vpack.c.b16 %v242, %v241
  %v261 = vpack.c.b16 %v244, %v243
  %v262 = vpack.c.b16 %v246, %v245
  %279 = vmatprep.subr.bf16.mxu0 0
  %280 = vmatpush1.bf16.msra.mxu0 %v247
  %281 = vmatprep.subr.bf16.mxu0 0
  %282 = vmatpush1.bf16.msra.mxu0 %v248
  %283 = vmatprep.subr.bf16.mxu0 0
  %284 = vmatpush1.bf16.msra.mxu0 %v249
  %285 = vmatprep.subr.bf16.mxu0 0
  %286 = vmatpush1.bf16.msra.mxu0 %v250
  %287 = vmatprep.subr.bf16.mxu0 0
  %288 = vmatpush1.bf16.msra.mxu0 %v251
  %289 = vmatprep.subr.bf16.mxu0 0
  %290 = vmatpush1.bf16.msra.mxu0 %v252
  %291 = vmatprep.subr.bf16.mxu0 0
  %292 = vmatpush1.bf16.msra.mxu0 %v253
  %293 = vmatprep.subr.bf16.mxu0 0
  %294 = vmatpush1.bf16.msra.mxu0 %v254
  %295 = vmatprep.subr.bf16.mxu0 0
  %296 = vmatpush1.bf16.msra.mxu0 %v255
  %297 = vmatprep.subr.bf16.mxu0 0
  %298 = vmatpush1.bf16.msra.mxu0 %v256
  %299 = vmatprep.subr.bf16.mxu0 0
  %300 = vmatpush1.bf16.msra.mxu0 %v257
  %301 = vmatprep.subr.bf16.mxu0 0
  %302 = vmatpush1.bf16.msra.mxu0 %v258
  %303 = vmatprep.subr.bf16.mxu0 0
  %304 = vmatpush1.bf16.msra.mxu0 %v259
  %305 = vmatprep.subr.bf16.mxu0 0
  %306 = vmatpush1.bf16.msra.mxu0 %v260
  %307 = vmatprep.subr.bf16.mxu0 0
  %308 = vmatpush1.bf16.msra.mxu0 %v261
  %309 = vmatprep.subr.bf16.mxu0 0
  %310 = vmatpush1.bf16.msra.mxu0 %v262
  %311 = vmatprep.mubr.bf16.mxu0 %v152
  %312 = vmatmul.mubr.bf16.gmra.mrb[0].mxu0 %v151
  %v313 = vpop.f32.mrb[0].mxu0
  %v314 = vadd.f32 %v101, %v313
  %v315 = vpop.f32.mrb[0].mxu0
  %v316 = vpop.f32.mrb[0].mxu0
  %v317 = vadd.f32 %v101, %v316
  %v318 = vpop.f32.mrb[0].mxu0
  %319 = vmatprep.mubr.bf16.mxu0 %v154
  %320 = vmatmul.mubr.bf16.gmra.mrb[0].mxu0 %v153
  %v321 = vpop.f32.mrb[0].mxu0
  %v322 = vadd.f32 %v101, %v321
  %v323 = vpop.f32.mrb[0].mxu0
  %v324 = vpop.f32.mrb[0].mxu0
  %v325 = vadd.f32 %v101, %v324
  %v326 = vpop.f32.mrb[0].mxu0
  %327 = vmatprep.mubr.bf16.mxu0 %v156
  %328 = vmatmul.mubr.bf16.gmra.mrb[0].mxu0 %v155
  %v329 = vpop.f32.mrb[0].mxu0
  %v330 = vadd.f32 %v101, %v329
  %v331 = vpop.f32.mrb[0].mxu0
  %v332 = vpop.f32.mrb[0].mxu0
  %v333 = vadd.f32 %v101, %v332
  %v334 = vpop.f32.mrb[0].mxu0
  %335 = vmatprep.mubr.bf16.mxu0 %v158
  %336 = vmatmul.mubr.bf16.gmra.mrb[0].mxu0 %v157
  %v337 = vpop.f32.mrb[0].mxu0
  %v338 = vadd.f32 %v101, %v337
  %v339 = vpop.f32.mrb[0].mxu0
  %v340 = vpop.f32.mrb[0].mxu0
  %v341 = vadd.f32 %v101, %v340
  %v342 = vpop.f32.mrb[0].mxu0
  %343 = vmatprep.mubr.bf16.mxu0 %v160
  %344 = vmatmul.mubr.bf16.gmra.mrb[0].mxu0 %v159
  %v345 = vpop.f32.mrb[0].mxu0
  %v346 = vadd.f32 %v101, %v345
  %v347 = vpop.f32.mrb[0].mxu0
  %v348 = vpop.f32.mrb[0].mxu0
  %v349 = vadd.f32 %v101, %v348
  %v350 = vpop.f32.mrb[0].mxu0
  %351 = vmatprep.mubr.bf16.mxu0 %v162
  %352 = vmatmul.mubr.bf16.gmra.mrb[0].mxu0 %v161
  %v353 = vpop.f32.mrb[0].mxu0
  %v354 = vadd.f32 %v101, %v353
  %v355 = vpop.f32.mrb[0].mxu0
  %v356 = vpop.f32.mrb[0].mxu0
  %v357 = vadd.f32 %v101, %v356
  %v358 = vpop.f32.mrb[0].mxu0
  %359 = vmatprep.mubr.bf16.mxu0 %v164
  %360 = vmatmul.mubr.bf16.gmra.mrb[0].mxu0 %v163
  %v361 = vpop.f32.mrb[0].mxu0
  %v362 = vadd.f32 %v101, %v361
  %v363 = vpop.f32.mrb[0].mxu0
  %v364 = vpop.f32.mrb[0].mxu0
  %v365 = vadd.f32 %v101, %v364
  %v366 = vpop.f32.mrb[0].mxu0
  %367 = vmatprep.mubr.bf16.mxu0 %v166
  %368 = vmatmul.mubr.bf16.gmra.mrb[0].mxu0 %v165
  %v369 = vpop.f32.mrb[0].mxu0
  %v370 = vadd.f32 %v101, %v369
  %v371 = vpop.f32.mrb[0].mxu0
  %v372 = vpop.f32.mrb[0].mxu0
  %v373 = vadd.f32 %v101, %v372
  %v374 = vpop.f32.mrb[0].mxu0
  %375 = vdwg.mxu0
  %v376 = vmax.f32 %v314, 0.0
  %v377 = vmax.f32 %v317, 0.0
  %v378 = vmax.f32 %v322, 0.0
  %v379 = vmax.f32 %v325, 0.0
  %v380 = vmax.f32 %v330, 0.0
  %v381 = vmax.f32 %v333, 0.0
  %v382 = vmax.f32 %v338, 0.0
  %v383 = vmax.f32 %v341, 0.0
  %v384 = vmax.f32 %v346, 0.0
  %v385 = vmax.f32 %v349, 0.0
  %v386 = vmax.f32 %v354, 0.0
  %v387 = vmax.f32 %v357, 0.0
  %v388 = vmax.f32 %v362, 0.0
  %v389 = vmax.f32 %v365, 0.0
  %v390 = vmax.f32 %v370, 0.0
  %v391 = vmax.f32 %v373, 0.0
  %v392 = vpack.c.bf16 %v377, %v376
  %v393 = vpack.c.bf16 %v379, %v378
  %v394 = vpack.c.bf16 %v381, %v380
  %v395 = vpack.c.bf16 %v383, %v382
  %v396 = vpack.c.bf16 %v385, %v384
  %v397 = vpack.c.bf16 %v387, %v386
  %v398 = vpack.c.bf16 %v389, %v388
  %v399 = vpack.c.bf16 %v391, %v390
  %400 = vst [vmem:[#allocation2] sm:$0xff] %v392
  %401 = vst [vmem:[#allocation2 + $0x8] sm:$0xff] %v393
  %402 = vst [vmem:[#allocation2 + $0x10] sm:$0xff] %v394
  %403 = vst [vmem:[#allocation2 + $0x18] sm:$0xff] %v395
  %404 = vst [vmem:[#allocation2 + $0x20] sm:$0xff] %v396
  %405 = vst [vmem:[#allocation2 + $0x28] sm:$0xff] %v397
  %406 = vst [vmem:[#allocation2 + $0x30] sm:$0xff] %v398
  %407 = vst [vmem:[#allocation2 + $0x38] sm:$0xff] %v399
  %408 = vst [vmem:[#allocation2 + $0x40] sm:$0xff] 0
  %v409 = vld [vmem:[#allocation2] sm:$0xff]
  %v410 = vld [vmem:[#allocation2 + $0x8] sm:$0xff]
  %v411 = vld [vmem:[%s4] sm:$0xf]
  %v412 = vld [vmem:[%s4 + $0x4] sm:$0xf]
  %v413 = vld [vmem:[%s4 + $0x8] sm:$0xf]
  %v414 = vld [vmem:[%s4 + $0xc] sm:$0xf]
  %v415 = vld [vmem:[%s4 + $0x10] sm:$0xf]
  %v416 = vld [vmem:[%s4 + $0x14] sm:$0xf]
  %v417 = vld [vmem:[%s4 + $0x18] sm:$0xf]
  %v418 = vld [vmem:[%s4 + $0x1c] sm:$0xf]
  %v419 = vld [vmem:[%s4 + $0x20] sm:$0xf]
  %v420 = vld [vmem:[%s4 + $0x24] sm:$0xf]
  %v421 = vld [vmem:[%s4 + $0x28] sm:$0xf]
  %v422 = vld [vmem:[%s4 + $0x2c] sm:$0xf]
  %v423 = vld [vmem:[%s4 + $0x30] sm:$0xf]
  %v424 = vld [vmem:[%s4 + $0x34] sm:$0xf]
  %v425 = vld [vmem:[%s4 + $0x38] sm:$0xf]
  %v426 = vld [vmem:[%s4 + $0x3c] sm:$0xf]
  %v427 = vld [vmem:[#allocation2 + $0x10] sm:$0xff]
  %v428 = vld [vmem:[#allocation2 + $0x18] sm:$0xff]
  %v429 = vld [vmem:[%s4 + $0x40] sm:$0xf]
  %v430 = vld [vmem:[%s4 + $0x44] sm:$0xf]
  %v431 = vld [vmem:[%s4 + $0x48] sm:$0xf]
  %v432 = vld [vmem:[%s4 + $0x4c] sm:$0xf]
  %v433 = vld [vmem:[%s4 + $0x50] sm:$0xf]
  %v434 = vld [vmem:[%s4 + $0x54] sm:$0xf]
  %v435 = vld [vmem:[%s4 + $0x58] sm:$0xf]
  %v436 = vld [vmem:[%s4 + $0x5c] sm:$0xf]
  %v437 = vld [vmem:[%s4 + $0x60] sm:$0xf]
  %v438 = vld [vmem:[%s4 + $0x64] sm:$0xf]
  %v439 = vld [vmem:[%s4 + $0x68] sm:$0xf]
  %v440 = vld [vmem:[%s4 + $0x6c] sm:$0xf]
  %v441 = vld [vmem:[%s4 + $0x70] sm:$0xf]
  %v442 = vld [vmem:[%s4 + $0x74] sm:$0xf]
  %v443 = vld [vmem:[%s4 + $0x78] sm:$0xf]
  %v444 = vld [vmem:[%s4 + $0x7c] sm:$0xf]
  %v461 = vunpack.c.l.b16 %v429
  %v462 = vunpack.c.l.b16 %v430
  %v463 = vunpack.c.l.b16 %v431
  %v464 = vunpack.c.l.b16 %v432
  %v465 = vunpack.c.l.b16 %v433
  %v466 = vunpack.c.l.b16 %v434
  %v467 = vunpack.c.l.b16 %v435
  %v468 = vunpack.c.l.b16 %v436
  %v469 = vunpack.c.l.b16 %v437
  %v470 = vunpack.c.l.b16 %v438
  %v471 = vunpack.c.l.b16 %v439
  %v472 = vunpack.c.l.b16 %v440
  %v473 = vunpack.c.l.b16 %v441
  %v474 = vunpack.c.l.b16 %v442
  %v475 = vunpack.c.l.b16 %v443
  %v476 = vunpack.c.l.b16 %v444
  %v477 = vpack.c.b16 %v462, %v461
  %v478 = vpack.c.b16 %v464, %v463
  %v479 = vpack.c.b16 %v466, %v465
  %v480 = vpack.c.b16 %v468, %v467
  %v481 = vpack.c.b16 %v470, %v469
  %v482 = vpack.c.b16 %v472, %v471
  %v483 = vpack.c.b16 %v474, %v473
  %v484 = vpack.c.b16 %v476, %v475
  %493 = vmatprep.subr.bf16.mxu0 0
  %494 = vmatpush1.bf16.msra.mxu0 %v477
  %495 = vmatprep.subr.bf16.mxu0 0
  %496 = vmatpush1.bf16.msra.mxu0 %v478
  %497 = vmatprep.subr.bf16.mxu0 0
  %498 = vmatpush1.bf16.msra.mxu0 %v479
  %499 = vmatprep.subr.bf16.mxu0 0
  %500 = vmatpush1.bf16.msra.mxu0 %v480
  %501 = vmatprep.subr.bf16.mxu0 0
  %502 = vmatpush1.bf16.msra.mxu0 %v481
  %503 = vmatprep.subr.bf16.mxu0 0
  %504 = vmatpush1.bf16.msra.mxu0 %v482
  %505 = vmatprep.subr.bf16.mxu0 0
  %506 = vmatpush1.bf16.msra.mxu0 %v483
  %507 = vmatprep.subr.bf16.mxu0 0
  %508 = vmatpush1.bf16.msra.mxu0 %v484
  %509 = vmatprep.subr.bf16.mxu0 0
  %510 = vmatpush1.bf16.msra.mxu0 0
  %511 = vmatprep.subr.bf16.mxu0 0
  %512 = vmatpush1.bf16.msra.mxu0 0
  %513 = vmatprep.subr.bf16.mxu0 0
  %514 = vmatpush1.bf16.msra.mxu0 0
  %515 = vmatprep.subr.bf16.mxu0 0
  %516 = vmatpush1.bf16.msra.mxu0 0
  %517 = vmatprep.subr.bf16.mxu0 0
  %518 = vmatpush1.bf16.msra.mxu0 0
  %519 = vmatprep.subr.bf16.mxu0 0
  %520 = vmatpush1.bf16.msra.mxu0 0
  %521 = vmatprep.subr.bf16.mxu0 0
  %522 = vmatpush1.bf16.msra.mxu0 0
  %523 = vmatprep.subr.bf16.mxu0 0
  %524 = vmatpush1.bf16.msra.mxu0 0
  %525 = vmatprep.mubr.bf16.mxu0 0
  %526 = vmatmul.mubr.bf16.gmra.mrb[0].mxu0 %v427
  %v527 = vpop.f32.mrb[0].mxu0
  %v528 = vadd.f32 0.0, %v527
  %v529 = vpop.f32.mrb[0].mxu0
  %v530 = vpop.f32.mrb[0].mxu0
  %v531 = vadd.f32 0.0, %v530
  %v532 = vpop.f32.mrb[0].mxu0
  %533 = vmatprep.mubr.bf16.mxu0 0
  %534 = vmatmul.mubr.bf16.gmra.mrb[0].mxu0 %v428
  %v535 = vpop.f32.mrb[0].mxu0
  %v536 = vadd.f32 0.0, %v535
  %v537 = vpop.f32.mrb[0].mxu0
  %v538 = vpop.f32.mrb[0].mxu0
  %v539 = vadd.f32 0.0, %v538
  %v540 = vpop.f32.mrb[0].mxu0
  %541 = vdwg.mxu0
  %v558 = vunpack.c.l.b16 %v411
  %v559 = vunpack.c.l.b16 %v412
  %v560 = vunpack.c.l.b16 %v413
  %v561 = vunpack.c.l.b16 %v414
  %v562 = vunpack.c.l.b16 %v415
  %v563 = vunpack.c.l.b16 %v416
  %v564 = vunpack.c.l.b16 %v417
  %v565 = vunpack.c.l.b16 %v418
  %v566 = vunpack.c.l.b16 %v419
  %v567 = vunpack.c.l.b16 %v420
  %v568 = vunpack.c.l.b16 %v421
  %v569 = vunpack.c.l.b16 %v422
  %v570 = vunpack.c.l.b16 %v423
  %v571 = vunpack.c.l.b16 %v424
  %v572 = vunpack.c.l.b16 %v425
  %v573 = vunpack.c.l.b16 %v426
  %v574 = vpack.c.b16 %v559, %v558
  %v575 = vpack.c.b16 %v561, %v560
  %v576 = vpack.c.b16 %v563, %v562
  %v577 = vpack.c.b16 %v565, %v564
  %v578 = vpack.c.b16 %v567, %v566
  %v579 = vpack.c.b16 %v569, %v568
  %v580 = vpack.c.b16 %v571, %v570
  %v581 = vpack.c.b16 %v573, %v572
  %590 = vmatprep.subr.bf16.mxu0 0
  %591 = vmatpush1.bf16.msra.mxu0 %v574
  %592 = vmatprep.subr.bf16.mxu0 0
  %593 = vmatpush1.bf16.msra.mxu0 %v575
  %594 = vmatprep.subr.bf16.mxu0 0
  %595 = vmatpush1.bf16.msra.mxu0 %v576
  %596 = vmatprep.subr.bf16.mxu0 0
  %597 = vmatpush1.bf16.msra.mxu0 %v577
  %598 = vmatprep.subr.bf16.mxu0 0
  %599 = vmatpush1.bf16.msra.mxu0 %v578
  %600 = vmatprep.subr.bf16.mxu0 0
  %601 = vmatpush1.bf16.msra.mxu0 %v579
  %602 = vmatprep.subr.bf16.mxu0 0
  %603 = vmatpush1.bf16.msra.mxu0 %v580
  %604 = vmatprep.subr.bf16.mxu0 0
  %605 = vmatpush1.bf16.msra.mxu0 %v581
  %606 = vmatprep.subr.bf16.mxu0 0
  %607 = vmatpush1.bf16.msra.mxu0 0
  %608 = vmatprep.subr.bf16.mxu0 0
  %609 = vmatpush1.bf16.msra.mxu0 0
  %610 = vmatprep.subr.bf16.mxu0 0
  %611 = vmatpush1.bf16.msra.mxu0 0
  %612 = vmatprep.subr.bf16.mxu0 0
  %613 = vmatpush1.bf16.msra.mxu0 0
  %614 = vmatprep.subr.bf16.mxu0 0
  %615 = vmatpush1.bf16.msra.mxu0 0
  %616 = vmatprep.subr.bf16.mxu0 0
  %617 = vmatpush1.bf16.msra.mxu0 0
  %618 = vmatprep.subr.bf16.mxu0 0
  %619 = vmatpush1.bf16.msra.mxu0 0
  %620 = vmatprep.subr.bf16.mxu0 0
  %621 = vmatpush1.bf16.msra.mxu0 0
  %622 = vmatprep.mubr.bf16.mxu0 0
  %623 = vmatmul.mubr.bf16.gmra.mrb[0].mxu0 %v409
  %v624 = vpop.f32.mrb[0].mxu0
  %v625 = vadd.f32 %v528, %v624
  %v626 = vpop.f32.mrb[0].mxu0
  %v627 = vpop.f32.mrb[0].mxu0
  %v628 = vadd.f32 %v531, %v627
  %v629 = vpop.f32.mrb[0].mxu0
  %630 = vmatprep.mubr.bf16.mxu0 0
  %631 = vmatmul.mubr.bf16.gmra.mrb[0].mxu0 %v410
  %v632 = vpop.f32.mrb[0].mxu0
  %v633 = vadd.f32 %v536, %v632
  %v634 = vpop.f32.mrb[0].mxu0
  %v635 = vpop.f32.mrb[0].mxu0
  %v636 = vadd.f32 %v539, %v635
  %v637 = vpop.f32.mrb[0].mxu0
  %638 = vdwg.mxu0
  %v639 = vld [vmem:[#allocation2] sm:$0xfe]
  %v640 = vld [vmem:[#allocation2 + $0x8] sm:$0xff]
  %v641 = vld [vmem:[#allocation2 + $0x10] sm:$0x1]
  %v642 = vld [vmem:[%s4 + $0x80] sm:$0xf]
  %v643 = vld [vmem:[%s4 + $0x84] sm:$0xf]
  %v644 = vld [vmem:[%s4 + $0x88] sm:$0xf]
  %v645 = vld [vmem:[%s4 + $0x8c] sm:$0xf]
  %v646 = vld [vmem:[%s4 + $0x90] sm:$0xf]
  %v647 = vld [vmem:[%s4 + $0x94] sm:$0xf]
  %v648 = vld [vmem:[%s4 + $0x98] sm:$0xf]
  %v649 = vld [vmem:[%s4 + $0x9c] sm:$0xf]
  %v650 = vld [vmem:[%s4 + $0xa0] sm:$0xf]
  %v651 = vld [vmem:[%s4 + $0xa4] sm:$0xf]
  %v652 = vld [vmem:[%s4 + $0xa8] sm:$0xf]
  %v653 = vld [vmem:[%s4 + $0xac] sm:$0xf]
  %v654 = vld [vmem:[%s4 + $0xb0] sm:$0xf]
  %v655 = vld [vmem:[%s4 + $0xb4] sm:$0xf]
  %v656 = vld [vmem:[%s4 + $0xb8] sm:$0xf]
  %v657 = vld [vmem:[%s4 + $0xbc] sm:$0xf]
  %vm661 = vcmask 1046528
  %v662 = vrot.slane %v639, 1
  %v663 = vrot.slane %v640, 1
  %v664 = vsel %vm661, %v662, %v663
  %v665 = vrot.slane %v641, 1
  %v666 = vsel %vm661, %v663, %v665
  %v685 = vunpack.c.l.b16 %v642
  %v686 = vunpack.c.l.b16 %v643
  %v687 = vunpack.c.l.b16 %v644
  %v688 = vunpack.c.l.b16 %v645
  %v689 = vunpack.c.l.b16 %v646
  %v690 = vunpack.c.l.b16 %v647
  %v691 = vunpack.c.l.b16 %v648
  %v692 = vunpack.c.l.b16 %v649
  %v693 = vunpack.c.l.b16 %v650
  %v694 = vunpack.c.l.b16 %v651
  %v695 = vunpack.c.l.b16 %v652
  %v696 = vunpack.c.l.b16 %v653
  %v697 = vunpack.c.l.b16 %v654
  %v698 = vunpack.c.l.b16 %v655
  %v699 = vunpack.c.l.b16 %v656
  %v700 = vunpack.c.l.b16 %v657
  %v701 = vpack.c.b16 %v686, %v685
  %v702 = vpack.c.b16 %v688, %v687
  %v703 = vpack.c.b16 %v690, %v689
  %v704 = vpack.c.b16 %v692, %v691
  %v705 = vpack.c.b16 %v694, %v693
  %v706 = vpack.c.b16 %v696, %v695
  %v707 = vpack.c.b16 %v698, %v697
  %v708 = vpack.c.b16 %v700, %v699
  %717 = vmatprep.subr.bf16.mxu0 0
  %718 = vmatpush1.bf16.msra.mxu0 %v701
  %719 = vmatprep.subr.bf16.mxu0 0
  %720 = vmatpush1.bf16.msra.mxu0 %v702
  %721 = vmatprep.subr.bf16.mxu0 0
  %722 = vmatpush1.bf16.msra.mxu0 %v703
  %723 = vmatprep.subr.bf16.mxu0 0
  %724 = vmatpush1.bf16.msra.mxu0 %v704
  %725 = vmatprep.subr.bf16.mxu0 0
  %726 = vmatpush1.bf16.msra.mxu0 %v705
  %727 = vmatprep.subr.bf16.mxu0 0
  %728 = vmatpush1.bf16.msra.mxu0 %v706
  %729 = vmatprep.subr.bf16.mxu0 0
  %730 = vmatpush1.bf16.msra.mxu0 %v707
  %731 = vmatprep.subr.bf16.mxu0 0
  %732 = vmatpush1.bf16.msra.mxu0 %v708
  %733 = vmatprep.subr.bf16.mxu0 0
  %734 = vmatpush1.bf16.msra.mxu0 0
  %735 = vmatprep.subr.bf16.mxu0 0
  %736 = vmatpush1.bf16.msra.mxu0 0
  %737 = vmatprep.subr.bf16.mxu0 0
  %738 = vmatpush1.bf16.msra.mxu0 0
  %739 = vmatprep.subr.bf16.mxu0 0
  %740 = vmatpush1.bf16.msra.mxu0 0
  %741 = vmatprep.subr.bf16.mxu0 0
  %742 = vmatpush1.bf16.msra.mxu0 0
  %743 = vmatprep.subr.bf16.mxu0 0
  %744 = vmatpush1.bf16.msra.mxu0 0
  %745 = vmatprep.subr.bf16.mxu0 0
  %746 = vmatpush1.bf16.msra.mxu0 0
  %747 = vmatprep.subr.bf16.mxu0 0
  %748 = vmatpush1.bf16.msra.mxu0 0
  %749 = vmatprep.mubr.bf16.mxu0 0
  %750 = vmatmul.mubr.bf16.gmra.mrb[0].mxu0 %v664
  %v751 = vpop.f32.mrb[0].mxu0
  %v752 = vadd.f32 0.0, %v751
  %v753 = vpop.f32.mrb[0].mxu0
  %v754 = vpop.f32.mrb[0].mxu0
  %v755 = vadd.f32 0.0, %v754
  %v756 = vpop.f32.mrb[0].mxu0
  %757 = vmatprep.mubr.bf16.mxu0 0
  %758 = vmatmul.mubr.bf16.gmra.mrb[0].mxu0 %v666
  %v759 = vpop.f32.mrb[0].mxu0
  %v760 = vadd.f32 0.0, %v759
  %v761 = vpop.f32.mrb[0].mxu0
  %v762 = vpop.f32.mrb[0].mxu0
  %v763 = vadd.f32 0.0, %v762
  %v764 = vpop.f32.mrb[0].mxu0
  %765 = vdwg.mxu0
  %v766 = vadd.f32 %v625, %v752
  %v767 = vadd.f32 %v628, %v755
  %v768 = vadd.f32 %v633, %v760
  %v769 = vadd.f32 %v636, %v763
  %v770 = vld [vmem:[#allocation2 + $0x10] sm:$0xfe]
  %v771 = vld [vmem:[#allocation2 + $0x18] sm:$0xff]
  %v772 = vld [vmem:[#allocation2 + $0x20] sm:$0x1]
  %v773 = vld [vmem:[%s4 + $0xc0] sm:$0xf]
  %v774 = vld [vmem:[%s4 + $0xc4] sm:$0xf]
  %v775 = vld [vmem:[%s4 + $0xc8] sm:$0xf]
  %v776 = vld [vmem:[%s4 + $0xcc] sm:$0xf]
  %v777 = vld [vmem:[%s4 + $0xd0] sm:$0xf]
  %v778 = vld [vmem:[%s4 + $0xd4] sm:$0xf]
  %v779 = vld [vmem:[%s4 + $0xd8] sm:$0xf]
  %v780 = vld [vmem:[%s4 + $0xdc] sm:$0xf]
  %v781 = vld [vmem:[%s4 + $0xe0] sm:$0xf]
  %v782 = vld [vmem:[%s4 + $0xe4] sm:$0xf]
  %v783 = vld [vmem:[%s4 + $0xe8] sm:$0xf]
  %v784 = vld [vmem:[%s4 + $0xec] sm:$0xf]
  %v785 = vld [vmem:[%s4 + $0xf0] sm:$0xf]
  %v786 = vld [vmem:[%s4 + $0xf4] sm:$0xf]
  %v787 = vld [vmem:[%s4 + $0xf8] sm:$0xf]
  %v788 = vld [vmem:[%s4 + $0xfc] sm:$0xf]
  %v792 = vrot.slane %v770, 1
  %v793 = vrot.slane %v771, 1
  %v794 = vsel %vm661, %v792, %v793
  %v795 = vrot.slane %v772, 1
  %v796 = vsel %vm661, %v793, %v795
  %v815 = vunpack.c.l.b16 %v773
  %v816 = vunpack.c.l.b16 %v774
  %v817 = vunpack.c.l.b16 %v775
  %v818 = vunpack.c.l.b16 %v776
  %v819 = vunpack.c.l.b16 %v777
  %v820 = vunpack.c.l.b16 %v778
  %v821 = vunpack.c.l.b16 %v779
  %v822 = vunpack.c.l.b16 %v780
  %v823 = vunpack.c.l.b16 %v781
  %v824 = vunpack.c.l.b16 %v782
  %v825 = vunpack.c.l.b16 %v783
  %v826 = vunpack.c.l.b16 %v784
  %v827 = vunpack.c.l.b16 %v785
  %v828 = vunpack.c.l.b16 %v786
  %v829 = vunpack.c.l.b16 %v787
  %v830 = vunpack.c.l.b16 %v788
  %v831 = vpack.c.b16 %v816, %v815
  %v832 = vpack.c.b16 %v818, %v817
  %v833 = vpack.c.b16 %v820, %v819
  %v834 = vpack.c.b16 %v822, %v821
  %v835 = vpack.c.b16 %v824, %v823
  %v836 = vpack.c.b16 %v826, %v825
  %v837 = vpack.c.b16 %v828, %v827
  %v838 = vpack.c.b16 %v830, %v829
  %847 = vmatprep.subr.bf16.mxu0 0
  %848 = vmatpush1.bf16.msra.mxu0 %v831
  %849 = vmatprep.subr.bf16.mxu0 0
  %850 = vmatpush1.bf16.msra.mxu0 %v832
  %851 = vmatprep.subr.bf16.mxu0 0
  %852 = vmatpush1.bf16.msra.mxu0 %v833
  %853 = vmatprep.subr.bf16.mxu0 0
  %854 = vmatpush1.bf16.msra.mxu0 %v834
  %855 = vmatprep.subr.bf16.mxu0 0
  %856 = vmatpush1.bf16.msra.mxu0 %v835
  %857 = vmatprep.subr.bf16.mxu0 0
  %858 = vmatpush1.bf16.msra.mxu0 %v836
  %859 = vmatprep.subr.bf16.mxu0 0
  %860 = vmatpush1.bf16.msra.mxu0 %v837
  %861 = vmatprep.subr.bf16.mxu0 0
  %862 = vmatpush1.bf16.msra.mxu0 %v838
  %863 = vmatprep.subr.bf16.mxu0 0
  %864 = vmatpush1.bf16.msra.mxu0 0
  %865 = vmatprep.subr.bf16.mxu0 0
  %866 = vmatpush1.bf16.msra.mxu0 0
  %867 = vmatprep.subr.bf16.mxu0 0
  %868 = vmatpush1.bf16.msra.mxu0 0
  %869 = vmatprep.subr.bf16.mxu0 0
  %870 = vmatpush1.bf16.msra.mxu0 0
  %871 = vmatprep.subr.bf16.mxu0 0
  %872 = vmatpush1.bf16.msra.mxu0 0
  %873 = vmatprep.subr.bf16.mxu0 0
  %874 = vmatpush1.bf16.msra.mxu0 0
  %875 = vmatprep.subr.bf16.mxu0 0
  %876 = vmatpush1.bf16.msra.mxu0 0
  %877 = vmatprep.subr.bf16.mxu0 0
  %878 = vmatpush1.bf16.msra.mxu0 0
  %879 = vmatprep.mubr.bf16.mxu0 0
  %880 = vmatmul.mubr.bf16.gmra.mrb[0].mxu0 %v794
  %v881 = vpop.f32.mrb[0].mxu0
  %v882 = vadd.f32 0.0, %v881
  %v883 = vpop.f32.mrb[0].mxu0
  %v884 = vpop.f32.mrb[0].mxu0
  %v885 = vadd.f32 0.0, %v884
  %v886 = vpop.f32.mrb[0].mxu0
  %887 = vmatprep.mubr.bf16.mxu0 0
  %888 = vmatmul.mubr.bf16.gmra.mrb[0].mxu0 %v796
  %v889 = vpop.f32.mrb[0].mxu0
  %v890 = vadd.f32 0.0, %v889
  %v891 = vpop.f32.mrb[0].mxu0
  %v892 = vpop.f32.mrb[0].mxu0
  %v893 = vadd.f32 0.0, %v892
  %v894 = vpop.f32.mrb[0].mxu0
  %895 = vdwg.mxu0
  %v896 = vadd.f32 %v766, %v882
  %v897 = vadd.f32 %v767, %v885
  %v898 = vadd.f32 %v768, %v890
  %v899 = vadd.f32 %v769, %v893
  %v900 = vld [vmem:[#allocation2 + $0x20] sm:$0xff]
  %v901 = vld [vmem:[#allocation2 + $0x28] sm:$0xff]
  %v902 = vld [vmem:[%s4 + $0x100] sm:$0xf]
  %v903 = vld [vmem:[%s4 + $0x104] sm:$0xf]
  %v904 = vld [vmem:[%s4 + $0x108] sm:$0xf]
  %v905 = vld [vmem:[%s4 + $0x10c] sm:$0xf]
  %v906 = vld [vmem:[%s4 + $0x110] sm:$0xf]
  %v907 = vld [vmem:[%s4 + $0x114] sm:$0xf]
  %v908 = vld [vmem:[%s4 + $0x118] sm:$0xf]
  %v909 = vld [vmem:[%s4 + $0x11c] sm:$0xf]
  %v910 = vld [vmem:[%s4 + $0x120] sm:$0xf]
  %v911 = vld [vmem:[%s4 + $0x124] sm:$0xf]
  %v912 = vld [vmem:[%s4 + $0x128] sm:$0xf]
  %v913 = vld [vmem:[%s4 + $0x12c] sm:$0xf]
  %v914 = vld [vmem:[%s4 + $0x130] sm:$0xf]
  %v915 = vld [vmem:[%s4 + $0x134] sm:$0xf]
  %v916 = vld [vmem:[%s4 + $0x138] sm:$0xf]
  %v917 = vld [vmem:[%s4 + $0x13c] sm:$0xf]
  %v934 = vunpack.c.l.b16 %v902
  %v935 = vunpack.c.l.b16 %v903
  %v936 = vunpack.c.l.b16 %v904
  %v937 = vunpack.c.l.b16 %v905
  %v938 = vunpack.c.l.b16 %v906
  %v939 = vunpack.c.l.b16 %v907
  %v940 = vunpack.c.l.b16 %v908
  %v941 = vunpack.c.l.b16 %v909
  %v942 = vunpack.c.l.b16 %v910
  %v943 = vunpack.c.l.b16 %v911
  %v944 = vunpack.c.l.b16 %v912
  %v945 = vunpack.c.l.b16 %v913
  %v946 = vunpack.c.l.b16 %v914
  %v947 = vunpack.c.l.b16 %v915
  %v948 = vunpack.c.l.b16 %v916
  %v949 = vunpack.c.l.b16 %v917
  %v950 = vpack.c.b16 %v935, %v934
  %v951 = vpack.c.b16 %v937, %v936
  %v952 = vpack.c.b16 %v939, %v938
  %v953 = vpack.c.b16 %v941, %v940
  %v954 = vpack.c.b16 %v943, %v942
  %v955 = vpack.c.b16 %v945, %v944
  %v956 = vpack.c.b16 %v947, %v946
  %v957 = vpack.c.b16 %v949, %v948
  %966 = vmatprep.subr.bf16.mxu0 0
  %967 = vmatpush1.bf16.msra.mxu0 %v950
  %968 = vmatprep.subr.bf16.mxu0 0
  %969 = vmatpush1.bf16.msra.mxu0 %v951
  %970 = vmatprep.subr.bf16.mxu0 0
  %971 = vmatpush1.bf16.msra.mxu0 %v952
  %972 = vmatprep.subr.bf16.mxu0 0
  %973 = vmatpush1.bf16.msra.mxu0 %v953
  %974 = vmatprep.subr.bf16.mxu0 0
  %975 = vmatpush1.bf16.msra.mxu0 %v954
  %976 = vmatprep.subr.bf16.mxu0 0
  %977 = vmatpush1.bf16.msra.mxu0 %v955
  %978 = vmatprep.subr.bf16.mxu0 0
  %979 = vmatpush1.bf16.msra.mxu0 %v956
  %980 = vmatprep.subr.bf16.mxu0 0
  %981 = vmatpush1.bf16.msra.mxu0 %v957
  %982 = vmatprep.subr.bf16.mxu0 0
  %983 = vmatpush1.bf16.msra.mxu0 0
  %984 = vmatprep.subr.bf16.mxu0 0
  %985 = vmatpush1.bf16.msra.mxu0 0
  %986 = vmatprep.subr.bf16.mxu0 0
  %987 = vmatpush1.bf16.msra.mxu0 0
  %988 = vmatprep.subr.bf16.mxu0 0
  %989 = vmatpush1.bf16.msra.mxu0 0
  %990 = vmatprep.subr.bf16.mxu0 0
  %991 = vmatpush1.bf16.msra.mxu0 0
  %992 = vmatprep.subr.bf16.mxu0 0
  %993 = vmatpush1.bf16.msra.mxu0 0
  %994 = vmatprep.subr.bf16.mxu0 0
  %995 = vmatpush1.bf16.msra.mxu0 0
  %996 = vmatprep.subr.bf16.mxu0 0
  %997 = vmatpush1.bf16.msra.mxu0 0
  %998 = vmatprep.mubr.bf16.mxu0 0
  %999 = vmatmul.mubr.bf16.gmra.mrb[0].mxu0 %v900
  %v1000 = vpop.f32.mrb[0].mxu0
  %v1001 = vadd.f32 0.0, %v1000
  %v1002 = vpop.f32.mrb[0].mxu0
  %v1003 = vpop.f32.mrb[0].mxu0
  %v1004 = vadd.f32 0.0, %v1003
  %v1005 = vpop.f32.mrb[0].mxu0
  %1006 = vmatprep.mubr.bf16.mxu0 0
  %1007 = vmatmul.mubr.bf16.gmra.mrb[0].mxu0 %v901
  %v1008 = vpop.f32.mrb[0].mxu0
  %v1009 = vadd.f32 0.0, %v1008
  %v1010 = vpop.f32.mrb[0].mxu0
  %v1011 = vpop.f32.mrb[0].mxu0
  %v1012 = vadd.f32 0.0, %v1011
  %v1013 = vpop.f32.mrb[0].mxu0
  %1014 = vdwg.mxu0
  %v1015 = vadd.f32 %v896, %v1001
  %v1016 = vadd.f32 %v897, %v1004
  %v1017 = vadd.f32 %v898, %v1009
  %v1018 = vadd.f32 %v899, %v1012
  %v1019 = vld [vmem:[#allocation2 + $0x30] sm:$0xff]
  %v1020 = vld [vmem:[#allocation2 + $0x38] sm:$0xff]
  %v1021 = vld [vmem:[%s4 + $0x140] sm:$0xf]
  %v1022 = vld [vmem:[%s4 + $0x144] sm:$0xf]
  %v1023 = vld [vmem:[%s4 + $0x148] sm:$0xf]
  %v1024 = vld [vmem:[%s4 + $0x14c] sm:$0xf]
  %v1025 = vld [vmem:[%s4 + $0x150] sm:$0xf]
  %v1026 = vld [vmem:[%s4 + $0x154] sm:$0xf]
  %v1027 = vld [vmem:[%s4 + $0x158] sm:$0xf]
  %v1028 = vld [vmem:[%s4 + $0x15c] sm:$0xf]
  %v1029 = vld [vmem:[%s4 + $0x160] sm:$0xf]
  %v1030 = vld [vmem:[%s4 + $0x164] sm:$0xf]
  %v1031 = vld [vmem:[%s4 + $0x168] sm:$0xf]
  %v1032 = vld [vmem:[%s4 + $0x16c] sm:$0xf]
  %v1033 = vld [vmem:[%s4 + $0x170] sm:$0xf]
  %v1034 = vld [vmem:[%s4 + $0x174] sm:$0xf]
  %v1035 = vld [vmem:[%s4 + $0x178] sm:$0xf]
  %v1036 = vld [vmem:[%s4 + $0x17c] sm:$0xf]
  %v1053 = vunpack.c.l.b16 %v1021
  %v1054 = vunpack.c.l.b16 %v1022
  %v1055 = vunpack.c.l.b16 %v1023
  %v1056 = vunpack.c.l.b16 %v1024
  %v1057 = vunpack.c.l.b16 %v1025
  %v1058 = vunpack.c.l.b16 %v1026
  %v1059 = vunpack.c.l.b16 %v1027
  %v1060 = vunpack.c.l.b16 %v1028
  %v1061 = vunpack.c.l.b16 %v1029
  %v1062 = vunpack.c.l.b16 %v1030
  %v1063 = vunpack.c.l.b16 %v1031
  %v1064 = vunpack.c.l.b16 %v1032
  %v1065 = vunpack.c.l.b16 %v1033
  %v1066 = vunpack.c.l.b16 %v1034
  %v1067 = vunpack.c.l.b16 %v1035
  %v1068 = vunpack.c.l.b16 %v1036
  %v1069 = vpack.c.b16 %v1054, %v1053
  %v1070 = vpack.c.b16 %v1056, %v1055
  %v1071 = vpack.c.b16 %v1058, %v1057
  %v1072 = vpack.c.b16 %v1060, %v1059
  %v1073 = vpack.c.b16 %v1062, %v1061
  %v1074 = vpack.c.b16 %v1064, %v1063
  %v1075 = vpack.c.b16 %v1066, %v1065
  %v1076 = vpack.c.b16 %v1068, %v1067
  %1085 = vmatprep.subr.bf16.mxu0 0
  %1086 = vmatpush1.bf16.msra.mxu0 %v1069
  %1087 = vmatprep.subr.bf16.mxu0 0
  %1088 = vmatpush1.bf16.msra.mxu0 %v1070
  %1089 = vmatprep.subr.bf16.mxu0 0
  %1090 = vmatpush1.bf16.msra.mxu0 %v1071
  %1091 = vmatprep.subr.bf16.mxu0 0
  %1092 = vmatpush1.bf16.msra.mxu0 %v1072
  %1093 = vmatprep.subr.bf16.mxu0 0
  %1094 = vmatpush1.bf16.msra.mxu0 %v1073
  %1095 = vmatprep.subr.bf16.mxu0 0
  %1096 = vmatpush1.bf16.msra.mxu0 %v1074
  %1097 = vmatprep.subr.bf16.mxu0 0
  %1098 = vmatpush1.bf16.msra.mxu0 %v1075
  %1099 = vmatprep.subr.bf16.mxu0 0
  %1100 = vmatpush1.bf16.msra.mxu0 %v1076
  %1101 = vmatprep.subr.bf16.mxu0 0
  %1102 = vmatpush1.bf16.msra.mxu0 0
  %1103 = vmatprep.subr.bf16.mxu0 0
  %1104 = vmatpush1.bf16.msra.mxu0 0
  %1105 = vmatprep.subr.bf16.mxu0 0
  %1106 = vmatpush1.bf16.msra.mxu0 0
  %1107 = vmatprep.subr.bf16.mxu0 0
  %1108 = vmatpush1.bf16.msra.mxu0 0
  %1109 = vmatprep.subr.bf16.mxu0 0
  %1110 = vmatpush1.bf16.msra.mxu0 0
  %1111 = vmatprep.subr.bf16.mxu0 0
  %1112 = vmatpush1.bf16.msra.mxu0 0
  %1113 = vmatprep.subr.bf16.mxu0 0
  %1114 = vmatpush1.bf16.msra.mxu0 0
  %1115 = vmatprep.subr.bf16.mxu0 0
  %1116 = vmatpush1.bf16.msra.mxu0 0
  %1117 = vmatprep.mubr.bf16.mxu0 0
  %1118 = vmatmul.mubr.bf16.gmra.mrb[0].mxu0 %v1019
  %v1119 = vpop.f32.mrb[0].mxu0
  %v1120 = vadd.f32 0.0, %v1119
  %v1121 = vpop.f32.mrb[0].mxu0
  %v1122 = vpop.f32.mrb[0].mxu0
  %v1123 = vadd.f32 0.0, %v1122
  %v1124 = vpop.f32.mrb[0].mxu0
  %1125 = vmatprep.mubr.bf16.mxu0 0
  %1126 = vmatmul.mubr.bf16.gmra.mrb[0].mxu0 %v1020
  %v1127 = vpop.f32.mrb[0].mxu0
  %v1128 = vadd.f32 0.0, %v1127
  %v1129 = vpop.f32.mrb[0].mxu0
  %v1130 = vpop.f32.mrb[0].mxu0
  %v1131 = vadd.f32 0.0, %v1130
  %v1132 = vpop.f32.mrb[0].mxu0
  %1133 = vdwg.mxu0
  %v1134 = vadd.f32 %v1015, %v1120
  %v1135 = vadd.f32 %v1016, %v1123
  %v1136 = vadd.f32 %v1017, %v1128
  %v1137 = vadd.f32 %v1018, %v1131
  %v1138 = vld [vmem:[#allocation2 + $0x20] sm:$0xfe]
  %v1139 = vld [vmem:[#allocation2 + $0x28] sm:$0xff]
  %v1140 = vld [vmem:[#allocation2 + $0x30] sm:$0x1]
  %v1141 = vld [vmem:[%s4 + $0x180] sm:$0xf]
  %v1142 = vld [vmem:[%s4 + $0x184] sm:$0xf]
  %v1143 = vld [vmem:[%s4 + $0x188] sm:$0xf]
  %v1144 = vld [vmem:[%s4 + $0x18c] sm:$0xf]
  %v1145 = vld [vmem:[%s4 + $0x190] sm:$0xf]
  %v1146 = vld [vmem:[%s4 + $0x194] sm:$0xf]
  %v1147 = vld [vmem:[%s4 + $0x198] sm:$0xf]
  %v1148 = vld [vmem:[%s4 + $0x19c] sm:$0xf]
  %v1149 = vld [vmem:[%s4 + $0x1a0] sm:$0xf]
  %v1150 = vld [vmem:[%s4 + $0x1a4] sm:$0xf]
  %v1151 = vld [vmem:[%s4 + $0x1a8] sm:$0xf]
  %v1152 = vld [vmem:[%s4 + $0x1ac] sm:$0xf]
  %v1153 = vld [vmem:[%s4 + $0x1b0] sm:$0xf]
  %v1154 = vld [vmem:[%s4 + $0x1b4] sm:$0xf]
  %v1155 = vld [vmem:[%s4 + $0x1b8] sm:$0xf]
  %v1156 = vld [vmem:[%s4 + $0x1bc] sm:$0xf]
  %v1160 = vrot.slane %v1138, 1
  %v1161 = vrot.slane %v1139, 1
  %v1162 = vsel %vm661, %v1160, %v1161
  %v1163 = vrot.slane %v1140, 1
  %v1164 = vsel %vm661, %v1161, %v1163
  %v1183 = vunpack.c.l.b16 %v1141
  %v1184 = vunpack.c.l.b16 %v1142
  %v1185 = vunpack.c.l.b16 %v1143
  %v1186 = vunpack.c.l.b16 %v1144
  %v1187 = vunpack.c.l.b16 %v1145
  %v1188 = vunpack.c.l.b16 %v1146
  %v1189 = vunpack.c.l.b16 %v1147
  %v1190 = vunpack.c.l.b16 %v1148
  %v1191 = vunpack.c.l.b16 %v1149
  %v1192 = vunpack.c.l.b16 %v1150
  %v1193 = vunpack.c.l.b16 %v1151
  %v1194 = vunpack.c.l.b16 %v1152
  %v1195 = vunpack.c.l.b16 %v1153
  %v1196 = vunpack.c.l.b16 %v1154
  %v1197 = vunpack.c.l.b16 %v1155
  %v1198 = vunpack.c.l.b16 %v1156
  %v1199 = vpack.c.b16 %v1184, %v1183
  %v1200 = vpack.c.b16 %v1186, %v1185
  %v1201 = vpack.c.b16 %v1188, %v1187
  %v1202 = vpack.c.b16 %v1190, %v1189
  %v1203 = vpack.c.b16 %v1192, %v1191
  %v1204 = vpack.c.b16 %v1194, %v1193
  %v1205 = vpack.c.b16 %v1196, %v1195
  %v1206 = vpack.c.b16 %v1198, %v1197
  %1215 = vmatprep.subr.bf16.mxu0 0
  %1216 = vmatpush1.bf16.msra.mxu0 %v1199
  %1217 = vmatprep.subr.bf16.mxu0 0
  %1218 = vmatpush1.bf16.msra.mxu0 %v1200
  %1219 = vmatprep.subr.bf16.mxu0 0
  %1220 = vmatpush1.bf16.msra.mxu0 %v1201
  %1221 = vmatprep.subr.bf16.mxu0 0
  %1222 = vmatpush1.bf16.msra.mxu0 %v1202
  %1223 = vmatprep.subr.bf16.mxu0 0
  %1224 = vmatpush1.bf16.msra.mxu0 %v1203
  %1225 = vmatprep.subr.bf16.mxu0 0
  %1226 = vmatpush1.bf16.msra.mxu0 %v1204
  %1227 = vmatprep.subr.bf16.mxu0 0
  %1228 = vmatpush1.bf16.msra.mxu0 %v1205
  %1229 = vmatprep.subr.bf16.mxu0 0
  %1230 = vmatpush1.bf16.msra.mxu0 %v1206
  %1231 = vmatprep.subr.bf16.mxu0 0
  %1232 = vmatpush1.bf16.msra.mxu0 0
  %1233 = vmatprep.subr.bf16.mxu0 0
  %1234 = vmatpush1.bf16.msra.mxu0 0
  %1235 = vmatprep.subr.bf16.mxu0 0
  %1236 = vmatpush1.bf16.msra.mxu0 0
  %1237 = vmatprep.subr.bf16.mxu0 0
  %1238 = vmatpush1.bf16.msra.mxu0 0
  %1239 = vmatprep.subr.bf16.mxu0 0
  %1240 = vmatpush1.bf16.msra.mxu0 0
  %1241 = vmatprep.subr.bf16.mxu0 0
  %1242 = vmatpush1.bf16.msra.mxu0 0
  %1243 = vmatprep.subr.bf16.mxu0 0
  %1244 = vmatpush1.bf16.msra.mxu0 0
  %1245 = vmatprep.subr.bf16.mxu0 0
  %1246 = vmatpush1.bf16.msra.mxu0 0
  %1247 = vmatprep.mubr.bf16.mxu0 0
  %1248 = vmatmul.mubr.bf16.gmra.mrb[0].mxu0 %v1162
  %v1249 = vpop.f32.mrb[0].mxu0
  %v1250 = vadd.f32 0.0, %v1249
  %v1251 = vpop.f32.mrb[0].mxu0
  %v1252 = vpop.f32.mrb[0].mxu0
  %v1253 = vadd.f32 0.0, %v1252
  %v1254 = vpop.f32.mrb[0].mxu0
  %1255 = vmatprep.mubr.bf16.mxu0 0
  %1256 = vmatmul.mubr.bf16.gmra.mrb[0].mxu0 %v1164
  %v1257 = vpop.f32.mrb[0].mxu0
  %v1258 = vadd.f32 0.0, %v1257
  %v1259 = vpop.f32.mrb[0].mxu0
  %v1260 = vpop.f32.mrb[0].mxu0
  %v1261 = vadd.f32 0.0, %v1260
  %v1262 = vpop.f32.mrb[0].mxu0
  %1263 = vdwg.mxu0
  %v1264 = vadd.f32 %v1134, %v1250
  %v1265 = vadd.f32 %v1135, %v1253
  %v1266 = vadd.f32 %v1136, %v1258
  %v1267 = vadd.f32 %v1137, %v1261
  %v1268 = vld [vmem:[#allocation2 + $0x30] sm:$0xfe]
  %v1269 = vld [vmem:[#allocation2 + $0x38] sm:$0xff]
  %v1270 = vld [vmem:[#allocation2 + $0x40] sm:$0x1]
  %v1271 = vld [vmem:[%s4 + $0x1c0] sm:$0xf]
  %v1272 = vld [vmem:[%s4 + $0x1c4] sm:$0xf]
  %v1273 = vld [vmem:[%s4 + $0x1c8] sm:$0xf]
  %v1274 = vld [vmem:[%s4 + $0x1cc] sm:$0xf]
  %v1275 = vld [vmem:[%s4 + $0x1d0] sm:$0xf]
  %v1276 = vld [vmem:[%s4 + $0x1d4] sm:$0xf]
  %v1277 = vld [vmem:[%s4 + $0x1d8] sm:$0xf]
  %v1278 = vld [vmem:[%s4 + $0x1dc] sm:$0xf]
  %v1279 = vld [vmem:[%s4 + $0x1e0] sm:$0xf]
  %v1280 = vld [vmem:[%s4 + $0x1e4] sm:$0xf]
  %v1281 = vld [vmem:[%s4 + $0x1e8] sm:$0xf]
  %v1282 = vld [vmem:[%s4 + $0x1ec] sm:$0xf]
  %v1283 = vld [vmem:[%s4 + $0x1f0] sm:$0xf]
  %v1284 = vld [vmem:[%s4 + $0x1f4] sm:$0xf]
  %v1285 = vld [vmem:[%s4 + $0x1f8] sm:$0xf]
  %v1286 = vld [vmem:[%s4 + $0x1fc] sm:$0xf]
  %v1290 = vrot.slane %v1268, 1
  %v1291 = vrot.slane %v1269, 1
  %v1292 = vsel %vm661, %v1290, %v1291
  %v1293 = vrot.slane %v1270, 1
  %v1294 = vsel %vm661, %v1291, %v1293
  %v1313 = vunpack.c.l.b16 %v1271
  %v1314 = vunpack.c.l.b16 %v1272
  %v1315 = vunpack.c.l.b16 %v1273
  %v1316 = vunpack.c.l.b16 %v1274
  %v1317 = vunpack.c.l.b16 %v1275
  %v1318 = vunpack.c.l.b16 %v1276
  %v1319 = vunpack.c.l.b16 %v1277
  %v1320 = vunpack.c.l.b16 %v1278
  %v1321 = vunpack.c.l.b16 %v1279
  %v1322 = vunpack.c.l.b16 %v1280
  %v1323 = vunpack.c.l.b16 %v1281
  %v1324 = vunpack.c.l.b16 %v1282
  %v1325 = vunpack.c.l.b16 %v1283
  %v1326 = vunpack.c.l.b16 %v1284
  %v1327 = vunpack.c.l.b16 %v1285
  %v1328 = vunpack.c.l.b16 %v1286
  %v1329 = vpack.c.b16 %v1314, %v1313
  %v1330 = vpack.c.b16 %v1316, %v1315
  %v1331 = vpack.c.b16 %v1318, %v1317
  %v1332 = vpack.c.b16 %v1320, %v1319
  %v1333 = vpack.c.b16 %v1322, %v1321
  %v1334 = vpack.c.b16 %v1324, %v1323
  %v1335 = vpack.c.b16 %v1326, %v1325
  %v1336 = vpack.c.b16 %v1328, %v1327
  %1345 = vmatprep.subr.bf16.mxu0 0
  %1346 = vmatpush1.bf16.msra.mxu0 %v1329
  %1347 = vmatprep.subr.bf16.mxu0 0
  %1348 = vmatpush1.bf16.msra.mxu0 %v1330
  %1349 = vmatprep.subr.bf16.mxu0 0
  %1350 = vmatpush1.bf16.msra.mxu0 %v1331
  %1351 = vmatprep.subr.bf16.mxu0 0
  %1352 = vmatpush1.bf16.msra.mxu0 %v1332
  %1353 = vmatprep.subr.bf16.mxu0 0
  %1354 = vmatpush1.bf16.msra.mxu0 %v1333
  %1355 = vmatprep.subr.bf16.mxu0 0
  %1356 = vmatpush1.bf16.msra.mxu0 %v1334
  %1357 = vmatprep.subr.bf16.mxu0 0
  %1358 = vmatpush1.bf16.msra.mxu0 %v1335
  %1359 = vmatprep.subr.bf16.mxu0 0
  %1360 = vmatpush1.bf16.msra.mxu0 %v1336
  %1361 = vmatprep.subr.bf16.mxu0 0
  %1362 = vmatpush1.bf16.msra.mxu0 0
  %1363 = vmatprep.subr.bf16.mxu0 0
  %1364 = vmatpush1.bf16.msra.mxu0 0
  %1365 = vmatprep.subr.bf16.mxu0 0
  %1366 = vmatpush1.bf16.msra.mxu0 0
  %1367 = vmatprep.subr.bf16.mxu0 0
  %1368 = vmatpush1.bf16.msra.mxu0 0
  %1369 = vmatprep.subr.bf16.mxu0 0
  %1370 = vmatpush1.bf16.msra.mxu0 0
  %1371 = vmatprep.subr.bf16.mxu0 0
  %1372 = vmatpush1.bf16.msra.mxu0 0
  %1373 = vmatprep.subr.bf16.mxu0 0
  %1374 = vmatpush1.bf16.msra.mxu0 0
  %1375 = vmatprep.subr.bf16.mxu0 0
  %1376 = vmatpush1.bf16.msra.mxu0 0
  %1377 = vmatprep.mubr.bf16.mxu0 0
  %1378 = vmatmul.mubr.bf16.gmra.mrb[0].mxu0 %v1292
  %v1379 = vpop.f32.mrb[0].mxu0
  %v1380 = vadd.f32 0.0, %v1379
  %v1381 = vpop.f32.mrb[0].mxu0
  %v1382 = vpop.f32.mrb[0].mxu0
  %v1383 = vadd.f32 0.0, %v1382
  %v1384 = vpop.f32.mrb[0].mxu0
  %1385 = vmatprep.mubr.bf16.mxu0 0
  %1386 = vmatmul.mubr.bf16.gmra.mrb[0].mxu0 %v1294
  %v1387 = vpop.f32.mrb[0].mxu0
  %v1388 = vadd.f32 0.0, %v1387
  %v1389 = vpop.f32.mrb[0].mxu0
  %v1390 = vpop.f32.mrb[0].mxu0
  %v1391 = vadd.f32 0.0, %v1390
  %v1392 = vpop.f32.mrb[0].mxu0
  %1393 = vdwg.mxu0
  %v1394 = vadd.f32 %v1264, %v1380
  %v1395 = vadd.f32 %v1265, %v1383
  %v1396 = vadd.f32 %v1266, %v1388
  %v1397 = vadd.f32 %v1267, %v1391
  %v1398 = vld [vmem:[#allocation2] sm:$0xf0]
  %v1399 = vld [vmem:[#allocation2 + $0x10] sm:$0xf]
  %v1400 = vld [vmem:[%s4 + $0x200] sm:$0xf]
  %v1401 = vld [vmem:[%s4 + $0x204] sm:$0xf]
  %v1402 = vld [vmem:[%s4 + $0x208] sm:$0xf]
  %v1403 = vld [vmem:[%s4 + $0x20c] sm:$0xf]
  %v1404 = vld [vmem:[%s4 + $0x210] sm:$0xf]
  %v1405 = vld [vmem:[%s4 + $0x214] sm:$0xf]
  %v1406 = vld [vmem:[%s4 + $0x218] sm:$0xf]
  %v1407 = vld [vmem:[%s4 + $0x21c] sm:$0xf]
  %v1408 = vld [vmem:[%s4 + $0x220] sm:$0xf]
  %v1409 = vld [vmem:[%s4 + $0x224] sm:$0xf]
  %v1410 = vld [vmem:[%s4 + $0x228] sm:$0xf]
  %v1411 = vld [vmem:[%s4 + $0x22c] sm:$0xf]
  %v1412 = vld [vmem:[%s4 + $0x230] sm:$0xf]
  %v1413 = vld [vmem:[%s4 + $0x234] sm:$0xf]
  %v1414 = vld [vmem:[%s4 + $0x238] sm:$0xf]
  %v1415 = vld [vmem:[%s4 + $0x23c] sm:$0xf]
  %vm1418 = vcmask 1043456
  %v1419 = vrot.slane %v1398, 4
  %v1420 = vrot.slane %v640, 4
  %v1421 = vsel %vm1418, %v1419, %v1420
  %v1422 = vrot.slane %v1399, 4
  %v1423 = vsel %vm1418, %v1420, %v1422
  %v1442 = vunpack.c.l.b16 %v1400
  %v1443 = vunpack.c.l.b16 %v1401
  %v1444 = vunpack.c.l.b16 %v1402
  %v1445 = vunpack.c.l.b16 %v1403
  %v1446 = vunpack.c.l.b16 %v1404
  %v1447 = vunpack.c.l.b16 %v1405
  %v1448 = vunpack.c.l.b16 %v1406
  %v1449 = vunpack.c.l.b16 %v1407
  %v1450 = vunpack.c.l.b16 %v1408
  %v1451 = vunpack.c.l.b16 %v1409
  %v1452 = vunpack.c.l.b16 %v1410
  %v1453 = vunpack.c.l.b16 %v1411
  %v1454 = vunpack.c.l.b16 %v1412
  %v1455 = vunpack.c.l.b16 %v1413
  %v1456 = vunpack.c.l.b16 %v1414
  %v1457 = vunpack.c.l.b16 %v1415
  %v1458 = vpack.c.b16 %v1443, %v1442
  %v1459 = vpack.c.b16 %v1445, %v1444
  %v1460 = vpack.c.b16 %v1447, %v1446
  %v1461 = vpack.c.b16 %v1449, %v1448
  %v1462 = vpack.c.b16 %v1451, %v1450
  %v1463 = vpack.c.b16 %v1453, %v1452
  %v1464 = vpack.c.b16 %v1455, %v1454
  %v1465 = vpack.c.b16 %v1457, %v1456
  %1474 = vmatprep.subr.bf16.mxu0 0
  %1475 = vmatpush1.bf16.msra.mxu0 %v1458
  %1476 = vmatprep.subr.bf16.mxu0 0
  %1477 = vmatpush1.bf16.msra.mxu0 %v1459
  %1478 = vmatprep.subr.bf16.mxu0 0
  %1479 = vmatpush1.bf16.msra.mxu0 %v1460
  %1480 = vmatprep.subr.bf16.mxu0 0
  %1481 = vmatpush1.bf16.msra.mxu0 %v1461
  %1482 = vmatprep.subr.bf16.mxu0 0
  %1483 = vmatpush1.bf16.msra.mxu0 %v1462
  %1484 = vmatprep.subr.bf16.mxu0 0
  %1485 = vmatpush1.bf16.msra.mxu0 %v1463
  %1486 = vmatprep.subr.bf16.mxu0 0
  %1487 = vmatpush1.bf16.msra.mxu0 %v1464
  %1488 = vmatprep.subr.bf16.mxu0 0
  %1489 = vmatpush1.bf16.msra.mxu0 %v1465
  %1490 = vmatprep.subr.bf16.mxu0 0
  %1491 = vmatpush1.bf16.msra.mxu0 0
  %1492 = vmatprep.subr.bf16.mxu0 0
  %1493 = vmatpush1.bf16.msra.mxu0 0
  %1494 = vmatprep.subr.bf16.mxu0 0
  %1495 = vmatpush1.bf16.msra.mxu0 0
  %1496 = vmatprep.subr.bf16.mxu0 0
  %1497 = vmatpush1.bf16.msra.mxu0 0
  %1498 = vmatprep.subr.bf16.mxu0 0
  %1499 = vmatpush1.bf16.msra.mxu0 0
  %1500 = vmatprep.subr.bf16.mxu0 0
  %1501 = vmatpush1.bf16.msra.mxu0 0
  %1502 = vmatprep.subr.bf16.mxu0 0
  %1503 = vmatpush1.bf16.msra.mxu0 0
  %1504 = vmatprep.subr.bf16.mxu0 0
  %1505 = vmatpush1.bf16.msra.mxu0 0
  %1506 = vmatprep.mubr.bf16.mxu0 0
  %1507 = vmatmul.mubr.bf16.gmra.mrb[0].mxu0 %v1421
  %v1508 = vpop.f32.mrb[0].mxu0
  %v1509 = vadd.f32 0.0, %v1508
  %v1510 = vpop.f32.mrb[0].mxu0
  %v1511 = vpop.f32.mrb[0].mxu0
  %v1512 = vadd.f32 0.0, %v1511
  %v1513 = vpop.f32.mrb[0].mxu0
  %1514 = vmatprep.mubr.bf16.mxu0 0
  %1515 = vmatmul.mubr.bf16.gmra.mrb[0].mxu0 %v1423
  %v1516 = vpop.f32.mrb[0].mxu0
  %v1517 = vadd.f32 0.0, %v1516
  %v1518 = vpop.f32.mrb[0].mxu0
  %v1519 = vpop.f32.mrb[0].mxu0
  %v1520 = vadd.f32 0.0, %v1519
  %v1521 = vpop.f32.mrb[0].mxu0
  %1522 = vdwg.mxu0
  %v1523 = vadd.f32 %v1394, %v1509
  %v1524 = vadd.f32 %v1395, %v1512
  %v1525 = vadd.f32 %v1396, %v1517
  %v1526 = vadd.f32 %v1397, %v1520
  %v1527 = vld [vmem:[#allocation2 + $0x10] sm:$0xf0]
  %v1528 = vld [vmem:[#allocation2 + $0x20] sm:$0xf]
  %v1529 = vld [vmem:[%s4 + $0x240] sm:$0xf]
  %v1530 = vld [vmem:[%s4 + $0x244] sm:$0xf]
  %v1531 = vld [vmem:[%s4 + $0x248] sm:$0xf]
  %v1532 = vld [vmem:[%s4 + $0x24c] sm:$0xf]
  %v1533 = vld [vmem:[%s4 + $0x250] sm:$0xf]
  %v1534 = vld [vmem:[%s4 + $0x254] sm:$0xf]
  %v1535 = vld [vmem:[%s4 + $0x258] sm:$0xf]
  %v1536 = vld [vmem:[%s4 + $0x25c] sm:$0xf]
  %v1537 = vld [vmem:[%s4 + $0x260] sm:$0xf]
  %v1538 = vld [vmem:[%s4 + $0x264] sm:$0xf]
  %v1539 = vld [vmem:[%s4 + $0x268] sm:$0xf]
  %v1540 = vld [vmem:[%s4 + $0x26c] sm:$0xf]
  %v1541 = vld [vmem:[%s4 + $0x270] sm:$0xf]
  %v1542 = vld [vmem:[%s4 + $0x274] sm:$0xf]
  %v1543 = vld [vmem:[%s4 + $0x278] sm:$0xf]
  %v1544 = vld [vmem:[%s4 + $0x27c] sm:$0xf]
  %v1547 = vrot.slane %v1527, 4
  %v1548 = vrot.slane %v771, 4
  %v1549 = vsel %vm1418, %v1547, %v1548
  %v1550 = vrot.slane %v1528, 4
  %v1551 = vsel %vm1418, %v1548, %v1550
  %v1570 = vunpack.c.l.b16 %v1529
  %v1571 = vunpack.c.l.b16 %v1530
  %v1572 = vunpack.c.l.b16 %v1531
  %v1573 = vunpack.c.l.b16 %v1532
  %v1574 = vunpack.c.l.b16 %v1533
  %v1575 = vunpack.c.l.b16 %v1534
  %v1576 = vunpack.c.l.b16 %v1535
  %v1577 = vunpack.c.l.b16 %v1536
  %v1578 = vunpack.c.l.b16 %v1537
  %v1579 = vunpack.c.l.b16 %v1538
  %v1580 = vunpack.c.l.b16 %v1539
  %v1581 = vunpack.c.l.b16 %v1540
  %v1582 = vunpack.c.l.b16 %v1541
  %v1583 = vunpack.c.l.b16 %v1542
  %v1584 = vunpack.c.l.b16 %v1543
  %v1585 = vunpack.c.l.b16 %v1544
  %v1586 = vpack.c.b16 %v1571, %v1570
  %v1587 = vpack.c.b16 %v1573, %v1572
  %v1588 = vpack.c.b16 %v1575, %v1574
  %v1589 = vpack.c.b16 %v1577, %v1576
  %v1590 = vpack.c.b16 %v1579, %v1578
  %v1591 = vpack.c.b16 %v1581, %v1580
  %v1592 = vpack.c.b16 %v1583, %v1582
  %v1593 = vpack.c.b16 %v1585, %v1584
  %1602 = vmatprep.subr.bf16.mxu0 0
  %1603 = vmatpush1.bf16.msra.mxu0 %v1586
  %1604 = vmatprep.subr.bf16.mxu0 0
  %1605 = vmatpush1.bf16.msra.mxu0 %v1587
  %1606 = vmatprep.subr.bf16.mxu0 0
  %1607 = vmatpush1.bf16.msra.mxu0 %v1588
  %1608 = vmatprep.subr.bf16.mxu0 0
  %1609 = vmatpush1.bf16.msra.mxu0 %v1589
  %1610 = vmatprep.subr.bf16.mxu0 0
  %1611 = vmatpush1.bf16.msra.mxu0 %v1590
  %1612 = vmatprep.subr.bf16.mxu0 0
  %1613 = vmatpush1.bf16.msra.mxu0 %v1591
  %1614 = vmatprep.subr.bf16.mxu0 0
  %1615 = vmatpush1.bf16.msra.mxu0 %v1592
  %1616 = vmatprep.subr.bf16.mxu0 0
  %1617 = vmatpush1.bf16.msra.mxu0 %v1593
  %1618 = vmatprep.subr.bf16.mxu0 0
  %1619 = vmatpush1.bf16.msra.mxu0 0
  %1620 = vmatprep.subr.bf16.mxu0 0
  %1621 = vmatpush1.bf16.msra.mxu0 0
  %1622 = vmatprep.subr.bf16.mxu0 0
  %1623 = vmatpush1.bf16.msra.mxu0 0
  %1624 = vmatprep.subr.bf16.mxu0 0
  %1625 = vmatpush1.bf16.msra.mxu0 0
  %1626 = vmatprep.subr.bf16.mxu0 0
  %1627 = vmatpush1.bf16.msra.mxu0 0
  %1628 = vmatprep.subr.bf16.mxu0 0
  %1629 = vmatpush1.bf16.msra.mxu0 0
  %1630 = vmatprep.subr.bf16.mxu0 0
  %1631 = vmatpush1.bf16.msra.mxu0 0
  %1632 = vmatprep.subr.bf16.mxu0 0
  %1633 = vmatpush1.bf16.msra.mxu0 0
  %1634 = vmatprep.mubr.bf16.mxu0 0
  %1635 = vmatmul.mubr.bf16.gmra.mrb[0].mxu0 %v1549
  %v1636 = vpop.f32.mrb[0].mxu0
  %v1637 = vadd.f32 0.0, %v1636
  %v1638 = vpop.f32.mrb[0].mxu0
  %v1639 = vpop.f32.mrb[0].mxu0
  %v1640 = vadd.f32 0.0, %v1639
  %v1641 = vpop.f32.mrb[0].mxu0
  %1642 = vmatprep.mubr.bf16.mxu0 0
  %1643 = vmatmul.mubr.bf16.gmra.mrb[0].mxu0 %v1551
  %v1644 = vpop.f32.mrb[0].mxu0
  %v1645 = vadd.f32 0.0, %v1644
  %v1646 = vpop.f32.mrb[0].mxu0
  %v1647 = vpop.f32.mrb[0].mxu0
  %v1648 = vadd.f32 0.0, %v1647
  %v1649 = vpop.f32.mrb[0].mxu0
  %1650 = vdwg.mxu0
  %v1651 = vadd.f32 %v1523, %v1637
  %v1652 = vadd.f32 %v1524, %v1640
  %v1653 = vadd.f32 %v1525, %v1645
  %v1654 = vadd.f32 %v1526, %v1648
  %v1655 = vld [vmem:[#allocation2] sm:$0xe0]
  %v1656 = vld [vmem:[#allocation2 + $0x10] sm:$0x1f]
  %v1657 = vld [vmem:[%s4 + $0x280] sm:$0xf]
  %v1658 = vld [vmem:[%s4 + $0x284] sm:$0xf]
  %v1659 = vld [vmem:[%s4 + $0x288] sm:$0xf]
  %v1660 = vld [vmem:[%s4 + $0x28c] sm:$0xf]
  %v1661 = vld [vmem:[%s4 + $0x290] sm:$0xf]
  %v1662 = vld [vmem:[%s4 + $0x294] sm:$0xf]
  %v1663 = vld [vmem:[%s4 + $0x298] sm:$0xf]
  %v1664 = vld [vmem:[%s4 + $0x29c] sm:$0xf]
  %v1665 = vld [vmem:[%s4 + $0x2a0] sm:$0xf]
  %v1666 = vld [vmem:[%s4 + $0x2a4] sm:$0xf]
  %v1667 = vld [vmem:[%s4 + $0x2a8] sm:$0xf]
  %v1668 = vld [vmem:[%s4 + $0x2ac] sm:$0xf]
  %v1669 = vld [vmem:[%s4 + $0x2b0] sm:$0xf]
  %v1670 = vld [vmem:[%s4 + $0x2b4] sm:$0xf]
  %v1671 = vld [vmem:[%s4 + $0x2b8] sm:$0xf]
  %v1672 = vld [vmem:[%s4 + $0x2bc] sm:$0xf]
  %vm1675 = vcmask 1042432
  %v1676 = vrot.slane %v1655, 5
  %v1677 = vrot.slane %v640, 5
  %v1678 = vsel %vm1675, %v1676, %v1677
  %v1679 = vrot.slane %v1656, 5
  %v1680 = vsel %vm1675, %v1677, %v1679
  %v1699 = vunpack.c.l.b16 %v1657
  %v1700 = vunpack.c.l.b16 %v1658
  %v1701 = vunpack.c.l.b16 %v1659
  %v1702 = vunpack.c.l.b16 %v1660
  %v1703 = vunpack.c.l.b16 %v1661
  %v1704 = vunpack.c.l.b16 %v1662
  %v1705 = vunpack.c.l.b16 %v1663
  %v1706 = vunpack.c.l.b16 %v1664
  %v1707 = vunpack.c.l.b16 %v1665
  %v1708 = vunpack.c.l.b16 %v1666
  %v1709 = vunpack.c.l.b16 %v1667
  %v1710 = vunpack.c.l.b16 %v1668
  %v1711 = vunpack.c.l.b16 %v1669
  %v1712 = vunpack.c.l.b16 %v1670
  %v1713 = vunpack.c.l.b16 %v1671
  %v1714 = vunpack.c.l.b16 %v1672
  %v1715 = vpack.c.b16 %v1700, %v1699
  %v1716 = vpack.c.b16 %v1702, %v1701
  %v1717 = vpack.c.b16 %v1704, %v1703
  %v1718 = vpack.c.b16 %v1706, %v1705
  %v1719 = vpack.c.b16 %v1708, %v1707
  %v1720 = vpack.c.b16 %v1710, %v1709
  %v1721 = vpack.c.b16 %v1712, %v1711
  %v1722 = vpack.c.b16 %v1714, %v1713
  %1731 = vmatprep.subr.bf16.mxu0 0
  %1732 = vmatpush1.bf16.msra.mxu0 %v1715
  %1733 = vmatprep.subr.bf16.mxu0 0
  %1734 = vmatpush1.bf16.msra.mxu0 %v1716
  %1735 = vmatprep.subr.bf16.mxu0 0
  %1736 = vmatpush1.bf16.msra.mxu0 %v1717
  %1737 = vmatprep.subr.bf16.mxu0 0
  %1738 = vmatpush1.bf16.msra.mxu0 %v1718
  %1739 = vmatprep.subr.bf16.mxu0 0
  %1740 = vmatpush1.bf16.msra.mxu0 %v1719
  %1741 = vmatprep.subr.bf16.mxu0 0
  %1742 = vmatpush1.bf16.msra.mxu0 %v1720
  %1743 = vmatprep.subr.bf16.mxu0 0
  %1744 = vmatpush1.bf16.msra.mxu0 %v1721
  %1745 = vmatprep.subr.bf16.mxu0 0
  %1746 = vmatpush1.bf16.msra.mxu0 %v1722
  %1747 = vmatprep.subr.bf16.mxu0 0
  %1748 = vmatpush1.bf16.msra.mxu0 0
  %1749 = vmatprep.subr.bf16.mxu0 0
  %1750 = vmatpush1.bf16.msra.mxu0 0
  %1751 = vmatprep.subr.bf16.mxu0 0
  %1752 = vmatpush1.bf16.msra.mxu0 0
  %1753 = vmatprep.subr.bf16.mxu0 0
  %1754 = vmatpush1.bf16.msra.mxu0 0
  %1755 = vmatprep.subr.bf16.mxu0 0
  %1756 = vmatpush1.bf16.msra.mxu0 0
  %1757 = vmatprep.subr.bf16.mxu0 0
  %1758 = vmatpush1.bf16.msra.mxu0 0
  %1759 = vmatprep.subr.bf16.mxu0 0
  %1760 = vmatpush1.bf16.msra.mxu0 0
  %1761 = vmatprep.subr.bf16.mxu0 0
  %1762 = vmatpush1.bf16.msra.mxu0 0
  %1763 = vmatprep.mubr.bf16.mxu0 0
  %1764 = vmatmul.mubr.bf16.gmra.mrb[0].mxu0 %v1678
  %v1765 = vpop.f32.mrb[0].mxu0
  %v1766 = vadd.f32 0.0, %v1765
  %v1767 = vpop.f32.mrb[0].mxu0
  %v1768 = vpop.f32.mrb[0].mxu0
  %v1769 = vadd.f32 0.0, %v1768
  %v1770 = vpop.f32.mrb[0].mxu0
  %1771 = vmatprep.mubr.bf16.mxu0 0
  %1772 = vmatmul.mubr.bf16.gmra.mrb[0].mxu0 %v1680
  %v1773 = vpop.f32.mrb[0].mxu0
  %v1774 = vadd.f32 0.0, %v1773
  %v1775 = vpop.f32.mrb[0].mxu0
  %v1776 = vpop.f32.mrb[0].mxu0
  %v1777 = vadd.f32 0.0, %v1776
  %v1778 = vpop.f32.mrb[0].mxu0
  %1779 = vdwg.mxu0
  %v1780 = vadd.f32 %v1651, %v1766
  %v1781 = vadd.f32 %v1652, %v1769
  %v1782 = vadd.f32 %v1653, %v1774
  %v1783 = vadd.f32 %v1654, %v1777
  %v1784 = vld [vmem:[#allocation2 + $0x10] sm:$0xe0]
  %v1785 = vld [vmem:[#allocation2 + $0x20] sm:$0x1f]
  %v1786 = vld [vmem:[%s4 + $0x2c0] sm:$0xf]
  %v1787 = vld [vmem:[%s4 + $0x2c4] sm:$0xf]
  %v1788 = vld [vmem:[%s4 + $0x2c8] sm:$0xf]
  %v1789 = vld [vmem:[%s4 + $0x2cc] sm:$0xf]
  %v1790 = vld [vmem:[%s4 + $0x2d0] sm:$0xf]
  %v1791 = vld [vmem:[%s4 + $0x2d4] sm:$0xf]
  %v1792 = vld [vmem:[%s4 + $0x2d8] sm:$0xf]
  %v1793 = vld [vmem:[%s4 + $0x2dc] sm:$0xf]
  %v1794 = vld [vmem:[%s4 + $0x2e0] sm:$0xf]
  %v1795 = vld [vmem:[%s4 + $0x2e4] sm:$0xf]
  %v1796 = vld [vmem:[%s4 + $0x2e8] sm:$0xf]
  %v1797 = vld [vmem:[%s4 + $0x2ec] sm:$0xf]
  %v1798 = vld [vmem:[%s4 + $0x2f0] sm:$0xf]
  %v1799 = vld [vmem:[%s4 + $0x2f4] sm:$0xf]
  %v1800 = vld [vmem:[%s4 + $0x2f8] sm:$0xf]
  %v1801 = vld [vmem:[%s4 + $0x2fc] sm:$0xf]
  %v1804 = vrot.slane %v1784, 5
  %v1805 = vrot.slane %v771, 5
  %v1806 = vsel %vm1675, %v1804, %v1805
  %v1807 = vrot.slane %v1785, 5
  %v1808 = vsel %vm1675, %v1805, %v1807
  %v1827 = vunpack.c.l.b16 %v1786
  %v1828 = vunpack.c.l.b16 %v1787
  %v1829 = vunpack.c.l.b16 %v1788
  %v1830 = vunpack.c.l.b16 %v1789
  %v1831 = vunpack.c.l.b16 %v1790
  %v1832 = vunpack.c.l.b16 %v1791
  %v1833 = vunpack.c.l.b16 %v1792
  %v1834 = vunpack.c.l.b16 %v1793
  %v1835 = vunpack.c.l.b16 %v1794
  %v1836 = vunpack.c.l.b16 %v1795
  %v1837 = vunpack.c.l.b16 %v1796
  %v1838 = vunpack.c.l.b16 %v1797
  %v1839 = vunpack.c.l.b16 %v1798
  %v1840 = vunpack.c.l.b16 %v1799
  %v1841 = vunpack.c.l.b16 %v1800
  %v1842 = vunpack.c.l.b16 %v1801
  %v1843 = vpack.c.b16 %v1828, %v1827
  %v1844 = vpack.c.b16 %v1830, %v1829
  %v1845 = vpack.c.b16 %v1832, %v1831
  %v1846 = vpack.c.b16 %v1834, %v1833
  %v1847 = vpack.c.b16 %v1836, %v1835
  %v1848 = vpack.c.b16 %v1838, %v1837
  %v1849 = vpack.c.b16 %v1840, %v1839
  %v1850 = vpack.c.b16 %v1842, %v1841
  %1859 = vmatprep.subr.bf16.mxu0 0
  %1860 = vmatpush1.bf16.msra.mxu0 %v1843
  %1861 = vmatprep.subr.bf16.mxu0 0
  %1862 = vmatpush1.bf16.msra.mxu0 %v1844
  %1863 = vmatprep.subr.bf16.mxu0 0
  %1864 = vmatpush1.bf16.msra.mxu0 %v1845
  %1865 = vmatprep.subr.bf16.mxu0 0
  %1866 = vmatpush1.bf16.msra.mxu0 %v1846
  %1867 = vmatprep.subr.bf16.mxu0 0
  %1868 = vmatpush1.bf16.msra.mxu0 %v1847
  %1869 = vmatprep.subr.bf16.mxu0 0
  %1870 = vmatpush1.bf16.msra.mxu0 %v1848
  %1871 = vmatprep.subr.bf16.mxu0 0
  %1872 = vmatpush1.bf16.msra.mxu0 %v1849
  %1873 = vmatprep.subr.bf16.mxu0 0
  %1874 = vmatpush1.bf16.msra.mxu0 %v1850
  %1875 = vmatprep.subr.bf16.mxu0 0
  %1876 = vmatpush1.bf16.msra.mxu0 0
  %1877 = vmatprep.subr.bf16.mxu0 0
  %1878 = vmatpush1.bf16.msra.mxu0 0
  %1879 = vmatprep.subr.bf16.mxu0 0
  %1880 = vmatpush1.bf16.msra.mxu0 0
  %1881 = vmatprep.subr.bf16.mxu0 0
  %1882 = vmatpush1.bf16.msra.mxu0 0
  %1883 = vmatprep.subr.bf16.mxu0 0
  %1884 = vmatpush1.bf16.msra.mxu0 0
  %1885 = vmatprep.subr.bf16.mxu0 0
  %1886 = vmatpush1.bf16.msra.mxu0 0
  %1887 = vmatprep.subr.bf16.mxu0 0
  %1888 = vmatpush1.bf16.msra.mxu0 0
  %1889 = vmatprep.subr.bf16.mxu0 0
  %1890 = vmatpush1.bf16.msra.mxu0 0
  %1891 = vmatprep.mubr.bf16.mxu0 0
  %1892 = vmatmul.mubr.bf16.gmra.mrb[0].mxu0 %v1806
  %v1893 = vpop.f32.mrb[0].mxu0
  %v1894 = vadd.f32 0.0, %v1893
  %v1895 = vpop.f32.mrb[0].mxu0
  %v1896 = vpop.f32.mrb[0].mxu0
  %v1897 = vadd.f32 0.0, %v1896
  %v1898 = vpop.f32.mrb[0].mxu0
  %1899 = vmatprep.mubr.bf16.mxu0 0
  %1900 = vmatmul.mubr.bf16.gmra.mrb[0].mxu0 %v1808
  %v1901 = vpop.f32.mrb[0].mxu0
  %v1902 = vadd.f32 0.0, %v1901
  %v1903 = vpop.f32.mrb[0].mxu0
  %v1904 = vpop.f32.mrb[0].mxu0
  %v1905 = vadd.f32 0.0, %v1904
  %v1906 = vpop.f32.mrb[0].mxu0
  %1907 = vdwg.mxu0
  %v1908 = vadd.f32 %v1780, %v1894
  %v1909 = vadd.f32 %v1781, %v1897
  %v1910 = vadd.f32 %v1782, %v1902
  %v1911 = vadd.f32 %v1783, %v1905
  %v1912 = vld [vmem:[#allocation2 + $0x20] sm:$0xf0]
  %v1913 = vld [vmem:[#allocation2 + $0x30] sm:$0xf]
  %v1914 = vld [vmem:[%s4 + $0x300] sm:$0xf]
  %v1915 = vld [vmem:[%s4 + $0x304] sm:$0xf]
  %v1916 = vld [vmem:[%s4 + $0x308] sm:$0xf]
  %v1917 = vld [vmem:[%s4 + $0x30c] sm:$0xf]
  %v1918 = vld [vmem:[%s4 + $0x310] sm:$0xf]
  %v1919 = vld [vmem:[%s4 + $0x314] sm:$0xf]
  %v1920 = vld [vmem:[%s4 + $0x318] sm:$0xf]
  %v1921 = vld [vmem:[%s4 + $0x31c] sm:$0xf]
  %v1922 = vld [vmem:[%s4 + $0x320] sm:$0xf]
  %v1923 = vld [vmem:[%s4 + $0x324] sm:$0xf]
  %v1924 = vld [vmem:[%s4 + $0x328] sm:$0xf]
  %v1925 = vld [vmem:[%s4 + $0x32c] sm:$0xf]
  %v1926 = vld [vmem:[%s4 + $0x330] sm:$0xf]
  %v1927 = vld [vmem:[%s4 + $0x334] sm:$0xf]
  %v1928 = vld [vmem:[%s4 + $0x338] sm:$0xf]
  %v1929 = vld [vmem:[%s4 + $0x33c] sm:$0xf]
  %v1932 = vrot.slane %v1912, 4
  %v1933 = vrot.slane %v1139, 4
  %v1934 = vsel %vm1418, %v1932, %v1933
  %v1935 = vrot.slane %v1913, 4
  %v1936 = vsel %vm1418, %v1933, %v1935
  %v1955 = vunpack.c.l.b16 %v1914
  %v1956 = vunpack.c.l.b16 %v1915
  %v1957 = vunpack.c.l.b16 %v1916
  %v1958 = vunpack.c.l.b16 %v1917
  %v1959 = vunpack.c.l.b16 %v1918
  %v1960 = vunpack.c.l.b16 %v1919
  %v1961 = vunpack.c.l.b16 %v1920
  %v1962 = vunpack.c.l.b16 %v1921
  %v1963 = vunpack.c.l.b16 %v1922
  %v1964 = vunpack.c.l.b16 %v1923
  %v1965 = vunpack.c.l.b16 %v1924
  %v1966 = vunpack.c.l.b16 %v1925
  %v1967 = vunpack.c.l.b16 %v1926
  %v1968 = vunpack.c.l.b16 %v1927
  %v1969 = vunpack.c.l.b16 %v1928
  %v1970 = vunpack.c.l.b16 %v1929
  %v1971 = vpack.c.b16 %v1956, %v1955
  %v1972 = vpack.c.b16 %v1958, %v1957
  %v1973 = vpack.c.b16 %v1960, %v1959
  %v1974 = vpack.c.b16 %v1962, %v1961
  %v1975 = vpack.c.b16 %v1964, %v1963
  %v1976 = vpack.c.b16 %v1966, %v1965
  %v1977 = vpack.c.b16 %v1968, %v1967
  %v1978 = vpack.c.b16 %v1970, %v1969
  %1987 = vmatprep.subr.bf16.mxu0 0
  %1988 = vmatpush1.bf16.msra.mxu0 %v1971
  %1989 = vmatprep.subr.bf16.mxu0 0
  %1990 = vmatpush1.bf16.msra.mxu0 %v1972
  %1991 = vmatprep.subr.bf16.mxu0 0
  %1992 = vmatpush1.bf16.msra.mxu0 %v1973
  %1993 = vmatprep.subr.bf16.mxu0 0
  %1994 = vmatpush1.bf16.msra.mxu0 %v1974
  %1995 = vmatprep.subr.bf16.mxu0 0
  %1996 = vmatpush1.bf16.msra.mxu0 %v1975
  %1997 = vmatprep.subr.bf16.mxu0 0
  %1998 = vmatpush1.bf16.msra.mxu0 %v1976
  %1999 = vmatprep.subr.bf16.mxu0 0
  %2000 = vmatpush1.bf16.msra.mxu0 %v1977
  %2001 = vmatprep.subr.bf16.mxu0 0
  %2002 = vmatpush1.bf16.msra.mxu0 %v1978
  %2003 = vmatprep.subr.bf16.mxu0 0
  %2004 = vmatpush1.bf16.msra.mxu0 0
  %2005 = vmatprep.subr.bf16.mxu0 0
  %2006 = vmatpush1.bf16.msra.mxu0 0
  %2007 = vmatprep.subr.bf16.mxu0 0
  %2008 = vmatpush1.bf16.msra.mxu0 0
  %2009 = vmatprep.subr.bf16.mxu0 0
  %2010 = vmatpush1.bf16.msra.mxu0 0
  %2011 = vmatprep.subr.bf16.mxu0 0
  %2012 = vmatpush1.bf16.msra.mxu0 0
  %2013 = vmatprep.subr.bf16.mxu0 0
  %2014 = vmatpush1.bf16.msra.mxu0 0
  %2015 = vmatprep.subr.bf16.mxu0 0
  %2016 = vmatpush1.bf16.msra.mxu0 0
  %2017 = vmatprep.subr.bf16.mxu0 0
  %2018 = vmatpush1.bf16.msra.mxu0 0
  %2019 = vmatprep.mubr.bf16.mxu0 0
  %2020 = vmatmul.mubr.bf16.gmra.mrb[0].mxu0 %v1934
  %v2021 = vpop.f32.mrb[0].mxu0
  %v2022 = vadd.f32 0.0, %v2021
  %v2023 = vpop.f32.mrb[0].mxu0
  %v2024 = vpop.f32.mrb[0].mxu0
  %v2025 = vadd.f32 0.0, %v2024
  %v2026 = vpop.f32.mrb[0].mxu0
  %2027 = vmatprep.mubr.bf16.mxu0 0
  %2028 = vmatmul.mubr.bf16.gmra.mrb[0].mxu0 %v1936
  %v2029 = vpop.f32.mrb[0].mxu0
  %v2030 = vadd.f32 0.0, %v2029
  %v2031 = vpop.f32.mrb[0].mxu0
  %v2032 = vpop.f32.mrb[0].mxu0
  %v2033 = vadd.f32 0.0, %v2032
  %v2034 = vpop.f32.mrb[0].mxu0
  %2035 = vdwg.mxu0
  %v2036 = vadd.f32 %v1908, %v2022
  %v2037 = vadd.f32 %v1909, %v2025
  %v2038 = vadd.f32 %v1910, %v2030
  %v2039 = vadd.f32 %v1911, %v2033
  %v2040 = vld [vmem:[#allocation2 + $0x30] sm:$0xf0]
  %v2041 = vld [vmem:[#allocation2 + $0x40] sm:$0xf]
  %v2042 = vld [vmem:[%s4 + $0x340] sm:$0xf]
  %v2043 = vld [vmem:[%s4 + $0x344] sm:$0xf]
  %v2044 = vld [vmem:[%s4 + $0x348] sm:$0xf]
  %v2045 = vld [vmem:[%s4 + $0x34c] sm:$0xf]
  %v2046 = vld [vmem:[%s4 + $0x350] sm:$0xf]
  %v2047 = vld [vmem:[%s4 + $0x354] sm:$0xf]
  %v2048 = vld [vmem:[%s4 + $0x358] sm:$0xf]
  %v2049 = vld [vmem:[%s4 + $0x35c] sm:$0xf]
  %v2050 = vld [vmem:[%s4 + $0x360] sm:$0xf]
  %v2051 = vld [vmem:[%s4 + $0x364] sm:$0xf]
  %v2052 = vld [vmem:[%s4 + $0x368] sm:$0xf]
  %v2053 = vld [vmem:[%s4 + $0x36c] sm:$0xf]
  %v2054 = vld [vmem:[%s4 + $0x370] sm:$0xf]
  %v2055 = vld [vmem:[%s4 + $0x374] sm:$0xf]
  %v2056 = vld [vmem:[%s4 + $0x378] sm:$0xf]
  %v2057 = vld [vmem:[%s4 + $0x37c] sm:$0xf]
  %v2060 = vrot.slane %v2040, 4
  %v2061 = vrot.slane %v1269, 4
  %v2062 = vsel %vm1418, %v2060, %v2061
  %v2063 = vrot.slane %v2041, 4
  %v2064 = vsel %vm1418, %v2061, %v2063
  %v2083 = vunpack.c.l.b16 %v2042
  %v2084 = vunpack.c.l.b16 %v2043
  %v2085 = vunpack.c.l.b16 %v2044
  %v2086 = vunpack.c.l.b16 %v2045
  %v2087 = vunpack.c.l.b16 %v2046
  %v2088 = vunpack.c.l.b16 %v2047
  %v2089 = vunpack.c.l.b16 %v2048
  %v2090 = vunpack.c.l.b16 %v2049
  %v2091 = vunpack.c.l.b16 %v2050
  %v2092 = vunpack.c.l.b16 %v2051
  %v2093 = vunpack.c.l.b16 %v2052
  %v2094 = vunpack.c.l.b16 %v2053
  %v2095 = vunpack.c.l.b16 %v2054
  %v2096 = vunpack.c.l.b16 %v2055
  %v2097 = vunpack.c.l.b16 %v2056
  %v2098 = vunpack.c.l.b16 %v2057
  %v2099 = vpack.c.b16 %v2084, %v2083
  %v2100 = vpack.c.b16 %v2086, %v2085
  %v2101 = vpack.c.b16 %v2088, %v2087
  %v2102 = vpack.c.b16 %v2090, %v2089
  %v2103 = vpack.c.b16 %v2092, %v2091
  %v2104 = vpack.c.b16 %v2094, %v2093
  %v2105 = vpack.c.b16 %v2096, %v2095
  %v2106 = vpack.c.b16 %v2098, %v2097
  %2115 = vmatprep.subr.bf16.mxu0 0
  %2116 = vmatpush1.bf16.msra.mxu0 %v2099
  %2117 = vmatprep.subr.bf16.mxu0 0
  %2118 = vmatpush1.bf16.msra.mxu0 %v2100
  %2119 = vmatprep.subr.bf16.mxu0 0
  %2120 = vmatpush1.bf16.msra.mxu0 %v2101
  %2121 = vmatprep.subr.bf16.mxu0 0
  %2122 = vmatpush1.bf16.msra.mxu0 %v2102
  %2123 = vmatprep.subr.bf16.mxu0 0
  %2124 = vmatpush1.bf16.msra.mxu0 %v2103
  %2125 = vmatprep.subr.bf16.mxu0 0
  %2126 = vmatpush1.bf16.msra.mxu0 %v2104
  %2127 = vmatprep.subr.bf16.mxu0 0
  %2128 = vmatpush1.bf16.msra.mxu0 %v2105
  %2129 = vmatprep.subr.bf16.mxu0 0
  %2130 = vmatpush1.bf16.msra.mxu0 %v2106
  %2131 = vmatprep.subr.bf16.mxu0 0
  %2132 = vmatpush1.bf16.msra.mxu0 0
  %2133 = vmatprep.subr.bf16.mxu0 0
  %2134 = vmatpush1.bf16.msra.mxu0 0
  %2135 = vmatprep.subr.bf16.mxu0 0
  %2136 = vmatpush1.bf16.msra.mxu0 0
  %2137 = vmatprep.subr.bf16.mxu0 0
  %2138 = vmatpush1.bf16.msra.mxu0 0
  %2139 = vmatprep.subr.bf16.mxu0 0
  %2140 = vmatpush1.bf16.msra.mxu0 0
  %2141 = vmatprep.subr.bf16.mxu0 0
  %2142 = vmatpush1.bf16.msra.mxu0 0
  %2143 = vmatprep.subr.bf16.mxu0 0
  %2144 = vmatpush1.bf16.msra.mxu0 0
  %2145 = vmatprep.subr.bf16.mxu0 0
  %2146 = vmatpush1.bf16.msra.mxu0 0
  %2147 = vmatprep.mubr.bf16.mxu0 0
  %2148 = vmatmul.mubr.bf16.gmra.mrb[0].mxu0 %v2062
  %v2149 = vpop.f32.mrb[0].mxu0
  %v2150 = vadd.f32 0.0, %v2149
  %v2151 = vpop.f32.mrb[0].mxu0
  %v2152 = vpop.f32.mrb[0].mxu0
  %v2153 = vadd.f32 0.0, %v2152
  %v2154 = vpop.f32.mrb[0].mxu0
  %2155 = vmatprep.mubr.bf16.mxu0 0
  %2156 = vmatmul.mubr.bf16.gmra.mrb[0].mxu0 %v2064
  %v2157 = vpop.f32.mrb[0].mxu0
  %v2158 = vadd.f32 0.0, %v2157
  %v2159 = vpop.f32.mrb[0].mxu0
  %v2160 = vpop.f32.mrb[0].mxu0
  %v2161 = vadd.f32 0.0, %v2160
  %v2162 = vpop.f32.mrb[0].mxu0
  %2163 = vdwg.mxu0
  %v2164 = vadd.f32 %v2036, %v2150
  %v2165 = vadd.f32 %v2037, %v2153
  %v2166 = vadd.f32 %v2038, %v2158
  %v2167 = vadd.f32 %v2039, %v2161
  %v2168 = vld [vmem:[#allocation2 + $0x20] sm:$0xe0]
  %v2169 = vld [vmem:[#allocation2 + $0x30] sm:$0x1f]
  %v2170 = vld [vmem:[%s4 + $0x380] sm:$0xf]
  %v2171 = vld [vmem:[%s4 + $0x384] sm:$0xf]
  %v2172 = vld [vmem:[%s4 + $0x388] sm:$0xf]
  %v2173 = vld [vmem:[%s4 + $0x38c] sm:$0xf]
  %v2174 = vld [vmem:[%s4 + $0x390] sm:$0xf]
  %v2175 = vld [vmem:[%s4 + $0x394] sm:$0xf]
  %v2176 = vld [vmem:[%s4 + $0x398] sm:$0xf]
  %v2177 = vld [vmem:[%s4 + $0x39c] sm:$0xf]
  %v2178 = vld [vmem:[%s4 + $0x3a0] sm:$0xf]
  %v2179 = vld [vmem:[%s4 + $0x3a4] sm:$0xf]
  %v2180 = vld [vmem:[%s4 + $0x3a8] sm:$0xf]
  %v2181 = vld [vmem:[%s4 + $0x3ac] sm:$0xf]
  %v2182 = vld [vmem:[%s4 + $0x3b0] sm:$0xf]
  %v2183 = vld [vmem:[%s4 + $0x3b4] sm:$0xf]
  %v2184 = vld [vmem:[%s4 + $0x3b8] sm:$0xf]
  %v2185 = vld [vmem:[%s4 + $0x3bc] sm:$0xf]
  %v2188 = vrot.slane %v2168, 5
  %v2189 = vrot.slane %v1139, 5
  %v2190 = vsel %vm1675, %v2188, %v2189
  %v2191 = vrot.slane %v2169, 5
  %v2192 = vsel %vm1675, %v2189, %v2191
  %v2211 = vunpack.c.l.b16 %v2170
  %v2212 = vunpack.c.l.b16 %v2171
  %v2213 = vunpack.c.l.b16 %v2172
  %v2214 = vunpack.c.l.b16 %v2173
  %v2215 = vunpack.c.l.b16 %v2174
  %v2216 = vunpack.c.l.b16 %v2175
  %v2217 = vunpack.c.l.b16 %v2176
  %v2218 = vunpack.c.l.b16 %v2177
  %v2219 = vunpack.c.l.b16 %v2178
  %v2220 = vunpack.c.l.b16 %v2179
  %v2221 = vunpack.c.l.b16 %v2180
  %v2222 = vunpack.c.l.b16 %v2181
  %v2223 = vunpack.c.l.b16 %v2182
  %v2224 = vunpack.c.l.b16 %v2183
  %v2225 = vunpack.c.l.b16 %v2184
  %v2226 = vunpack.c.l.b16 %v2185
  %v2227 = vpack.c.b16 %v2212, %v2211
  %v2228 = vpack.c.b16 %v2214, %v2213
  %v2229 = vpack.c.b16 %v2216, %v2215
  %v2230 = vpack.c.b16 %v2218, %v2217
  %v2231 = vpack.c.b16 %v2220, %v2219
  %v2232 = vpack.c.b16 %v2222, %v2221
  %v2233 = vpack.c.b16 %v2224, %v2223
  %v2234 = vpack.c.b16 %v2226, %v2225
  %2243 = vmatprep.subr.bf16.mxu0 0
  %2244 = vmatpush1.bf16.msra.mxu0 %v2227
  %2245 = vmatprep.subr.bf16.mxu0 0
  %2246 = vmatpush1.bf16.msra.mxu0 %v2228
  %2247 = vmatprep.subr.bf16.mxu0 0
  %2248 = vmatpush1.bf16.msra.mxu0 %v2229
  %2249 = vmatprep.subr.bf16.mxu0 0
  %2250 = vmatpush1.bf16.msra.mxu0 %v2230
  %2251 = vmatprep.subr.bf16.mxu0 0
  %2252 = vmatpush1.bf16.msra.mxu0 %v2231
  %2253 = vmatprep.subr.bf16.mxu0 0
  %2254 = vmatpush1.bf16.msra.mxu0 %v2232
  %2255 = vmatprep.subr.bf16.mxu0 0
  %2256 = vmatpush1.bf16.msra.mxu0 %v2233
  %2257 = vmatprep.subr.bf16.mxu0 0
  %2258 = vmatpush1.bf16.msra.mxu0 %v2234
  %2259 = vmatprep.subr.bf16.mxu0 0
  %2260 = vmatpush1.bf16.msra.mxu0 0
  %2261 = vmatprep.subr.bf16.mxu0 0
  %2262 = vmatpush1.bf16.msra.mxu0 0
  %2263 = vmatprep.subr.bf16.mxu0 0
  %2264 = vmatpush1.bf16.msra.mxu0 0
  %2265 = vmatprep.subr.bf16.mxu0 0
  %2266 = vmatpush1.bf16.msra.mxu0 0
  %2267 = vmatprep.subr.bf16.mxu0 0
  %2268 = vmatpush1.bf16.msra.mxu0 0
  %2269 = vmatprep.subr.bf16.mxu0 0
  %2270 = vmatpush1.bf16.msra.mxu0 0
  %2271 = vmatprep.subr.bf16.mxu0 0
  %2272 = vmatpush1.bf16.msra.mxu0 0
  %2273 = vmatprep.subr.bf16.mxu0 0
  %2274 = vmatpush1.bf16.msra.mxu0 0
  %2275 = vmatprep.mubr.bf16.mxu0 0
  %2276 = vmatmul.mubr.bf16.gmra.mrb[0].mxu0 %v2190
  %v2277 = vpop.f32.mrb[0].mxu0
  %v2278 = vadd.f32 0.0, %v2277
  %v2279 = vpop.f32.mrb[0].mxu0
  %v2280 = vpop.f32.mrb[0].mxu0
  %v2281 = vadd.f32 0.0, %v2280
  %v2282 = vpop.f32.mrb[0].mxu0
  %2283 = vmatprep.mubr.bf16.mxu0 0
  %2284 = vmatmul.mubr.bf16.gmra.mrb[0].mxu0 %v2192
  %v2285 = vpop.f32.mrb[0].mxu0
  %v2286 = vadd.f32 0.0, %v2285
  %v2287 = vpop.f32.mrb[0].mxu0
  %v2288 = vpop.f32.mrb[0].mxu0
  %v2289 = vadd.f32 0.0, %v2288
  %v2290 = vpop.f32.mrb[0].mxu0
  %2291 = vdwg.mxu0
  %v2292 = vadd.f32 %v2164, %v2278
  %v2293 = vadd.f32 %v2165, %v2281
  %v2294 = vadd.f32 %v2166, %v2286
  %v2295 = vadd.f32 %v2167, %v2289
  %v2296 = vld [vmem:[#allocation2 + $0x30] sm:$0xe0]
  %v2297 = vld [vmem:[#allocation2 + $0x40] sm:$0x1f]
  %v2298 = vld [vmem:[%s4 + $0x3c0] sm:$0xf]
  %v2299 = vld [vmem:[%s4 + $0x3c4] sm:$0xf]
  %v2300 = vld [vmem:[%s4 + $0x3c8] sm:$0xf]
  %v2301 = vld [vmem:[%s4 + $0x3cc] sm:$0xf]
  %v2302 = vld [vmem:[%s4 + $0x3d0] sm:$0xf]
  %v2303 = vld [vmem:[%s4 + $0x3d4] sm:$0xf]
  %v2304 = vld [vmem:[%s4 + $0x3d8] sm:$0xf]
  %v2305 = vld [vmem:[%s4 + $0x3dc] sm:$0xf]
  %v2306 = vld [vmem:[%s4 + $0x3e0] sm:$0xf]
  %v2307 = vld [vmem:[%s4 + $0x3e4] sm:$0xf]
  %v2308 = vld [vmem:[%s4 + $0x3e8] sm:$0xf]
  %v2309 = vld [vmem:[%s4 + $0x3ec] sm:$0xf]
  %v2310 = vld [vmem:[%s4 + $0x3f0] sm:$0xf]
  %v2311 = vld [vmem:[%s4 + $0x3f4] sm:$0xf]
  %v2312 = vld [vmem:[%s4 + $0x3f8] sm:$0xf]
  %v2313 = vld [vmem:[%s4 + $0x3fc] sm:$0xf]
  %v2316 = vrot.slane %v2296, 5
  %v2317 = vrot.slane %v1269, 5
  %v2318 = vsel %vm1675, %v2316, %v2317
  %v2319 = vrot.slane %v2297, 5
  %v2320 = vsel %vm1675, %v2317, %v2319
  %v2339 = vunpack.c.l.b16 %v2298
  %v2340 = vunpack.c.l.b16 %v2299
  %v2341 = vunpack.c.l.b16 %v2300
  %v2342 = vunpack.c.l.b16 %v2301
  %v2343 = vunpack.c.l.b16 %v2302
  %v2344 = vunpack.c.l.b16 %v2303
  %v2345 = vunpack.c.l.b16 %v2304
  %v2346 = vunpack.c.l.b16 %v2305
  %v2347 = vunpack.c.l.b16 %v2306
  %v2348 = vunpack.c.l.b16 %v2307
  %v2349 = vunpack.c.l.b16 %v2308
  %v2350 = vunpack.c.l.b16 %v2309
  %v2351 = vunpack.c.l.b16 %v2310
  %v2352 = vunpack.c.l.b16 %v2311
  %v2353 = vunpack.c.l.b16 %v2312
  %v2354 = vunpack.c.l.b16 %v2313
  %v2355 = vpack.c.b16 %v2340, %v2339
  %v2356 = vpack.c.b16 %v2342, %v2341
  %v2357 = vpack.c.b16 %v2344, %v2343
  %v2358 = vpack.c.b16 %v2346, %v2345
  %v2359 = vpack.c.b16 %v2348, %v2347
  %v2360 = vpack.c.b16 %v2350, %v2349
  %v2361 = vpack.c.b16 %v2352, %v2351
  %v2362 = vpack.c.b16 %v2354, %v2353
  %2371 = vmatprep.subr.bf16.mxu0 0
  %2372 = vmatpush1.bf16.msra.mxu0 %v2355
  %2373 = vmatprep.subr.bf16.mxu0 0
  %2374 = vmatpush1.bf16.msra.mxu0 %v2356
  %2375 = vmatprep.subr.bf16.mxu0 0
  %2376 = vmatpush1.bf16.msra.mxu0 %v2357
  %2377 = vmatprep.subr.bf16.mxu0 0
  %2378 = vmatpush1.bf16.msra.mxu0 %v2358
  %2379 = vmatprep.subr.bf16.mxu0 0
  %2380 = vmatpush1.bf16.msra.mxu0 %v2359
  %2381 = vmatprep.subr.bf16.mxu0 0
  %2382 = vmatpush1.bf16.msra.mxu0 %v2360
  %2383 = vmatprep.subr.bf16.mxu0 0
  %2384 = vmatpush1.bf16.msra.mxu0 %v2361
  %2385 = vmatprep.subr.bf16.mxu0 0
  %2386 = vmatpush1.bf16.msra.mxu0 %v2362
  %2387 = vmatprep.subr.bf16.mxu0 0
  %2388 = vmatpush1.bf16.msra.mxu0 0
  %2389 = vmatprep.subr.bf16.mxu0 0
  %2390 = vmatpush1.bf16.msra.mxu0 0
  %2391 = vmatprep.subr.bf16.mxu0 0
  %2392 = vmatpush1.bf16.msra.mxu0 0
  %2393 = vmatprep.subr.bf16.mxu0 0
  %2394 = vmatpush1.bf16.msra.mxu0 0
  %2395 = vmatprep.subr.bf16.mxu0 0
  %2396 = vmatpush1.bf16.msra.mxu0 0
  %2397 = vmatprep.subr.bf16.mxu0 0
  %2398 = vmatpush1.bf16.msra.mxu0 0
  %2399 = vmatprep.subr.bf16.mxu0 0
  %2400 = vmatpush1.bf16.msra.mxu0 0
  %2401 = vmatprep.subr.bf16.mxu0 0
  %2402 = vmatpush1.bf16.msra.mxu0 0
  %2403 = vmatprep.mubr.bf16.mxu0 0
  %2404 = vmatmul.mubr.bf16.gmra.mrb[0].mxu0 %v2318
  %v2405 = vpop.f32.mrb[0].mxu0
  %v2406 = vadd.f32 0.0, %v2405
  %v2407 = vpop.f32.mrb[0].mxu0
  %v2408 = vpop.f32.mrb[0].mxu0
  %v2409 = vadd.f32 0.0, %v2408
  %v2410 = vpop.f32.mrb[0].mxu0
  %2411 = vmatprep.mubr.bf16.mxu0 0
  %2412 = vmatmul.mubr.bf16.gmra.mrb[0].mxu0 %v2320
  %v2413 = vpop.f32.mrb[0].mxu0
  %v2414 = vadd.f32 0.0, %v2413
  %v2415 = vpop.f32.mrb[0].mxu0
  %v2416 = vpop.f32.mrb[0].mxu0
  %v2417 = vadd.f32 0.0, %v2416
  %v2418 = vpop.f32.mrb[0].mxu0
  %2419 = vdwg.mxu0
  %v2420 = vadd.f32 %v2292, %v2406
  %v2421 = vadd.f32 %v2293, %v2409
  %v2422 = vadd.f32 %v2294, %v2414
  %v2423 = vadd.f32 %v2295, %v2417
  %v2424 = vld [vmem:[%s5] sm:$0x1]
  %v2426 = vlaneseq
  %v2427 = vshrl.u32 %v2426, 7
  %v2428 = vsub.s32 0, %v2427
  %v2429 = vrot.slane %v2424, %v2428
  %v2431 = vadd.f32 %v2420, %v2429
  %v2432 = vadd.f32 %v2421, %v2429
  %v2433 = vadd.f32 %v2422, %v2429
  %v2434 = vadd.f32 %v2423, %v2429
  %v2435 = vmax.f32 %v2431, 0.0
  %v2436 = vmax.f32 %v2432, 0.0
  %v2437 = vmax.f32 %v2433, 0.0
  %v2438 = vmax.f32 %v2434, 0.0
  %v2439 = vpack.c.bf16 %v2436, %v2435
  %v2440 = vpack.c.bf16 %v2438, %v2437
  %2441 = vst [vmem:[#allocation3] sm:$0xff] %v2439
  %2442 = vst [vmem:[#allocation3 + $0x8] sm:$0xff] %v2440
  %v2443 = vld [vmem:[#allocation3] sm:$0xf]
  %v2444 = vld [vmem:[%s6] sm:$0xf]
  %v2445 = vld [vmem:[%s6 + $0x4] sm:$0xf]
  %v2446 = vld [vmem:[%s6 + $0x8] sm:$0xf]
  %v2447 = vld [vmem:[%s6 + $0xc] sm:$0xf]
  %v2448 = vld [vmem:[%s6 + $0x10] sm:$0xf]
  %v2449 = vld [vmem:[%s6 + $0x14] sm:$0xf]
  %v2450 = vld [vmem:[%s6 + $0x18] sm:$0xf]
  %v2451 = vld [vmem:[%s6 + $0x1c] sm:$0xf]
  %v2452 = vld [vmem:[%s6 + $0x20] sm:$0xf]
  %v2453 = vld [vmem:[%s6 + $0x24] sm:$0xf]
  %v2454 = vld [vmem:[%s6 + $0x28] sm:$0xf]
  %v2455 = vld [vmem:[%s6 + $0x2c] sm:$0xf]
  %v2456 = vld [vmem:[%s6 + $0x30] sm:$0xf]
  %v2457 = vld [vmem:[%s6 + $0x34] sm:$0xf]
  %v2458 = vld [vmem:[%s6 + $0x38] sm:$0xf]
  %v2459 = vld [vmem:[%s6 + $0x3c] sm:$0xf]
  %v2460 = vld [vmem:[#allocation3] sm:$0x1e]
  %v2461 = vld [vmem:[%s6 + $0x40] sm:$0xf]
  %v2462 = vld [vmem:[%s6 + $0x44] sm:$0xf]
  %v2463 = vld [vmem:[%s6 + $0x48] sm:$0xf]
  %v2464 = vld [vmem:[%s6 + $0x4c] sm:$0xf]
  %v2465 = vld [vmem:[%s6 + $0x50] sm:$0xf]
  %v2466 = vld [vmem:[%s6 + $0x54] sm:$0xf]
  %v2467 = vld [vmem:[%s6 + $0x58] sm:$0xf]
  %v2468 = vld [vmem:[%s6 + $0x5c] sm:$0xf]
  %v2469 = vld [vmem:[%s6 + $0x60] sm:$0xf]
  %v2470 = vld [vmem:[%s6 + $0x64] sm:$0xf]
  %v2471 = vld [vmem:[%s6 + $0x68] sm:$0xf]
  %v2472 = vld [vmem:[%s6 + $0x6c] sm:$0xf]
  %v2473 = vld [vmem:[%s6 + $0x70] sm:$0xf]
  %v2474 = vld [vmem:[%s6 + $0x74] sm:$0xf]
  %v2475 = vld [vmem:[%s6 + $0x78] sm:$0xf]
  %v2476 = vld [vmem:[%s6 + $0x7c] sm:$0xf]
  %v2478 = vrot.slane %v2460, 1
  %v2496 = vunpack.c.l.b16 %v2461
  %v2497 = vunpack.c.l.b16 %v2462
  %v2498 = vunpack.c.l.b16 %v2463
  %v2499 = vunpack.c.l.b16 %v2464
  %v2500 = vunpack.c.l.b16 %v2465
  %v2501 = vunpack.c.l.b16 %v2466
  %v2502 = vunpack.c.l.b16 %v2467
  %v2503 = vunpack.c.l.b16 %v2468
  %v2504 = vunpack.c.l.b16 %v2469
  %v2505 = vunpack.c.l.b16 %v2470
  %v2506 = vunpack.c.l.b16 %v2471
  %v2507 = vunpack.c.l.b16 %v2472
  %v2508 = vunpack.c.l.b16 %v2473
  %v2509 = vunpack.c.l.b16 %v2474
  %v2510 = vunpack.c.l.b16 %v2475
  %v2511 = vunpack.c.l.b16 %v2476
  %v2512 = vpack.c.b16 %v2497, %v2496
  %v2513 = vpack.c.b16 %v2499, %v2498
  %v2514 = vpack.c.b16 %v2501, %v2500
  %v2515 = vpack.c.b16 %v2503, %v2502
  %v2516 = vpack.c.b16 %v2505, %v2504
  %v2517 = vpack.c.b16 %v2507, %v2506
  %v2518 = vpack.c.b16 %v2509, %v2508
  %v2519 = vpack.c.b16 %v2511, %v2510
  %2528 = vmatprep.subr.bf16.mxu0 0
  %2529 = vmatpush1.bf16.msra.mxu0 %v2512
  %2530 = vmatprep.subr.bf16.mxu0 0
  %2531 = vmatpush1.bf16.msra.mxu0 %v2513
  %2532 = vmatprep.subr.bf16.mxu0 0
  %2533 = vmatpush1.bf16.msra.mxu0 %v2514
  %2534 = vmatprep.subr.bf16.mxu0 0
  %2535 = vmatpush1.bf16.msra.mxu0 %v2515
  %2536 = vmatprep.subr.bf16.mxu0 0
  %2537 = vmatpush1.bf16.msra.mxu0 %v2516
  %2538 = vmatprep.subr.bf16.mxu0 0
  %2539 = vmatpush1.bf16.msra.mxu0 %v2517
  %2540 = vmatprep.subr.bf16.mxu0 0
  %2541 = vmatpush1.bf16.msra.mxu0 %v2518
  %2542 = vmatprep.subr.bf16.mxu0 0
  %2543 = vmatpush1.bf16.msra.mxu0 %v2519
  %2544 = vmatprep.subr.bf16.mxu0 0
  %2545 = vmatpush1.bf16.msra.mxu0 0
  %2546 = vmatprep.subr.bf16.mxu0 0
  %2547 = vmatpush1.bf16.msra.mxu0 0
  %2548 = vmatprep.subr.bf16.mxu0 0
  %2549 = vmatpush1.bf16.msra.mxu0 0
  %2550 = vmatprep.subr.bf16.mxu0 0
  %2551 = vmatpush1.bf16.msra.mxu0 0
  %2552 = vmatprep.subr.bf16.mxu0 0
  %2553 = vmatpush1.bf16.msra.mxu0 0
  %2554 = vmatprep.subr.bf16.mxu0 0
  %2555 = vmatpush1.bf16.msra.mxu0 0
  %2556 = vmatprep.subr.bf16.mxu0 0
  %2557 = vmatpush1.bf16.msra.mxu0 0
  %2558 = vmatprep.subr.bf16.mxu0 0
  %2559 = vmatpush1.bf16.msra.mxu0 0
  %2560 = vmatprep.mubr.bf16.mxu0 0
  %2561 = vmatmul.mubr.bf16.gmra.mrb[0].mxu0 %v2478
  %v2562 = vpop.f32.mrb[0].mxu0
  %v2563 = vadd.f32 0.0, %v2562
  %v2564 = vpop.f32.mrb[0].mxu0
  %v2565 = vpop.f32.mrb[0].mxu0
  %v2566 = vpop.f32.mrb[0].mxu0
  %2567 = vdwg.mxu0
  %v2584 = vunpack.c.l.b16 %v2444
  %v2585 = vunpack.c.l.b16 %v2445
  %v2586 = vunpack.c.l.b16 %v2446
  %v2587 = vunpack.c.l.b16 %v2447
  %v2588 = vunpack.c.l.b16 %v2448
  %v2589 = vunpack.c.l.b16 %v2449
  %v2590 = vunpack.c.l.b16 %v2450
  %v2591 = vunpack.c.l.b16 %v2451
  %v2592 = vunpack.c.l.b16 %v2452
  %v2593 = vunpack.c.l.b16 %v2453
  %v2594 = vunpack.c.l.b16 %v2454
  %v2595 = vunpack.c.l.b16 %v2455
  %v2596 = vunpack.c.l.b16 %v2456
  %v2597 = vunpack.c.l.b16 %v2457
  %v2598 = vunpack.c.l.b16 %v2458
  %v2599 = vunpack.c.l.b16 %v2459
  %v2600 = vpack.c.b16 %v2585, %v2584
  %v2601 = vpack.c.b16 %v2587, %v2586
  %v2602 = vpack.c.b16 %v2589, %v2588
  %v2603 = vpack.c.b16 %v2591, %v2590
  %v2604 = vpack.c.b16 %v2593, %v2592
  %v2605 = vpack.c.b16 %v2595, %v2594
  %v2606 = vpack.c.b16 %v2597, %v2596
  %v2607 = vpack.c.b16 %v2599, %v2598
  %2616 = vmatprep.subr.bf16.mxu0 0
  %2617 = vmatpush1.bf16.msra.mxu0 %v2600
  %2618 = vmatprep.subr.bf16.mxu0 0
  %2619 = vmatpush1.bf16.msra.mxu0 %v2601
  %2620 = vmatprep.subr.bf16.mxu0 0
  %2621 = vmatpush1.bf16.msra.mxu0 %v2602
  %2622 = vmatprep.subr.bf16.mxu0 0
  %2623 = vmatpush1.bf16.msra.mxu0 %v2603
  %2624 = vmatprep.subr.bf16.mxu0 0
  %2625 = vmatpush1.bf16.msra.mxu0 %v2604
  %2626 = vmatprep.subr.bf16.mxu0 0
  %2627 = vmatpush1.bf16.msra.mxu0 %v2605
  %2628 = vmatprep.subr.bf16.mxu0 0
  %2629 = vmatpush1.bf16.msra.mxu0 %v2606
  %2630 = vmatprep.subr.bf16.mxu0 0
  %2631 = vmatpush1.bf16.msra.mxu0 %v2607
  %2632 = vmatprep.subr.bf16.mxu0 0
  %2633 = vmatpush1.bf16.msra.mxu0 0
  %2634 = vmatprep.subr.bf16.mxu0 0
  %2635 = vmatpush1.bf16.msra.mxu0 0
  %2636 = vmatprep.subr.bf16.mxu0 0
  %2637 = vmatpush1.bf16.msra.mxu0 0
  %2638 = vmatprep.subr.bf16.mxu0 0
  %2639 = vmatpush1.bf16.msra.mxu0 0
  %2640 = vmatprep.subr.bf16.mxu0 0
  %2641 = vmatpush1.bf16.msra.mxu0 0
  %2642 = vmatprep.subr.bf16.mxu0 0
  %2643 = vmatpush1.bf16.msra.mxu0 0
  %2644 = vmatprep.subr.bf16.mxu0 0
  %2645 = vmatpush1.bf16.msra.mxu0 0
  %2646 = vmatprep.subr.bf16.mxu0 0
  %2647 = vmatpush1.bf16.msra.mxu0 0
  %2648 = vmatprep.mubr.bf16.mxu0 0
  %2649 = vmatmul.mubr.bf16.gmra.mrb[0].mxu0 %v2443
  %v2650 = vpop.f32.mrb[0].mxu0
  %v2651 = vadd.f32 %v2563, %v2650
  %v2652 = vpop.f32.mrb[0].mxu0
  %v2653 = vpop.f32.mrb[0].mxu0
  %v2654 = vpop.f32.mrb[0].mxu0
  %2655 = vdwg.mxu0
  %v2656 = vld [vmem:[#allocation3] sm:$0x3c]
  %v2657 = vld [vmem:[%s6 + $0x80] sm:$0xf]
  %v2658 = vld [vmem:[%s6 + $0x84] sm:$0xf]
  %v2659 = vld [vmem:[%s6 + $0x88] sm:$0xf]
  %v2660 = vld [vmem:[%s6 + $0x8c] sm:$0xf]
  %v2661 = vld [vmem:[%s6 + $0x90] sm:$0xf]
  %v2662 = vld [vmem:[%s6 + $0x94] sm:$0xf]
  %v2663 = vld [vmem:[%s6 + $0x98] sm:$0xf]
  %v2664 = vld [vmem:[%s6 + $0x9c] sm:$0xf]
  %v2665 = vld [vmem:[%s6 + $0xa0] sm:$0xf]
  %v2666 = vld [vmem:[%s6 + $0xa4] sm:$0xf]
  %v2667 = vld [vmem:[%s6 + $0xa8] sm:$0xf]
  %v2668 = vld [vmem:[%s6 + $0xac] sm:$0xf]
  %v2669 = vld [vmem:[%s6 + $0xb0] sm:$0xf]
  %v2670 = vld [vmem:[%s6 + $0xb4] sm:$0xf]
  %v2671 = vld [vmem:[%s6 + $0xb8] sm:$0xf]
  %v2672 = vld [vmem:[%s6 + $0xbc] sm:$0xf]
  %v2674 = vrot.slane %v2656, 2
  %v2692 = vunpack.c.l.b16 %v2657
  %v2693 = vunpack.c.l.b16 %v2658
  %v2694 = vunpack.c.l.b16 %v2659
  %v2695 = vunpack.c.l.b16 %v2660
  %v2696 = vunpack.c.l.b16 %v2661
  %v2697 = vunpack.c.l.b16 %v2662
  %v2698 = vunpack.c.l.b16 %v2663
  %v2699 = vunpack.c.l.b16 %v2664
  %v2700 = vunpack.c.l.b16 %v2665
  %v2701 = vunpack.c.l.b16 %v2666
  %v2702 = vunpack.c.l.b16 %v2667
  %v2703 = vunpack.c.l.b16 %v2668
  %v2704 = vunpack.c.l.b16 %v2669
  %v2705 = vunpack.c.l.b16 %v2670
  %v2706 = vunpack.c.l.b16 %v2671
  %v2707 = vunpack.c.l.b16 %v2672
  %v2708 = vpack.c.b16 %v2693, %v2692
  %v2709 = vpack.c.b16 %v2695, %v2694
  %v2710 = vpack.c.b16 %v2697, %v2696
  %v2711 = vpack.c.b16 %v2699, %v2698
  %v2712 = vpack.c.b16 %v2701, %v2700
  %v2713 = vpack.c.b16 %v2703, %v2702
  %v2714 = vpack.c.b16 %v2705, %v2704
  %v2715 = vpack.c.b16 %v2707, %v2706
  %2724 = vmatprep.subr.bf16.mxu0 0
  %2725 = vmatpush1.bf16.msra.mxu0 %v2708
  %2726 = vmatprep.subr.bf16.mxu0 0
  %2727 = vmatpush1.bf16.msra.mxu0 %v2709
  %2728 = vmatprep.subr.bf16.mxu0 0
  %2729 = vmatpush1.bf16.msra.mxu0 %v2710
  %2730 = vmatprep.subr.bf16.mxu0 0
  %2731 = vmatpush1.bf16.msra.mxu0 %v2711
  %2732 = vmatprep.subr.bf16.mxu0 0
  %2733 = vmatpush1.bf16.msra.mxu0 %v2712
  %2734 = vmatprep.subr.bf16.mxu0 0
  %2735 = vmatpush1.bf16.msra.mxu0 %v2713
  %2736 = vmatprep.subr.bf16.mxu0 0
  %2737 = vmatpush1.bf16.msra.mxu0 %v2714
  %2738 = vmatprep.subr.bf16.mxu0 0
  %2739 = vmatpush1.bf16.msra.mxu0 %v2715
  %2740 = vmatprep.subr.bf16.mxu0 0
  %2741 = vmatpush1.bf16.msra.mxu0 0
  %2742 = vmatprep.subr.bf16.mxu0 0
  %2743 = vmatpush1.bf16.msra.mxu0 0
  %2744 = vmatprep.subr.bf16.mxu0 0
  %2745 = vmatpush1.bf16.msra.mxu0 0
  %2746 = vmatprep.subr.bf16.mxu0 0
  %2747 = vmatpush1.bf16.msra.mxu0 0
  %2748 = vmatprep.subr.bf16.mxu0 0
  %2749 = vmatpush1.bf16.msra.mxu0 0
  %2750 = vmatprep.subr.bf16.mxu0 0
  %2751 = vmatpush1.bf16.msra.mxu0 0
  %2752 = vmatprep.subr.bf16.mxu0 0
  %2753 = vmatpush1.bf16.msra.mxu0 0
  %2754 = vmatprep.subr.bf16.mxu0 0
  %2755 = vmatpush1.bf16.msra.mxu0 0
  %2756 = vmatprep.mubr.bf16.mxu0 0
  %2757 = vmatmul.mubr.bf16.gmra.mrb[0].mxu0 %v2674
  %v2758 = vpop.f32.mrb[0].mxu0
  %v2759 = vadd.f32 0.0, %v2758
  %v2760 = vpop.f32.mrb[0].mxu0
  %v2761 = vpop.f32.mrb[0].mxu0
  %v2762 = vpop.f32.mrb[0].mxu0
  %2763 = vdwg.mxu0
  %v2764 = vadd.f32 %v2651, %v2759
  %v2765 = vld [vmem:[#allocation3] sm:$0xf0]
  %v2766 = vld [vmem:[%s6 + $0xc0] sm:$0xf]
  %v2767 = vld [vmem:[%s6 + $0xc4] sm:$0xf]
  %v2768 = vld [vmem:[%s6 + $0xc8] sm:$0xf]
  %v2769 = vld [vmem:[%s6 + $0xcc] sm:$0xf]
  %v2770 = vld [vmem:[%s6 + $0xd0] sm:$0xf]
  %v2771 = vld [vmem:[%s6 + $0xd4] sm:$0xf]
  %v2772 = vld [vmem:[%s6 + $0xd8] sm:$0xf]
  %v2773 = vld [vmem:[%s6 + $0xdc] sm:$0xf]
  %v2774 = vld [vmem:[%s6 + $0xe0] sm:$0xf]
  %v2775 = vld [vmem:[%s6 + $0xe4] sm:$0xf]
  %v2776 = vld [vmem:[%s6 + $0xe8] sm:$0xf]
  %v2777 = vld [vmem:[%s6 + $0xec] sm:$0xf]
  %v2778 = vld [vmem:[%s6 + $0xf0] sm:$0xf]
  %v2779 = vld [vmem:[%s6 + $0xf4] sm:$0xf]
  %v2780 = vld [vmem:[%s6 + $0xf8] sm:$0xf]
  %v2781 = vld [vmem:[%s6 + $0xfc] sm:$0xf]
  %v2783 = vrot.slane %v2765, 4
  %v2801 = vunpack.c.l.b16 %v2766
  %v2802 = vunpack.c.l.b16 %v2767
  %v2803 = vunpack.c.l.b16 %v2768
  %v2804 = vunpack.c.l.b16 %v2769
  %v2805 = vunpack.c.l.b16 %v2770
  %v2806 = vunpack.c.l.b16 %v2771
  %v2807 = vunpack.c.l.b16 %v2772
  %v2808 = vunpack.c.l.b16 %v2773
  %v2809 = vunpack.c.l.b16 %v2774
  %v2810 = vunpack.c.l.b16 %v2775
  %v2811 = vunpack.c.l.b16 %v2776
  %v2812 = vunpack.c.l.b16 %v2777
  %v2813 = vunpack.c.l.b16 %v2778
  %v2814 = vunpack.c.l.b16 %v2779
  %v2815 = vunpack.c.l.b16 %v2780
  %v2816 = vunpack.c.l.b16 %v2781
  %v2817 = vpack.c.b16 %v2802, %v2801
  %v2818 = vpack.c.b16 %v2804, %v2803
  %v2819 = vpack.c.b16 %v2806, %v2805
  %v2820 = vpack.c.b16 %v2808, %v2807
  %v2821 = vpack.c.b16 %v2810, %v2809
  %v2822 = vpack.c.b16 %v2812, %v2811
  %v2823 = vpack.c.b16 %v2814, %v2813
  %v2824 = vpack.c.b16 %v2816, %v2815
  %2833 = vmatprep.subr.bf16.mxu0 0
  %2834 = vmatpush1.bf16.msra.mxu0 %v2817
  %2835 = vmatprep.subr.bf16.mxu0 0
  %2836 = vmatpush1.bf16.msra.mxu0 %v2818
  %2837 = vmatprep.subr.bf16.mxu0 0
  %2838 = vmatpush1.bf16.msra.mxu0 %v2819
  %2839 = vmatprep.subr.bf16.mxu0 0
  %2840 = vmatpush1.bf16.msra.mxu0 %v2820
  %2841 = vmatprep.subr.bf16.mxu0 0
  %2842 = vmatpush1.bf16.msra.mxu0 %v2821
  %2843 = vmatprep.subr.bf16.mxu0 0
  %2844 = vmatpush1.bf16.msra.mxu0 %v2822
  %2845 = vmatprep.subr.bf16.mxu0 0
  %2846 = vmatpush1.bf16.msra.mxu0 %v2823
  %2847 = vmatprep.subr.bf16.mxu0 0
  %2848 = vmatpush1.bf16.msra.mxu0 %v2824
  %2849 = vmatprep.subr.bf16.mxu0 0
  %2850 = vmatpush1.bf16.msra.mxu0 0
  %2851 = vmatprep.subr.bf16.mxu0 0
  %2852 = vmatpush1.bf16.msra.mxu0 0
  %2853 = vmatprep.subr.bf16.mxu0 0
  %2854 = vmatpush1.bf16.msra.mxu0 0
  %2855 = vmatprep.subr.bf16.mxu0 0
  %2856 = vmatpush1.bf16.msra.mxu0 0
  %2857 = vmatprep.subr.bf16.mxu0 0
  %2858 = vmatpush1.bf16.msra.mxu0 0
  %2859 = vmatprep.subr.bf16.mxu0 0
  %2860 = vmatpush1.bf16.msra.mxu0 0
  %2861 = vmatprep.subr.bf16.mxu0 0
  %2862 = vmatpush1.bf16.msra.mxu0 0
  %2863 = vmatprep.subr.bf16.mxu0 0
  %2864 = vmatpush1.bf16.msra.mxu0 0
  %2865 = vmatprep.mubr.bf16.mxu0 0
  %2866 = vmatmul.mubr.bf16.gmra.mrb[0].mxu0 %v2783
  %v2867 = vpop.f32.mrb[0].mxu0
  %v2868 = vadd.f32 0.0, %v2867
  %v2869 = vpop.f32.mrb[0].mxu0
  %v2870 = vpop.f32.mrb[0].mxu0
  %v2871 = vpop.f32.mrb[0].mxu0
  %2872 = vdwg.mxu0
  %v2873 = vadd.f32 %v2764, %v2868
  %v2874 = vld [vmem:[#allocation3] sm:$0xe0]
  %v2875 = vld [vmem:[#allocation3 + $0x8] sm:$0x1]
  %v2876 = vld [vmem:[%s6 + $0x100] sm:$0xf]
  %v2877 = vld [vmem:[%s6 + $0x104] sm:$0xf]
  %v2878 = vld [vmem:[%s6 + $0x108] sm:$0xf]
  %v2879 = vld [vmem:[%s6 + $0x10c] sm:$0xf]
  %v2880 = vld [vmem:[%s6 + $0x110] sm:$0xf]
  %v2881 = vld [vmem:[%s6 + $0x114] sm:$0xf]
  %v2882 = vld [vmem:[%s6 + $0x118] sm:$0xf]
  %v2883 = vld [vmem:[%s6 + $0x11c] sm:$0xf]
  %v2884 = vld [vmem:[%s6 + $0x120] sm:$0xf]
  %v2885 = vld [vmem:[%s6 + $0x124] sm:$0xf]
  %v2886 = vld [vmem:[%s6 + $0x128] sm:$0xf]
  %v2887 = vld [vmem:[%s6 + $0x12c] sm:$0xf]
  %v2888 = vld [vmem:[%s6 + $0x130] sm:$0xf]
  %v2889 = vld [vmem:[%s6 + $0x134] sm:$0xf]
  %v2890 = vld [vmem:[%s6 + $0x138] sm:$0xf]
  %v2891 = vld [vmem:[%s6 + $0x13c] sm:$0xf]
  %v2894 = vrot.slane %v2874, 5
  %v2895 = vrot.slane %v2875, 5
  %v2896 = vsel %vm1675, %v2894, %v2895
  %v2914 = vunpack.c.l.b16 %v2876
  %v2915 = vunpack.c.l.b16 %v2877
  %v2916 = vunpack.c.l.b16 %v2878
  %v2917 = vunpack.c.l.b16 %v2879
  %v2918 = vunpack.c.l.b16 %v2880
  %v2919 = vunpack.c.l.b16 %v2881
  %v2920 = vunpack.c.l.b16 %v2882
  %v2921 = vunpack.c.l.b16 %v2883
  %v2922 = vunpack.c.l.b16 %v2884
  %v2923 = vunpack.c.l.b16 %v2885
  %v2924 = vunpack.c.l.b16 %v2886
  %v2925 = vunpack.c.l.b16 %v2887
  %v2926 = vunpack.c.l.b16 %v2888
  %v2927 = vunpack.c.l.b16 %v2889
  %v2928 = vunpack.c.l.b16 %v2890
  %v2929 = vunpack.c.l.b16 %v2891
  %v2930 = vpack.c.b16 %v2915, %v2914
  %v2931 = vpack.c.b16 %v2917, %v2916
  %v2932 = vpack.c.b16 %v2919, %v2918
  %v2933 = vpack.c.b16 %v2921, %v2920
  %v2934 = vpack.c.b16 %v2923, %v2922
  %v2935 = vpack.c.b16 %v2925, %v2924
  %v2936 = vpack.c.b16 %v2927, %v2926
  %v2937 = vpack.c.b16 %v2929, %v2928
  %2946 = vmatprep.subr.bf16.mxu0 0
  %2947 = vmatpush1.bf16.msra.mxu0 %v2930
  %2948 = vmatprep.subr.bf16.mxu0 0
  %2949 = vmatpush1.bf16.msra.mxu0 %v2931
  %2950 = vmatprep.subr.bf16.mxu0 0
  %2951 = vmatpush1.bf16.msra.mxu0 %v2932
  %2952 = vmatprep.subr.bf16.mxu0 0
  %2953 = vmatpush1.bf16.msra.mxu0 %v2933
  %2954 = vmatprep.subr.bf16.mxu0 0
  %2955 = vmatpush1.bf16.msra.mxu0 %v2934
  %2956 = vmatprep.subr.bf16.mxu0 0
  %2957 = vmatpush1.bf16.msra.mxu0 %v2935
  %2958 = vmatprep.subr.bf16.mxu0 0
  %2959 = vmatpush1.bf16.msra.mxu0 %v2936
  %2960 = vmatprep.subr.bf16.mxu0 0
  %2961 = vmatpush1.bf16.msra.mxu0 %v2937
  %2962 = vmatprep.subr.bf16.mxu0 0
  %2963 = vmatpush1.bf16.msra.mxu0 0
  %2964 = vmatprep.subr.bf16.mxu0 0
  %2965 = vmatpush1.bf16.msra.mxu0 0
  %2966 = vmatprep.subr.bf16.mxu0 0
  %2967 = vmatpush1.bf16.msra.mxu0 0
  %2968 = vmatprep.subr.bf16.mxu0 0
  %2969 = vmatpush1.bf16.msra.mxu0 0
  %2970 = vmatprep.subr.bf16.mxu0 0
  %2971 = vmatpush1.bf16.msra.mxu0 0
  %2972 = vmatprep.subr.bf16.mxu0 0
  %2973 = vmatpush1.bf16.msra.mxu0 0
  %2974 = vmatprep.subr.bf16.mxu0 0
  %2975 = vmatpush1.bf16.msra.mxu0 0
  %2976 = vmatprep.subr.bf16.mxu0 0
  %2977 = vmatpush1.bf16.msra.mxu0 0
  %2978 = vmatprep.mubr.bf16.mxu0 0
  %2979 = vmatmul.mubr.bf16.gmra.mrb[0].mxu0 %v2896
  %v2980 = vpop.f32.mrb[0].mxu0
  %v2981 = vadd.f32 0.0, %v2980
  %v2982 = vpop.f32.mrb[0].mxu0
  %v2983 = vpop.f32.mrb[0].mxu0
  %v2984 = vpop.f32.mrb[0].mxu0
  %2985 = vdwg.mxu0
  %v2986 = vadd.f32 %v2873, %v2981
  %v2987 = vld [vmem:[#allocation3] sm:$0xc0]
  %v2988 = vld [vmem:[#allocation3 + $0x8] sm:$0x3]
  %v2989 = vld [vmem:[%s6 + $0x140] sm:$0xf]
  %v2990 = vld [vmem:[%s6 + $0x144] sm:$0xf]
  %v2991 = vld [vmem:[%s6 + $0x148] sm:$0xf]
  %v2992 = vld [vmem:[%s6 + $0x14c] sm:$0xf]
  %v2993 = vld [vmem:[%s6 + $0x150] sm:$0xf]
  %v2994 = vld [vmem:[%s6 + $0x154] sm:$0xf]
  %v2995 = vld [vmem:[%s6 + $0x158] sm:$0xf]
  %v2996 = vld [vmem:[%s6 + $0x15c] sm:$0xf]
  %v2997 = vld [vmem:[%s6 + $0x160] sm:$0xf]
  %v2998 = vld [vmem:[%s6 + $0x164] sm:$0xf]
  %v2999 = vld [vmem:[%s6 + $0x168] sm:$0xf]
  %v3000 = vld [vmem:[%s6 + $0x16c] sm:$0xf]
  %v3001 = vld [vmem:[%s6 + $0x170] sm:$0xf]
  %v3002 = vld [vmem:[%s6 + $0x174] sm:$0xf]
  %v3003 = vld [vmem:[%s6 + $0x178] sm:$0xf]
  %v3004 = vld [vmem:[%s6 + $0x17c] sm:$0xf]
  %vm3007 = vcmask 1041408
  %v3008 = vrot.slane %v2987, 6
  %v3009 = vrot.slane %v2988, 6
  %v3010 = vsel %vm3007, %v3008, %v3009
  %v3028 = vunpack.c.l.b16 %v2989
  %v3029 = vunpack.c.l.b16 %v2990
  %v3030 = vunpack.c.l.b16 %v2991
  %v3031 = vunpack.c.l.b16 %v2992
  %v3032 = vunpack.c.l.b16 %v2993
  %v3033 = vunpack.c.l.b16 %v2994
  %v3034 = vunpack.c.l.b16 %v2995
  %v3035 = vunpack.c.l.b16 %v2996
  %v3036 = vunpack.c.l.b16 %v2997
  %v3037 = vunpack.c.l.b16 %v2998
  %v3038 = vunpack.c.l.b16 %v2999
  %v3039 = vunpack.c.l.b16 %v3000
  %v3040 = vunpack.c.l.b16 %v3001
  %v3041 = vunpack.c.l.b16 %v3002
  %v3042 = vunpack.c.l.b16 %v3003
  %v3043 = vunpack.c.l.b16 %v3004
  %v3044 = vpack.c.b16 %v3029, %v3028
  %v3045 = vpack.c.b16 %v3031, %v3030
  %v3046 = vpack.c.b16 %v3033, %v3032
  %v3047 = vpack.c.b16 %v3035, %v3034
  %v3048 = vpack.c.b16 %v3037, %v3036
  %v3049 = vpack.c.b16 %v3039, %v3038
  %v3050 = vpack.c.b16 %v3041, %v3040
  %v3051 = vpack.c.b16 %v3043, %v3042
  %3060 = vmatprep.subr.bf16.mxu0 0
  %3061 = vmatpush1.bf16.msra.mxu0 %v3044
  %3062 = vmatprep.subr.bf16.mxu0 0
  %3063 = vmatpush1.bf16.msra.mxu0 %v3045
  %3064 = vmatprep.subr.bf16.mxu0 0
  %3065 = vmatpush1.bf16.msra.mxu0 %v3046
  %3066 = vmatprep.subr.bf16.mxu0 0
  %3067 = vmatpush1.bf16.msra.mxu0 %v3047
  %3068 = vmatprep.subr.bf16.mxu0 0
  %3069 = vmatpush1.bf16.msra.mxu0 %v3048
  %3070 = vmatprep.subr.bf16.mxu0 0
  %3071 = vmatpush1.bf16.msra.mxu0 %v3049
  %3072 = vmatprep.subr.bf16.mxu0 0
  %3073 = vmatpush1.bf16.msra.mxu0 %v3050
  %3074 = vmatprep.subr.bf16.mxu0 0
  %3075 = vmatpush1.bf16.msra.mxu0 %v3051
  %3076 = vmatprep.subr.bf16.mxu0 0
  %3077 = vmatpush1.bf16.msra.mxu0 0
  %3078 = vmatprep.subr.bf16.mxu0 0
  %3079 = vmatpush1.bf16.msra.mxu0 0
  %3080 = vmatprep.subr.bf16.mxu0 0
  %3081 = vmatpush1.bf16.msra.mxu0 0
  %3082 = vmatprep.subr.bf16.mxu0 0
  %3083 = vmatpush1.bf16.msra.mxu0 0
  %3084 = vmatprep.subr.bf16.mxu0 0
  %3085 = vmatpush1.bf16.msra.mxu0 0
  %3086 = vmatprep.subr.bf16.mxu0 0
  %3087 = vmatpush1.bf16.msra.mxu0 0
  %3088 = vmatprep.subr.bf16.mxu0 0
  %3089 = vmatpush1.bf16.msra.mxu0 0
  %3090 = vmatprep.subr.bf16.mxu0 0
  %3091 = vmatpush1.bf16.msra.mxu0 0
  %3092 = vmatprep.mubr.bf16.mxu0 0
  %3093 = vmatmul.mubr.bf16.gmra.mrb[0].mxu0 %v3010
  %v3094 = vpop.f32.mrb[0].mxu0
  %v3095 = vadd.f32 0.0, %v3094
  %v3096 = vpop.f32.mrb[0].mxu0
  %v3097 = vpop.f32.mrb[0].mxu0
  %v3098 = vpop.f32.mrb[0].mxu0
  %3099 = vdwg.mxu0
  %v3100 = vadd.f32 %v2986, %v3095
  %v3101 = vld [vmem:[#allocation3 + $0x8] sm:$0xf]
  %v3102 = vld [vmem:[%s6 + $0x180] sm:$0xf]
  %v3103 = vld [vmem:[%s6 + $0x184] sm:$0xf]
  %v3104 = vld [vmem:[%s6 + $0x188] sm:$0xf]
  %v3105 = vld [vmem:[%s6 + $0x18c] sm:$0xf]
  %v3106 = vld [vmem:[%s6 + $0x190] sm:$0xf]
  %v3107 = vld [vmem:[%s6 + $0x194] sm:$0xf]
  %v3108 = vld [vmem:[%s6 + $0x198] sm:$0xf]
  %v3109 = vld [vmem:[%s6 + $0x19c] sm:$0xf]
  %v3110 = vld [vmem:[%s6 + $0x1a0] sm:$0xf]
  %v3111 = vld [vmem:[%s6 + $0x1a4] sm:$0xf]
  %v3112 = vld [vmem:[%s6 + $0x1a8] sm:$0xf]
  %v3113 = vld [vmem:[%s6 + $0x1ac] sm:$0xf]
  %v3114 = vld [vmem:[%s6 + $0x1b0] sm:$0xf]
  %v3115 = vld [vmem:[%s6 + $0x1b4] sm:$0xf]
  %v3116 = vld [vmem:[%s6 + $0x1b8] sm:$0xf]
  %v3117 = vld [vmem:[%s6 + $0x1bc] sm:$0xf]
  %v3134 = vunpack.c.l.b16 %v3102
  %v3135 = vunpack.c.l.b16 %v3103
  %v3136 = vunpack.c.l.b16 %v3104
  %v3137 = vunpack.c.l.b16 %v3105
  %v3138 = vunpack.c.l.b16 %v3106
  %v3139 = vunpack.c.l.b16 %v3107
  %v3140 = vunpack.c.l.b16 %v3108
  %v3141 = vunpack.c.l.b16 %v3109
  %v3142 = vunpack.c.l.b16 %v3110
  %v3143 = vunpack.c.l.b16 %v3111
  %v3144 = vunpack.c.l.b16 %v3112
  %v3145 = vunpack.c.l.b16 %v3113
  %v3146 = vunpack.c.l.b16 %v3114
  %v3147 = vunpack.c.l.b16 %v3115
  %v3148 = vunpack.c.l.b16 %v3116
  %v3149 = vunpack.c.l.b16 %v3117
  %v3150 = vpack.c.b16 %v3135, %v3134
  %v3151 = vpack.c.b16 %v3137, %v3136
  %v3152 = vpack.c.b16 %v3139, %v3138
  %v3153 = vpack.c.b16 %v3141, %v3140
  %v3154 = vpack.c.b16 %v3143, %v3142
  %v3155 = vpack.c.b16 %v3145, %v3144
  %v3156 = vpack.c.b16 %v3147, %v3146
  %v3157 = vpack.c.b16 %v3149, %v3148
  %3166 = vmatprep.subr.bf16.mxu0 0
  %3167 = vmatpush1.bf16.msra.mxu0 %v3150
  %3168 = vmatprep.subr.bf16.mxu0 0
  %3169 = vmatpush1.bf16.msra.mxu0 %v3151
  %3170 = vmatprep.subr.bf16.mxu0 0
  %3171 = vmatpush1.bf16.msra.mxu0 %v3152
  %3172 = vmatprep.subr.bf16.mxu0 0
  %3173 = vmatpush1.bf16.msra.mxu0 %v3153
  %3174 = vmatprep.subr.bf16.mxu0 0
  %3175 = vmatpush1.bf16.msra.mxu0 %v3154
  %3176 = vmatprep.subr.bf16.mxu0 0
  %3177 = vmatpush1.bf16.msra.mxu0 %v3155
  %3178 = vmatprep.subr.bf16.mxu0 0
  %3179 = vmatpush1.bf16.msra.mxu0 %v3156
  %3180 = vmatprep.subr.bf16.mxu0 0
  %3181 = vmatpush1.bf16.msra.mxu0 %v3157
  %3182 = vmatprep.subr.bf16.mxu0 0
  %3183 = vmatpush1.bf16.msra.mxu0 0
  %3184 = vmatprep.subr.bf16.mxu0 0
  %3185 = vmatpush1.bf16.msra.mxu0 0
  %3186 = vmatprep.subr.bf16.mxu0 0
  %3187 = vmatpush1.bf16.msra.mxu0 0
  %3188 = vmatprep.subr.bf16.mxu0 0
  %3189 = vmatpush1.bf16.msra.mxu0 0
  %3190 = vmatprep.subr.bf16.mxu0 0
  %3191 = vmatpush1.bf16.msra.mxu0 0
  %3192 = vmatprep.subr.bf16.mxu0 0
  %3193 = vmatpush1.bf16.msra.mxu0 0
  %3194 = vmatprep.subr.bf16.mxu0 0
  %3195 = vmatpush1.bf16.msra.mxu0 0
  %3196 = vmatprep.subr.bf16.mxu0 0
  %3197 = vmatpush1.bf16.msra.mxu0 0
  %3198 = vmatprep.mubr.bf16.mxu0 0
  %3199 = vmatmul.mubr.bf16.gmra.mrb[0].mxu0 %v3101
  %v3200 = vpop.f32.mrb[0].mxu0
  %v3201 = vadd.f32 0.0, %v3200
  %v3202 = vpop.f32.mrb[0].mxu0
  %v3203 = vpop.f32.mrb[0].mxu0
  %v3204 = vpop.f32.mrb[0].mxu0
  %3205 = vdwg.mxu0
  %v3206 = vadd.f32 %v3100, %v3201
  %v3207 = vld [vmem:[#allocation3 + $0x8] sm:$0x1e]
  %v3208 = vld [vmem:[%s6 + $0x1c0] sm:$0xf]
  %v3209 = vld [vmem:[%s6 + $0x1c4] sm:$0xf]
  %v3210 = vld [vmem:[%s6 + $0x1c8] sm:$0xf]
  %v3211 = vld [vmem:[%s6 + $0x1cc] sm:$0xf]
  %v3212 = vld [vmem:[%s6 + $0x1d0] sm:$0xf]
  %v3213 = vld [vmem:[%s6 + $0x1d4] sm:$0xf]
  %v3214 = vld [vmem:[%s6 + $0x1d8] sm:$0xf]
  %v3215 = vld [vmem:[%s6 + $0x1dc] sm:$0xf]
  %v3216 = vld [vmem:[%s6 + $0x1e0] sm:$0xf]
  %v3217 = vld [vmem:[%s6 + $0x1e4] sm:$0xf]
  %v3218 = vld [vmem:[%s6 + $0x1e8] sm:$0xf]
  %v3219 = vld [vmem:[%s6 + $0x1ec] sm:$0xf]
  %v3220 = vld [vmem:[%s6 + $0x1f0] sm:$0xf]
  %v3221 = vld [vmem:[%s6 + $0x1f4] sm:$0xf]
  %v3222 = vld [vmem:[%s6 + $0x1f8] sm:$0xf]
  %v3223 = vld [vmem:[%s6 + $0x1fc] sm:$0xf]
  %v3225 = vrot.slane %v3207, 1
  %v3243 = vunpack.c.l.b16 %v3208
  %v3244 = vunpack.c.l.b16 %v3209
  %v3245 = vunpack.c.l.b16 %v3210
  %v3246 = vunpack.c.l.b16 %v3211
  %v3247 = vunpack.c.l.b16 %v3212
  %v3248 = vunpack.c.l.b16 %v3213
  %v3249 = vunpack.c.l.b16 %v3214
  %v3250 = vunpack.c.l.b16 %v3215
  %v3251 = vunpack.c.l.b16 %v3216
  %v3252 = vunpack.c.l.b16 %v3217
  %v3253 = vunpack.c.l.b16 %v3218
  %v3254 = vunpack.c.l.b16 %v3219
  %v3255 = vunpack.c.l.b16 %v3220
  %v3256 = vunpack.c.l.b16 %v3221
  %v3257 = vunpack.c.l.b16 %v3222
  %v3258 = vunpack.c.l.b16 %v3223
  %v3259 = vpack.c.b16 %v3244, %v3243
  %v3260 = vpack.c.b16 %v3246, %v3245
  %v3261 = vpack.c.b16 %v3248, %v3247
  %v3262 = vpack.c.b16 %v3250, %v3249
  %v3263 = vpack.c.b16 %v3252, %v3251
  %v3264 = vpack.c.b16 %v3254, %v3253
  %v3265 = vpack.c.b16 %v3256, %v3255
  %v3266 = vpack.c.b16 %v3258, %v3257
  %3275 = vmatprep.subr.bf16.mxu0 0
  %3276 = vmatpush1.bf16.msra.mxu0 %v3259
  %3277 = vmatprep.subr.bf16.mxu0 0
  %3278 = vmatpush1.bf16.msra.mxu0 %v3260
  %3279 = vmatprep.subr.bf16.mxu0 0
  %3280 = vmatpush1.bf16.msra.mxu0 %v3261
  %3281 = vmatprep.subr.bf16.mxu0 0
  %3282 = vmatpush1.bf16.msra.mxu0 %v3262
  %3283 = vmatprep.subr.bf16.mxu0 0
  %3284 = vmatpush1.bf16.msra.mxu0 %v3263
  %3285 = vmatprep.subr.bf16.mxu0 0
  %3286 = vmatpush1.bf16.msra.mxu0 %v3264
  %3287 = vmatprep.subr.bf16.mxu0 0
  %3288 = vmatpush1.bf16.msra.mxu0 %v3265
  %3289 = vmatprep.subr.bf16.mxu0 0
  %3290 = vmatpush1.bf16.msra.mxu0 %v3266
  %3291 = vmatprep.subr.bf16.mxu0 0
  %3292 = vmatpush1.bf16.msra.mxu0 0
  %3293 = vmatprep.subr.bf16.mxu0 0
  %3294 = vmatpush1.bf16.msra.mxu0 0
  %3295 = vmatprep.subr.bf16.mxu0 0
  %3296 = vmatpush1.bf16.msra.mxu0 0
  %3297 = vmatprep.subr.bf16.mxu0 0
  %3298 = vmatpush1.bf16.msra.mxu0 0
  %3299 = vmatprep.subr.bf16.mxu0 0
  %3300 = vmatpush1.bf16.msra.mxu0 0
  %3301 = vmatprep.subr.bf16.mxu0 0
  %3302 = vmatpush1.bf16.msra.mxu0 0
  %3303 = vmatprep.subr.bf16.mxu0 0
  %3304 = vmatpush1.bf16.msra.mxu0 0
  %3305 = vmatprep.subr.bf16.mxu0 0
  %3306 = vmatpush1.bf16.msra.mxu0 0
  %3307 = vmatprep.mubr.bf16.mxu0 0
  %3308 = vmatmul.mubr.bf16.gmra.mrb[0].mxu0 %v3225
  %v3309 = vpop.f32.mrb[0].mxu0
  %v3310 = vadd.f32 0.0, %v3309
  %v3311 = vpop.f32.mrb[0].mxu0
  %v3312 = vpop.f32.mrb[0].mxu0
  %v3313 = vpop.f32.mrb[0].mxu0
  %3314 = vdwg.mxu0
  %v3315 = vadd.f32 %v3206, %v3310
  %v3316 = vld [vmem:[#allocation3 + $0x8] sm:$0x3c]
  %v3317 = vld [vmem:[%s6 + $0x200] sm:$0xf]
  %v3318 = vld [vmem:[%s6 + $0x204] sm:$0xf]
  %v3319 = vld [vmem:[%s6 + $0x208] sm:$0xf]
  %v3320 = vld [vmem:[%s6 + $0x20c] sm:$0xf]
  %v3321 = vld [vmem:[%s6 + $0x210] sm:$0xf]
  %v3322 = vld [vmem:[%s6 + $0x214] sm:$0xf]
  %v3323 = vld [vmem:[%s6 + $0x218] sm:$0xf]
  %v3324 = vld [vmem:[%s6 + $0x21c] sm:$0xf]
  %v3325 = vld [vmem:[%s6 + $0x220] sm:$0xf]
  %v3326 = vld [vmem:[%s6 + $0x224] sm:$0xf]
  %v3327 = vld [vmem:[%s6 + $0x228] sm:$0xf]
  %v3328 = vld [vmem:[%s6 + $0x22c] sm:$0xf]
  %v3329 = vld [vmem:[%s6 + $0x230] sm:$0xf]
  %v3330 = vld [vmem:[%s6 + $0x234] sm:$0xf]
  %v3331 = vld [vmem:[%s6 + $0x238] sm:$0xf]
  %v3332 = vld [vmem:[%s6 + $0x23c] sm:$0xf]
  %v3334 = vrot.slane %v3316, 2
  %v3352 = vunpack.c.l.b16 %v3317
  %v3353 = vunpack.c.l.b16 %v3318
  %v3354 = vunpack.c.l.b16 %v3319
  %v3355 = vunpack.c.l.b16 %v3320
  %v3356 = vunpack.c.l.b16 %v3321
  %v3357 = vunpack.c.l.b16 %v3322
  %v3358 = vunpack.c.l.b16 %v3323
  %v3359 = vunpack.c.l.b16 %v3324
  %v3360 = vunpack.c.l.b16 %v3325
  %v3361 = vunpack.c.l.b16 %v3326
  %v3362 = vunpack.c.l.b16 %v3327
  %v3363 = vunpack.c.l.b16 %v3328
  %v3364 = vunpack.c.l.b16 %v3329
  %v3365 = vunpack.c.l.b16 %v3330
  %v3366 = vunpack.c.l.b16 %v3331
  %v3367 = vunpack.c.l.b16 %v3332
  %v3368 = vpack.c.b16 %v3353, %v3352
  %v3369 = vpack.c.b16 %v3355, %v3354
  %v3370 = vpack.c.b16 %v3357, %v3356
  %v3371 = vpack.c.b16 %v3359, %v3358
  %v3372 = vpack.c.b16 %v3361, %v3360
  %v3373 = vpack.c.b16 %v3363, %v3362
  %v3374 = vpack.c.b16 %v3365, %v3364
  %v3375 = vpack.c.b16 %v3367, %v3366
  %3384 = vmatprep.subr.bf16.mxu0 0
  %3385 = vmatpush1.bf16.msra.mxu0 %v3368
  %3386 = vmatprep.subr.bf16.mxu0 0
  %3387 = vmatpush1.bf16.msra.mxu0 %v3369
  %3388 = vmatprep.subr.bf16.mxu0 0
  %3389 = vmatpush1.bf16.msra.mxu0 %v3370
  %3390 = vmatprep.subr.bf16.mxu0 0
  %3391 = vmatpush1.bf16.msra.mxu0 %v3371
  %3392 = vmatprep.subr.bf16.mxu0 0
  %3393 = vmatpush1.bf16.msra.mxu0 %v3372
  %3394 = vmatprep.subr.bf16.mxu0 0
  %3395 = vmatpush1.bf16.msra.mxu0 %v3373
  %3396 = vmatprep.subr.bf16.mxu0 0
  %3397 = vmatpush1.bf16.msra.mxu0 %v3374
  %3398 = vmatprep.subr.bf16.mxu0 0
  %3399 = vmatpush1.bf16.msra.mxu0 %v3375
  %3400 = vmatprep.subr.bf16.mxu0 0
  %3401 = vmatpush1.bf16.msra.mxu0 0
  %3402 = vmatprep.subr.bf16.mxu0 0
  %3403 = vmatpush1.bf16.msra.mxu0 0
  %3404 = vmatprep.subr.bf16.mxu0 0
  %3405 = vmatpush1.bf16.msra.mxu0 0
  %3406 = vmatprep.subr.bf16.mxu0 0
  %3407 = vmatpush1.bf16.msra.mxu0 0
  %3408 = vmatprep.subr.bf16.mxu0 0
  %3409 = vmatpush1.bf16.msra.mxu0 0
  %3410 = vmatprep.subr.bf16.mxu0 0
  %3411 = vmatpush1.bf16.msra.mxu0 0
  %3412 = vmatprep.subr.bf16.mxu0 0
  %3413 = vmatpush1.bf16.msra.mxu0 0
  %3414 = vmatprep.subr.bf16.mxu0 0
  %3415 = vmatpush1.bf16.msra.mxu0 0
  %3416 = vmatprep.mubr.bf16.mxu0 0
  %3417 = vmatmul.mubr.bf16.gmra.mrb[0].mxu0 %v3334
  %v3418 = vpop.f32.mrb[0].mxu0
  %v3419 = vadd.f32 0.0, %v3418
  %v3420 = vpop.f32.mrb[0].mxu0
  %v3421 = vpop.f32.mrb[0].mxu0
  %v3422 = vpop.f32.mrb[0].mxu0
  %3423 = vdwg.mxu0
  %v3424 = vadd.f32 %v3315, %v3419
  %v3425 = vld [vmem:[%s7] sm:$0x1]
  %v3427 = vlaneseq
  %v3428 = vshrl.u32 %v3427, 7
  %v3429 = vsub.s32 0, %v3428
  %v3430 = vrot.slane %v3425, %v3429
  %v3432 = vadd.f32 %v3424, %v3430
  %v3433 = vmax.f32 %v3432, 0.0
  %v3434 = vpack.c.bf16 %v3433, %v3433
  %3435 = vst [vmem:[#allocation4] sm:$0xf] %v3434
  %v3436 = vld [vmem:[%s1] sm:$0xf]
  %3437 = vst [vmem:[#allocation4 + $0x4] sm:$0xf] %v3436
  %v3438 = vld [vmem:[#allocation4] sm:$0xff]
  %v3439 = vld [vmem:[%s8] sm:$0xff]
  %v3440 = vld [vmem:[%s8 + $0x8] sm:$0xff]
  %v3441 = vld [vmem:[%s8 + $0x10] sm:$0xff]
  %v3442 = vld [vmem:[%s8 + $0x18] sm:$0xff]
  %v3443 = vld [vmem:[%s8 + $0x20] sm:$0xff]
  %v3444 = vld [vmem:[%s8 + $0x28] sm:$0xff]
  %v3445 = vld [vmem:[%s8 + $0x30] sm:$0xff]
  %v3446 = vld [vmem:[%s8 + $0x38] sm:$0xff]
  %v3447 = vld [vmem:[%s8 + $0x40] sm:$0xff]
  %v3448 = vld [vmem:[%s8 + $0x48] sm:$0xff]
  %v3449 = vld [vmem:[%s8 + $0x50] sm:$0xff]
  %v3450 = vld [vmem:[%s8 + $0x58] sm:$0xff]
  %v3451 = vld [vmem:[%s8 + $0x60] sm:$0xff]
  %v3452 = vld [vmem:[%s8 + $0x68] sm:$0xff]
  %v3453 = vld [vmem:[%s8 + $0x70] sm:$0xff]
  %v3454 = vld [vmem:[%s8 + $0x78] sm:$0xff]
  %v3455 = vld [vmem:[%s8 + $0x80] sm:$0xff]
  %v3456 = vld [vmem:[%s8 + $0x88] sm:$0xff]
  %v3457 = vld [vmem:[%s8 + $0x90] sm:$0xff]
  %v3458 = vld [vmem:[%s8 + $0x98] sm:$0xff]
  %v3459 = vld [vmem:[%s8 + $0xa0] sm:$0xff]
  %v3460 = vld [vmem:[%s8 + $0xa8] sm:$0xff]
  %v3461 = vld [vmem:[%s8 + $0xb0] sm:$0xff]
  %v3462 = vld [vmem:[%s8 + $0xb8] sm:$0xff]
  %v3463 = vld [vmem:[%s8 + $0xc0] sm:$0xff]
  %v3464 = vld [vmem:[%s8 + $0xc8] sm:$0xff]
  %v3465 = vld [vmem:[%s8 + $0xd0] sm:$0xff]
  %v3466 = vld [vmem:[%s8 + $0xd8] sm:$0xff]
  %v3467 = vld [vmem:[%s8 + $0xe0] sm:$0xff]
  %v3468 = vld [vmem:[%s8 + $0xe8] sm:$0xff]
  %v3469 = vld [vmem:[%s8 + $0xf0] sm:$0xff]
  %v3470 = vld [vmem:[%s8 + $0xf8] sm:$0xff]
  %v3471 = vld [vmem:[%s8 + $0x100] sm:$0xff]
  %v3472 = vld [vmem:[%s8 + $0x108] sm:$0xff]
  %v3473 = vld [vmem:[%s8 + $0x110] sm:$0xff]
  %v3474 = vld [vmem:[%s8 + $0x118] sm:$0xff]
  %v3475 = vld [vmem:[%s8 + $0x120] sm:$0xff]
  %v3476 = vld [vmem:[%s8 + $0x128] sm:$0xff]
  %v3477 = vld [vmem:[%s8 + $0x130] sm:$0xff]
  %v3478 = vld [vmem:[%s8 + $0x138] sm:$0xff]
  %v3479 = vld [vmem:[%s8 + $0x140] sm:$0xff]
  %v3480 = vld [vmem:[%s8 + $0x148] sm:$0xff]
  %v3481 = vld [vmem:[%s8 + $0x150] sm:$0xff]
  %v3482 = vld [vmem:[%s8 + $0x158] sm:$0xff]
  %v3483 = vld [vmem:[%s8 + $0x160] sm:$0xff]
  %v3484 = vld [vmem:[%s8 + $0x168] sm:$0xff]
  %v3485 = vld [vmem:[%s8 + $0x170] sm:$0xff]
  %v3486 = vld [vmem:[%s8 + $0x178] sm:$0xff]
  %v3487 = vld [vmem:[%s8 + $0x180] sm:$0xff]
  %v3488 = vld [vmem:[%s8 + $0x188] sm:$0xff]
  %v3489 = vld [vmem:[%s8 + $0x190] sm:$0xff]
  %v3490 = vld [vmem:[%s8 + $0x198] sm:$0xff]
  %v3491 = vld [vmem:[%s8 + $0x1a0] sm:$0xff]
  %v3492 = vld [vmem:[%s8 + $0x1a8] sm:$0xff]
  %v3493 = vld [vmem:[%s8 + $0x1b0] sm:$0xff]
  %v3494 = vld [vmem:[%s8 + $0x1b8] sm:$0xff]
  %v3495 = vld [vmem:[%s8 + $0x1c0] sm:$0xff]
  %v3496 = vld [vmem:[%s8 + $0x1c8] sm:$0xff]
  %v3497 = vld [vmem:[%s8 + $0x1d0] sm:$0xff]
  %v3498 = vld [vmem:[%s8 + $0x1d8] sm:$0xff]
  %v3499 = vld [vmem:[%s8 + $0x1e0] sm:$0xff]
  %v3500 = vld [vmem:[%s8 + $0x1e8] sm:$0xff]
  %v3501 = vld [vmem:[%s8 + $0x1f0] sm:$0xff]
  %v3502 = vld [vmem:[%s8 + $0x1f8] sm:$0xff]
  %v3503 = vld [vmem:[%s9] sm:$0xf]
  %v3505 = vlaneseq
  %v3506 = vshrl.u32 %v3505, 7
  %v3507 = vsub.s32 0, %v3506
  %v3508 = vrot.slane %v3503, %v3507
  %v3509 = vlaneseq
  %v3510 = vshrl.u32 %v3509, 7
  %v3511 = vsub.s32 1, %v3510
  %v3512 = vrot.slane %v3503, %v3511
  %v3513 = vlaneseq
  %v3514 = vshrl.u32 %v3513, 7
  %v3515 = vsub.s32 2, %v3514
  %v3516 = vrot.slane %v3503, %v3515
  %v3517 = vlaneseq
  %v3518 = vshrl.u32 %v3517, 7
  %v3519 = vsub.s32 3, %v3518
  %v3520 = vrot.slane %v3503, %v3519
  %v3526 = vunpack.c.l.b16 %v3438
  %v3527 = vunpack.c.h.b16 %v3438
  %v3528 = vpack.c.b16 %v3526, %v3526
  %v3529 = vpack.c.b16 %v3527, %v3527
  %v3596 = vunpack.c.l.b16 %v3439
  %v3597 = vunpack.c.h.b16 %v3439
  %v3598 = vunpack.c.l.b16 %v3440
  %v3599 = vunpack.c.h.b16 %v3440
  %v3600 = vunpack.c.l.b16 %v3441
  %v3601 = vunpack.c.h.b16 %v3441
  %v3602 = vunpack.c.l.b16 %v3442
  %v3603 = vunpack.c.h.b16 %v3442
  %v3604 = vunpack.c.l.b16 %v3443
  %v3605 = vunpack.c.h.b16 %v3443
  %v3606 = vunpack.c.l.b16 %v3444
  %v3607 = vunpack.c.h.b16 %v3444
  %v3608 = vunpack.c.l.b16 %v3445
  %v3609 = vunpack.c.h.b16 %v3445
  %v3610 = vunpack.c.l.b16 %v3446
  %v3611 = vunpack.c.h.b16 %v3446
  %v3612 = vunpack.c.l.b16 %v3447
  %v3613 = vunpack.c.h.b16 %v3447
  %v3614 = vunpack.c.l.b16 %v3448
  %v3615 = vunpack.c.h.b16 %v3448
  %v3616 = vunpack.c.l.b16 %v3449
  %v3617 = vunpack.c.h.b16 %v3449
  %v3618 = vunpack.c.l.b16 %v3450
  %v3619 = vunpack.c.h.b16 %v3450
  %v3620 = vunpack.c.l.b16 %v3451
  %v3621 = vunpack.c.h.b16 %v3451
  %v3622 = vunpack.c.l.b16 %v3452
  %v3623 = vunpack.c.h.b16 %v3452
  %v3624 = vunpack.c.l.b16 %v3453
  %v3625 = vunpack.c.h.b16 %v3453
  %v3626 = vunpack.c.l.b16 %v3454
  %v3627 = vunpack.c.h.b16 %v3454
  %v3628 = vunpack.c.l.b16 %v3455
  %v3629 = vunpack.c.h.b16 %v3455
  %v3630 = vunpack.c.l.b16 %v3456
  %v3631 = vunpack.c.h.b16 %v3456
  %v3632 = vunpack.c.l.b16 %v3457
  %v3633 = vunpack.c.h.b16 %v3457
  %v3634 = vunpack.c.l.b16 %v3458
  %v3635 = vunpack.c.h.b16 %v3458
  %v3636 = vunpack.c.l.b16 %v3459
  %v3637 = vunpack.c.h.b16 %v3459
  %v3638 = vunpack.c.l.b16 %v3460
  %v3639 = vunpack.c.h.b16 %v3460
  %v3640 = vunpack.c.l.b16 %v3461
  %v3641 = vunpack.c.h.b16 %v3461
  %v3642 = vunpack.c.l.b16 %v3462
  %v3643 = vunpack.c.h.b16 %v3462
  %v3644 = vunpack.c.l.b16 %v3463
  %v3645 = vunpack.c.h.b16 %v3463
  %v3646 = vunpack.c.l.b16 %v3464
  %v3647 = vunpack.c.h.b16 %v3464
  %v3648 = vunpack.c.l.b16 %v3465
  %v3649 = vunpack.c.h.b16 %v3465
  %v3650 = vunpack.c.l.b16 %v3466
  %v3651 = vunpack.c.h.b16 %v3466
  %v3652 = vunpack.c.l.b16 %v3467
  %v3653 = vunpack.c.h.b16 %v3467
  %v3654 = vunpack.c.l.b16 %v3468
  %v3655 = vunpack.c.h.b16 %v3468
  %v3656 = vunpack.c.l.b16 %v3469
  %v3657 = vunpack.c.h.b16 %v3469
  %v3658 = vunpack.c.l.b16 %v3470
  %v3659 = vunpack.c.h.b16 %v3470
  %v3660 = vunpack.c.l.b16 %v3471
  %v3661 = vunpack.c.h.b16 %v3471
  %v3662 = vunpack.c.l.b16 %v3472
  %v3663 = vunpack.c.h.b16 %v3472
  %v3664 = vunpack.c.l.b16 %v3473
  %v3665 = vunpack.c.h.b16 %v3473
  %v3666 = vunpack.c.l.b16 %v3474
  %v3667 = vunpack.c.h.b16 %v3474
  %v3668 = vunpack.c.l.b16 %v3475
  %v3669 = vunpack.c.h.b16 %v3475
  %v3670 = vunpack.c.l.b16 %v3476
  %v3671 = vunpack.c.h.b16 %v3476
  %v3672 = vunpack.c.l.b16 %v3477
  %v3673 = vunpack.c.h.b16 %v3477
  %v3674 = vunpack.c.l.b16 %v3478
  %v3675 = vunpack.c.h.b16 %v3478
  %v3676 = vunpack.c.l.b16 %v3479
  %v3677 = vunpack.c.h.b16 %v3479
  %v3678 = vunpack.c.l.b16 %v3480
  %v3679 = vunpack.c.h.b16 %v3480
  %v3680 = vunpack.c.l.b16 %v3481
  %v3681 = vunpack.c.h.b16 %v3481
  %v3682 = vunpack.c.l.b16 %v3482
  %v3683 = vunpack.c.h.b16 %v3482
  %v3684 = vunpack.c.l.b16 %v3483
  %v3685 = vunpack.c.h.b16 %v3483
  %v3686 = vunpack.c.l.b16 %v3484
  %v3687 = vunpack.c.h.b16 %v3484
  %v3688 = vunpack.c.l.b16 %v3485
  %v3689 = vunpack.c.h.b16 %v3485
  %v3690 = vunpack.c.l.b16 %v3486
  %v3691 = vunpack.c.h.b16 %v3486
  %v3692 = vunpack.c.l.b16 %v3487
  %v3693 = vunpack.c.h.b16 %v3487
  %v3694 = vunpack.c.l.b16 %v3488
  %v3695 = vunpack.c.h.b16 %v3488
  %v3696 = vunpack.c.l.b16 %v3489
  %v3697 = vunpack.c.h.b16 %v3489
  %v3698 = vunpack.c.l.b16 %v3490
  %v3699 = vunpack.c.h.b16 %v3490
  %v3700 = vunpack.c.l.b16 %v3491
  %v3701 = vunpack.c.h.b16 %v3491
  %v3702 = vunpack.c.l.b16 %v3492
  %v3703 = vunpack.c.h.b16 %v3492
  %v3704 = vunpack.c.l.b16 %v3493
  %v3705 = vunpack.c.h.b16 %v3493
  %v3706 = vunpack.c.l.b16 %v3494
  %v3707 = vunpack.c.h.b16 %v3494
  %v3708 = vunpack.c.l.b16 %v3495
  %v3709 = vunpack.c.h.b16 %v3495
  %v3710 = vunpack.c.l.b16 %v3496
  %v3711 = vunpack.c.h.b16 %v3496
  %v3712 = vunpack.c.l.b16 %v3497
  %v3713 = vunpack.c.h.b16 %v3497
  %v3714 = vunpack.c.l.b16 %v3498
  %v3715 = vunpack.c.h.b16 %v3498
  %v3716 = vunpack.c.l.b16 %v3499
  %v3717 = vunpack.c.h.b16 %v3499
  %v3718 = vunpack.c.l.b16 %v3500
  %v3719 = vunpack.c.h.b16 %v3500
  %v3720 = vunpack.c.l.b16 %v3501
  %v3721 = vunpack.c.h.b16 %v3501
  %v3722 = vunpack.c.l.b16 %v3502
  %v3723 = vunpack.c.h.b16 %v3502
  %v3724 = vpack.c.b16 %v3600, %v3596
  %v3725 = vpack.c.b16 %v3601, %v3597
  %v3726 = vpack.c.b16 %v3602, %v3598
  %v3727 = vpack.c.b16 %v3603, %v3599
  %v3728 = vpack.c.b16 %v3608, %v3604
  %v3729 = vpack.c.b16 %v3609, %v3605
  %v3730 = vpack.c.b16 %v3610, %v3606
  %v3731 = vpack.c.b16 %v3611, %v3607
  %v3732 = vpack.c.b16 %v3616, %v3612
  %v3733 = vpack.c.b16 %v3617, %v3613
  %v3734 = vpack.c.b16 %v3618, %v3614
  %v3735 = vpack.c.b16 %v3619, %v3615
  %v3736 = vpack.c.b16 %v3624, %v3620
  %v3737 = vpack.c.b16 %v3625, %v3621
  %v3738 = vpack.c.b16 %v3626, %v3622
  %v3739 = vpack.c.b16 %v3627, %v3623
  %v3740 = vpack.c.b16 %v3632, %v3628
  %v3741 = vpack.c.b16 %v3633, %v3629
  %v3742 = vpack.c.b16 %v3634, %v3630
  %v3743 = vpack.c.b16 %v3635, %v3631
  %v3744 = vpack.c.b16 %v3640, %v3636
  %v3745 = vpack.c.b16 %v3641, %v3637
  %v3746 = vpack.c.b16 %v3642, %v3638
  %v3747 = vpack.c.b16 %v3643, %v3639
  %v3748 = vpack.c.b16 %v3648, %v3644
  %v3749 = vpack.c.b16 %v3649, %v3645
  %v3750 = vpack.c.b16 %v3650, %v3646
  %v3751 = vpack.c.b16 %v3651, %v3647
  %v3752 = vpack.c.b16 %v3656, %v3652
  %v3753 = vpack.c.b16 %v3657, %v3653
  %v3754 = vpack.c.b16 %v3658, %v3654
  %v3755 = vpack.c.b16 %v3659, %v3655
  %v3756 = vpack.c.b16 %v3664, %v3660
  %v3757 = vpack.c.b16 %v3665, %v3661
  %v3758 = vpack.c.b16 %v3666, %v3662
  %v3759 = vpack.c.b16 %v3667, %v3663
  %v3760 = vpack.c.b16 %v3672, %v3668
  %v3761 = vpack.c.b16 %v3673, %v3669
  %v3762 = vpack.c.b16 %v3674, %v3670
  %v3763 = vpack.c.b16 %v3675, %v3671
  %v3764 = vpack.c.b16 %v3680, %v3676
  %v3765 = vpack.c.b16 %v3681, %v3677
  %v3766 = vpack.c.b16 %v3682, %v3678
  %v3767 = vpack.c.b16 %v3683, %v3679
  %v3768 = vpack.c.b16 %v3688, %v3684
  %v3769 = vpack.c.b16 %v3689, %v3685
  %v3770 = vpack.c.b16 %v3690, %v3686
  %v3771 = vpack.c.b16 %v3691, %v3687
  %v3772 = vpack.c.b16 %v3696, %v3692
  %v3773 = vpack.c.b16 %v3697, %v3693
  %v3774 = vpack.c.b16 %v3698, %v3694
  %v3775 = vpack.c.b16 %v3699, %v3695
  %v3776 = vpack.c.b16 %v3704, %v3700
  %v3777 = vpack.c.b16 %v3705, %v3701
  %v3778 = vpack.c.b16 %v3706, %v3702
  %v3779 = vpack.c.b16 %v3707, %v3703
  %v3780 = vpack.c.b16 %v3712, %v3708
  %v3781 = vpack.c.b16 %v3713, %v3709
  %v3782 = vpack.c.b16 %v3714, %v3710
  %v3783 = vpack.c.b16 %v3715, %v3711
  %v3784 = vpack.c.b16 %v3720, %v3716
  %v3785 = vpack.c.b16 %v3721, %v3717
  %v3786 = vpack.c.b16 %v3722, %v3718
  %v3787 = vpack.c.b16 %v3723, %v3719
  %3852 = vmatprep.subr.bf16.mxu0 %v3725
  %3853 = vmatpush1.bf16.msra.mxu0 %v3724
  %3854 = vmatprep.subr.bf16.mxu0 %v3729
  %3855 = vmatpush1.bf16.msra.mxu0 %v3728
  %3856 = vmatprep.subr.bf16.mxu0 %v3733
  %3857 = vmatpush1.bf16.msra.mxu0 %v3732
  %3858 = vmatprep.subr.bf16.mxu0 %v3737
  %3859 = vmatpush1.bf16.msra.mxu0 %v3736
  %3860 = vmatprep.subr.bf16.mxu0 %v3741
  %3861 = vmatpush1.bf16.msra.mxu0 %v3740
  %3862 = vmatprep.subr.bf16.mxu0 %v3745
  %3863 = vmatpush1.bf16.msra.mxu0 %v3744
  %3864 = vmatprep.subr.bf16.mxu0 %v3749
  %3865 = vmatpush1.bf16.msra.mxu0 %v3748
  %3866 = vmatprep.subr.bf16.mxu0 %v3753
  %3867 = vmatpush1.bf16.msra.mxu0 %v3752
  %3868 = vmatprep.subr.bf16.mxu0 %v3757
  %3869 = vmatpush1.bf16.msra.mxu0 %v3756
  %3870 = vmatprep.subr.bf16.mxu0 %v3761
  %3871 = vmatpush1.bf16.msra.mxu0 %v3760
  %3872 = vmatprep.subr.bf16.mxu0 %v3765
  %3873 = vmatpush1.bf16.msra.mxu0 %v3764
  %3874 = vmatprep.subr.bf16.mxu0 %v3769
  %3875 = vmatpush1.bf16.msra.mxu0 %v3768
  %3876 = vmatprep.subr.bf16.mxu0 %v3773
  %3877 = vmatpush1.bf16.msra.mxu0 %v3772
  %3878 = vmatprep.subr.bf16.mxu0 %v3777
  %3879 = vmatpush1.bf16.msra.mxu0 %v3776
  %3880 = vmatprep.subr.bf16.mxu0 %v3781
  %3881 = vmatpush1.bf16.msra.mxu0 %v3780
  %3882 = vmatprep.subr.bf16.mxu0 %v3785
  %3883 = vmatpush1.bf16.msra.mxu0 %v3784
  %3884 = vmatprep.mubr.bf16.mxu0 %v3529
  %3885 = vmatmul.mubr.bf16.gmra.mrb[0].mxu0 %v3528
  %v3886 = vpop.f32.mrb[0].mxu0
  %v3887 = vadd.f32 %v3508, %v3886
  %v3888 = vpop.f32.mrb[0].mxu0
  %v3889 = vadd.f32 %v3512, %v3888
  %v3890 = vpop.f32.mrb[0].mxu0
  %v3891 = vpop.f32.mrb[0].mxu0
  %3892 = vdwg.mxu0
  %3893 = vmatprep.subr.bf16.mxu0 %v3727
  %3894 = vmatpush1.bf16.msra.mxu0 %v3726
  %3895 = vmatprep.subr.bf16.mxu0 %v3731
  %3896 = vmatpush1.bf16.msra.mxu0 %v3730
  %3897 = vmatprep.subr.bf16.mxu0 %v3735
  %3898 = vmatpush1.bf16.msra.mxu0 %v3734
  %3899 = vmatprep.subr.bf16.mxu0 %v3739
  %3900 = vmatpush1.bf16.msra.mxu0 %v3738
  %3901 = vmatprep.subr.bf16.mxu0 %v3743
  %3902 = vmatpush1.bf16.msra.mxu0 %v3742
  %3903 = vmatprep.subr.bf16.mxu0 %v3747
  %3904 = vmatpush1.bf16.msra.mxu0 %v3746
  %3905 = vmatprep.subr.bf16.mxu0 %v3751
  %3906 = vmatpush1.bf16.msra.mxu0 %v3750
  %3907 = vmatprep.subr.bf16.mxu0 %v3755
  %3908 = vmatpush1.bf16.msra.mxu0 %v3754
  %3909 = vmatprep.subr.bf16.mxu0 %v3759
  %3910 = vmatpush1.bf16.msra.mxu0 %v3758
  %3911 = vmatprep.subr.bf16.mxu0 %v3763
  %3912 = vmatpush1.bf16.msra.mxu0 %v3762
  %3913 = vmatprep.subr.bf16.mxu0 %v3767
  %3914 = vmatpush1.bf16.msra.mxu0 %v3766
  %3915 = vmatprep.subr.bf16.mxu0 %v3771
  %3916 = vmatpush1.bf16.msra.mxu0 %v3770
  %3917 = vmatprep.subr.bf16.mxu0 %v3775
  %3918 = vmatpush1.bf16.msra.mxu0 %v3774
  %3919 = vmatprep.subr.bf16.mxu0 %v3779
  %3920 = vmatpush1.bf16.msra.mxu0 %v3778
  %3921 = vmatprep.subr.bf16.mxu0 %v3783
  %3922 = vmatpush1.bf16.msra.mxu0 %v3782
  %3923 = vmatprep.subr.bf16.mxu0 %v3787
  %3924 = vmatpush1.bf16.msra.mxu0 %v3786
  %3925 = vmatprep.mubr.bf16.mxu0 %v3529
  %3926 = vmatmul.mubr.bf16.gmra.mrb[0].mxu0 %v3528
  %v3927 = vpop.f32.mrb[0].mxu0
  %v3928 = vadd.f32 %v3516, %v3927
  %v3929 = vpop.f32.mrb[0].mxu0
  %v3930 = vadd.f32 %v3520, %v3929
  %v3931 = vpop.f32.mrb[0].mxu0
  %v3932 = vpop.f32.mrb[0].mxu0
  %3933 = vdwg.mxu0
  %v3934 = vmax.f32 %v3887, 0.0
  %v3935 = vmax.f32 %v3889, 0.0
  %v3936 = vmax.f32 %v3928, 0.0
  %v3937 = vmax.f32 %v3930, 0.0
  %v3938 = vpack.c.bf16 %v3934, %v3934
  %v3939 = vpack.c.bf16 %v3935, %v3935
  %v3940 = vpack.c.bf16 %v3936, %v3936
  %v3941 = vpack.c.bf16 %v3937, %v3937
  %v3942 = vld [vmem:[%s10] sm:$0xff]
  %v3943 = vld [vmem:[%s10 + $0x8] sm:$0xff]
  %v3944 = vld [vmem:[%s10 + $0x10] sm:$0xf]
  %v3945 = vld [vmem:[%s10 + $0x14] sm:$0xff]
  %v3946 = vld [vmem:[%s10 + $0x1c] sm:$0xff]
  %v3947 = vld [vmem:[%s10 + $0x24] sm:$0xf]
  %v3948 = vld [vmem:[%s10 + $0x28] sm:$0xff]
  %v3949 = vld [vmem:[%s10 + $0x30] sm:$0xff]
  %v3950 = vld [vmem:[%s10 + $0x38] sm:$0xf]
  %v3951 = vld [vmem:[%s10 + $0x3c] sm:$0xff]
  %v3952 = vld [vmem:[%s10 + $0x44] sm:$0xff]
  %v3953 = vld [vmem:[%s10 + $0x4c] sm:$0xf]
  %v3954 = vld [vmem:[%s10 + $0x50] sm:$0xff]
  %v3955 = vld [vmem:[%s10 + $0x58] sm:$0xff]
  %v3956 = vld [vmem:[%s10 + $0x60] sm:$0xf]
  %v3957 = vld [vmem:[%s10 + $0x64] sm:$0xff]
  %v3958 = vld [vmem:[%s10 + $0x6c] sm:$0xff]
  %v3959 = vld [vmem:[%s10 + $0x74] sm:$0xf]
  %v3960 = vld [vmem:[%s10 + $0x78] sm:$0xff]
  %v3961 = vld [vmem:[%s10 + $0x80] sm:$0xff]
  %v3962 = vld [vmem:[%s10 + $0x88] sm:$0xf]
  %v3963 = vld [vmem:[%s10 + $0x8c] sm:$0xff]
  %v3964 = vld [vmem:[%s10 + $0x94] sm:$0xff]
  %v3965 = vld [vmem:[%s10 + $0x9c] sm:$0xf]
  %v3966 = vld [vmem:[%s10 + $0xa0] sm:$0xff]
  %v3967 = vld [vmem:[%s10 + $0xa8] sm:$0xff]
  %v3968 = vld [vmem:[%s10 + $0xb0] sm:$0xf]
  %v3969 = vld [vmem:[%s10 + $0xb4] sm:$0xff]
  %v3970 = vld [vmem:[%s10 + $0xbc] sm:$0xff]
  %v3971 = vld [vmem:[%s10 + $0xc4] sm:$0xf]
  %v3972 = vld [vmem:[%s10 + $0xc8] sm:$0xff]
  %v3973 = vld [vmem:[%s10 + $0xd0] sm:$0xff]
  %v3974 = vld [vmem:[%s10 + $0xd8] sm:$0xf]
  %v3975 = vld [vmem:[%s10 + $0xdc] sm:$0xff]
  %v3976 = vld [vmem:[%s10 + $0xe4] sm:$0xff]
  %v3977 = vld [vmem:[%s10 + $0xec] sm:$0xf]
  %v3978 = vld [vmem:[%s10 + $0xf0] sm:$0xff]
  %v3979 = vld [vmem:[%s10 + $0xf8] sm:$0xff]
  %v3980 = vld [vmem:[%s10 + $0x100] sm:$0xf]
  %v3981 = vld [vmem:[%s10 + $0x104] sm:$0xff]
  %v3982 = vld [vmem:[%s10 + $0x10c] sm:$0xff]
  %v3983 = vld [vmem:[%s10 + $0x114] sm:$0xf]
  %v3984 = vld [vmem:[%s10 + $0x118] sm:$0xff]
  %v3985 = vld [vmem:[%s10 + $0x120] sm:$0xff]
  %v3986 = vld [vmem:[%s10 + $0x128] sm:$0xf]
  %v3987 = vld [vmem:[%s10 + $0x12c] sm:$0xff]
  %v3988 = vld [vmem:[%s10 + $0x134] sm:$0xff]
  %v3989 = vld [vmem:[%s10 + $0x13c] sm:$0xf]
  %v3990 = vld [vmem:[%s10 + $0x140] sm:$0xff]
  %v3991 = vld [vmem:[%s10 + $0x148] sm:$0xff]
  %v3992 = vld [vmem:[%s10 + $0x150] sm:$0xf]
  %v3993 = vld [vmem:[%s10 + $0x154] sm:$0xff]
  %v3994 = vld [vmem:[%s10 + $0x15c] sm:$0xff]
  %v3995 = vld [vmem:[%s10 + $0x164] sm:$0xf]
  %v3996 = vld [vmem:[%s10 + $0x168] sm:$0xff]
  %v3997 = vld [vmem:[%s10 + $0x170] sm:$0xff]
  %v3998 = vld [vmem:[%s10 + $0x178] sm:$0xf]
  %v3999 = vld [vmem:[%s10 + $0x17c] sm:$0xff]
  %v4000 = vld [vmem:[%s10 + $0x184] sm:$0xff]
  %v4001 = vld [vmem:[%s10 + $0x18c] sm:$0xf]
  %v4002 = vld [vmem:[%s10 + $0x190] sm:$0xff]
  %v4003 = vld [vmem:[%s10 + $0x198] sm:$0xff]
  %v4004 = vld [vmem:[%s10 + $0x1a0] sm:$0xf]
  %v4005 = vld [vmem:[%s10 + $0x1a4] sm:$0xff]
  %v4006 = vld [vmem:[%s10 + $0x1ac] sm:$0xff]
  %v4007 = vld [vmem:[%s10 + $0x1b4] sm:$0xf]
  %v4008 = vld [vmem:[%s10 + $0x1b8] sm:$0xff]
  %v4009 = vld [vmem:[%s10 + $0x1c0] sm:$0xff]
  %v4010 = vld [vmem:[%s10 + $0x1c8] sm:$0xf]
  %v4011 = vld [vmem:[%s10 + $0x1cc] sm:$0xff]
  %v4012 = vld [vmem:[%s10 + $0x1d4] sm:$0xff]
  %v4013 = vld [vmem:[%s10 + $0x1dc] sm:$0xf]
  %v4014 = vld [vmem:[%s10 + $0x1e0] sm:$0xff]
  %v4015 = vld [vmem:[%s10 + $0x1e8] sm:$0xff]
  %v4016 = vld [vmem:[%s10 + $0x1f0] sm:$0xf]
  %v4017 = vld [vmem:[%s10 + $0x1f4] sm:$0xff]
  %v4018 = vld [vmem:[%s10 + $0x1fc] sm:$0xff]
  %v4019 = vld [vmem:[%s10 + $0x204] sm:$0xf]
  %v4020 = vld [vmem:[%s10 + $0x208] sm:$0xff]
  %v4021 = vld [vmem:[%s10 + $0x210] sm:$0xff]
  %v4022 = vld [vmem:[%s10 + $0x218] sm:$0xf]
  %v4023 = vld [vmem:[%s10 + $0x21c] sm:$0xff]
  %v4024 = vld [vmem:[%s10 + $0x224] sm:$0xff]
  %v4025 = vld [vmem:[%s10 + $0x22c] sm:$0xf]
  %v4026 = vld [vmem:[%s10 + $0x230] sm:$0xff]
  %v4027 = vld [vmem:[%s10 + $0x238] sm:$0xff]
  %v4028 = vld [vmem:[%s10 + $0x240] sm:$0xf]
  %v4029 = vld [vmem:[%s10 + $0x244] sm:$0xff]
  %v4030 = vld [vmem:[%s10 + $0x24c] sm:$0xff]
  %v4031 = vld [vmem:[%s10 + $0x254] sm:$0xf]
  %v4032 = vld [vmem:[%s10 + $0x258] sm:$0xff]
  %v4033 = vld [vmem:[%s10 + $0x260] sm:$0xff]
  %v4034 = vld [vmem:[%s10 + $0x268] sm:$0xf]
  %v4035 = vld [vmem:[%s10 + $0x26c] sm:$0xff]
  %v4036 = vld [vmem:[%s10 + $0x274] sm:$0xff]
  %v4037 = vld [vmem:[%s10 + $0x27c] sm:$0xf]
  %v4038 = vld [vmem:[%s10 + $0x280] sm:$0xff]
  %v4039 = vld [vmem:[%s10 + $0x288] sm:$0xff]
  %v4040 = vld [vmem:[%s10 + $0x290] sm:$0xf]
  %v4041 = vld [vmem:[%s10 + $0x294] sm:$0xff]
  %v4042 = vld [vmem:[%s10 + $0x29c] sm:$0xff]
  %v4043 = vld [vmem:[%s10 + $0x2a4] sm:$0xf]
  %v4044 = vld [vmem:[%s10 + $0x2a8] sm:$0xff]
  %v4045 = vld [vmem:[%s10 + $0x2b0] sm:$0xff]
  %v4046 = vld [vmem:[%s10 + $0x2b8] sm:$0xf]
  %v4047 = vld [vmem:[%s10 + $0x2bc] sm:$0xff]
  %v4048 = vld [vmem:[%s10 + $0x2c4] sm:$0xff]
  %v4049 = vld [vmem:[%s10 + $0x2cc] sm:$0xf]
  %v4050 = vld [vmem:[%s10 + $0x2d0] sm:$0xff]
  %v4051 = vld [vmem:[%s10 + $0x2d8] sm:$0xff]
  %v4052 = vld [vmem:[%s10 + $0x2e0] sm:$0xf]
  %v4053 = vld [vmem:[%s10 + $0x2e4] sm:$0xff]
  %v4054 = vld [vmem:[%s10 + $0x2ec] sm:$0xff]
  %v4055 = vld [vmem:[%s10 + $0x2f4] sm:$0xf]
  %v4056 = vld [vmem:[%s10 + $0x2f8] sm:$0xff]
  %v4057 = vld [vmem:[%s10 + $0x300] sm:$0xff]
  %v4058 = vld [vmem:[%s10 + $0x308] sm:$0xf]
  %v4059 = vld [vmem:[%s10 + $0x30c] sm:$0xff]
  %v4060 = vld [vmem:[%s10 + $0x314] sm:$0xff]
  %v4061 = vld [vmem:[%s10 + $0x31c] sm:$0xf]
  %v4062 = vld [vmem:[%s10 + $0x320] sm:$0xff]
  %v4063 = vld [vmem:[%s10 + $0x328] sm:$0xff]
  %v4064 = vld [vmem:[%s10 + $0x330] sm:$0xf]
  %v4065 = vld [vmem:[%s10 + $0x334] sm:$0xff]
  %v4066 = vld [vmem:[%s10 + $0x33c] sm:$0xff]
  %v4067 = vld [vmem:[%s10 + $0x344] sm:$0xf]
  %v4068 = vld [vmem:[%s10 + $0x348] sm:$0xff]
  %v4069 = vld [vmem:[%s10 + $0x350] sm:$0xff]
  %v4070 = vld [vmem:[%s10 + $0x358] sm:$0xf]
  %v4071 = vld [vmem:[%s10 + $0x35c] sm:$0xff]
  %v4072 = vld [vmem:[%s10 + $0x364] sm:$0xff]
  %v4073 = vld [vmem:[%s10 + $0x36c] sm:$0xf]
  %v4074 = vld [vmem:[%s10 + $0x370] sm:$0xff]
  %v4075 = vld [vmem:[%s10 + $0x378] sm:$0xff]
  %v4076 = vld [vmem:[%s10 + $0x380] sm:$0xf]
  %v4077 = vld [vmem:[%s10 + $0x384] sm:$0xff]
  %v4078 = vld [vmem:[%s10 + $0x38c] sm:$0xff]
  %v4079 = vld [vmem:[%s10 + $0x394] sm:$0xf]
  %v4080 = vld [vmem:[%s10 + $0x398] sm:$0xff]
  %v4081 = vld [vmem:[%s10 + $0x3a0] sm:$0xff]
  %v4082 = vld [vmem:[%s10 + $0x3a8] sm:$0xf]
  %v4083 = vld [vmem:[%s10 + $0x3ac] sm:$0xff]
  %v4084 = vld [vmem:[%s10 + $0x3b4] sm:$0xff]
  %v4085 = vld [vmem:[%s10 + $0x3bc] sm:$0xf]
  %v4086 = vld [vmem:[%s10 + $0x3c0] sm:$0xff]
  %v4087 = vld [vmem:[%s10 + $0x3c8] sm:$0xff]
  %v4088 = vld [vmem:[%s10 + $0x3d0] sm:$0xf]
  %v4089 = vld [vmem:[%s10 + $0x3d4] sm:$0xff]
  %v4090 = vld [vmem:[%s10 + $0x3dc] sm:$0xff]
  %v4091 = vld [vmem:[%s10 + $0x3e4] sm:$0xf]
  %v4092 = vld [vmem:[%s10 + $0x3e8] sm:$0xff]
  %v4093 = vld [vmem:[%s10 + $0x3f0] sm:$0xff]
  %v4094 = vld [vmem:[%s10 + $0x3f8] sm:$0xf]
  %v4095 = vld [vmem:[%s10 + $0x3fc] sm:$0xff]
  %v4096 = vld [vmem:[%s10 + $0x404] sm:$0xff]
  %v4097 = vld [vmem:[%s10 + $0x40c] sm:$0xf]
  %v4098 = vld [vmem:[%s10 + $0x410] sm:$0xff]
  %v4099 = vld [vmem:[%s10 + $0x418] sm:$0xff]
  %v4100 = vld [vmem:[%s10 + $0x420] sm:$0xf]
  %v4101 = vld [vmem:[%s10 + $0x424] sm:$0xff]
  %v4102 = vld [vmem:[%s10 + $0x42c] sm:$0xff]
  %v4103 = vld [vmem:[%s10 + $0x434] sm:$0xf]
  %v4104 = vld [vmem:[%s10 + $0x438] sm:$0xff]
  %v4105 = vld [vmem:[%s10 + $0x440] sm:$0xff]
  %v4106 = vld [vmem:[%s10 + $0x448] sm:$0xf]
  %v4107 = vld [vmem:[%s10 + $0x44c] sm:$0xff]
  %v4108 = vld [vmem:[%s10 + $0x454] sm:$0xff]
  %v4109 = vld [vmem:[%s10 + $0x45c] sm:$0xf]
  %v4110 = vld [vmem:[%s10 + $0x460] sm:$0xff]
  %v4111 = vld [vmem:[%s10 + $0x468] sm:$0xff]
  %v4112 = vld [vmem:[%s10 + $0x470] sm:$0xf]
  %v4113 = vld [vmem:[%s10 + $0x474] sm:$0xff]
  %v4114 = vld [vmem:[%s10 + $0x47c] sm:$0xff]
  %v4115 = vld [vmem:[%s10 + $0x484] sm:$0xf]
  %v4116 = vld [vmem:[%s10 + $0x488] sm:$0xff]
  %v4117 = vld [vmem:[%s10 + $0x490] sm:$0xff]
  %v4118 = vld [vmem:[%s10 + $0x498] sm:$0xf]
  %v4119 = vld [vmem:[%s10 + $0x49c] sm:$0xff]
  %v4120 = vld [vmem:[%s10 + $0x4a4] sm:$0xff]
  %v4121 = vld [vmem:[%s10 + $0x4ac] sm:$0xf]
  %v4122 = vld [vmem:[%s10 + $0x4b0] sm:$0xff]
  %v4123 = vld [vmem:[%s10 + $0x4b8] sm:$0xff]
  %v4124 = vld [vmem:[%s10 + $0x4c0] sm:$0xf]
  %v4125 = vld [vmem:[%s10 + $0x4c4] sm:$0xff]
  %v4126 = vld [vmem:[%s10 + $0x4cc] sm:$0xff]
  %v4127 = vld [vmem:[%s10 + $0x4d4] sm:$0xf]
  %v4128 = vld [vmem:[%s10 + $0x4d8] sm:$0xff]
  %v4129 = vld [vmem:[%s10 + $0x4e0] sm:$0xff]
  %v4130 = vld [vmem:[%s10 + $0x4e8] sm:$0xf]
  %v4131 = vld [vmem:[%s10 + $0x4ec] sm:$0xff]
  %v4132 = vld [vmem:[%s10 + $0x4f4] sm:$0xff]
  %v4133 = vld [vmem:[%s10 + $0x4fc] sm:$0xf]
  %v4134 = vld [vmem:[%s11] sm:$0x1f]
  %v4136 = vlaneseq
  %v4137 = vshrl.u32 %v4136, 7
  %v4138 = vsub.s32 0, %v4137
  %v4139 = vrot.slane %v4134, %v4138
  %v4140 = vlaneseq
  %v4141 = vshrl.u32 %v4140, 7
  %v4142 = vsub.s32 1, %v4141
  %v4143 = vrot.slane %v4134, %v4142
  %v4144 = vlaneseq
  %v4145 = vshrl.u32 %v4144, 7
  %v4146 = vsub.s32 2, %v4145
  %v4147 = vrot.slane %v4134, %v4146
  %v4148 = vlaneseq
  %v4149 = vshrl.u32 %v4148, 7
  %v4150 = vsub.s32 3, %v4149
  %v4151 = vrot.slane %v4134, %v4150
  %v4152 = vlaneseq
  %v4153 = vshrl.u32 %v4152, 7
  %v4154 = vsub.s32 4, %v4153
  %v4155 = vrot.slane %v4134, %v4154
  %v4353 = vunpack.c.l.b16 %v3942
  %v4354 = vunpack.c.h.b16 %v3942
  %v4355 = vunpack.c.l.b16 %v3943
  %v4356 = vunpack.c.h.b16 %v3943
  %v4357 = vunpack.c.l.b16 %v3944
  %v4358 = vunpack.c.l.b16 %v3945
  %v4359 = vunpack.c.h.b16 %v3945
  %v4360 = vunpack.c.l.b16 %v3946
  %v4361 = vunpack.c.h.b16 %v3946
  %v4362 = vunpack.c.l.b16 %v3947
  %v4363 = vunpack.c.l.b16 %v3948
  %v4364 = vunpack.c.h.b16 %v3948
  %v4365 = vunpack.c.l.b16 %v3949
  %v4366 = vunpack.c.h.b16 %v3949
  %v4367 = vunpack.c.l.b16 %v3950
  %v4368 = vunpack.c.l.b16 %v3951
  %v4369 = vunpack.c.h.b16 %v3951
  %v4370 = vunpack.c.l.b16 %v3952
  %v4371 = vunpack.c.h.b16 %v3952
  %v4372 = vunpack.c.l.b16 %v3953
  %v4373 = vunpack.c.l.b16 %v3954
  %v4374 = vunpack.c.h.b16 %v3954
  %v4375 = vunpack.c.l.b16 %v3955
  %v4376 = vunpack.c.h.b16 %v3955
  %v4377 = vunpack.c.l.b16 %v3956
  %v4378 = vunpack.c.l.b16 %v3957
  %v4379 = vunpack.c.h.b16 %v3957
  %v4380 = vunpack.c.l.b16 %v3958
  %v4381 = vunpack.c.h.b16 %v3958
  %v4382 = vunpack.c.l.b16 %v3959
  %v4383 = vunpack.c.l.b16 %v3960
  %v4384 = vunpack.c.h.b16 %v3960
  %v4385 = vunpack.c.l.b16 %v3961
  %v4386 = vunpack.c.h.b16 %v3961
  %v4387 = vunpack.c.l.b16 %v3962
  %v4388 = vunpack.c.l.b16 %v3963
  %v4389 = vunpack.c.h.b16 %v3963
  %v4390 = vunpack.c.l.b16 %v3964
  %v4391 = vunpack.c.h.b16 %v3964
  %v4392 = vunpack.c.l.b16 %v3965
  %v4393 = vunpack.c.l.b16 %v3966
  %v4394 = vunpack.c.h.b16 %v3966
  %v4395 = vunpack.c.l.b16 %v3967
  %v4396 = vunpack.c.h.b16 %v3967
  %v4397 = vunpack.c.l.b16 %v3968
  %v4398 = vunpack.c.l.b16 %v3969
  %v4399 = vunpack.c.h.b16 %v3969
  %v4400 = vunpack.c.l.b16 %v3970
  %v4401 = vunpack.c.h.b16 %v3970
  %v4402 = vunpack.c.l.b16 %v3971
  %v4403 = vunpack.c.l.b16 %v3972
  %v4404 = vunpack.c.h.b16 %v3972
  %v4405 = vunpack.c.l.b16 %v3973
  %v4406 = vunpack.c.h.b16 %v3973
  %v4407 = vunpack.c.l.b16 %v3974
  %v4408 = vunpack.c.l.b16 %v3975
  %v4409 = vunpack.c.h.b16 %v3975
  %v4410 = vunpack.c.l.b16 %v3976
  %v4411 = vunpack.c.h.b16 %v3976
  %v4412 = vunpack.c.l.b16 %v3977
  %v4413 = vunpack.c.l.b16 %v3978
  %v4414 = vunpack.c.h.b16 %v3978
  %v4415 = vunpack.c.l.b16 %v3979
  %v4416 = vunpack.c.h.b16 %v3979
  %v4417 = vunpack.c.l.b16 %v3980
  %v4418 = vunpack.c.l.b16 %v3981
  %v4419 = vunpack.c.h.b16 %v3981
  %v4420 = vunpack.c.l.b16 %v3982
  %v4421 = vunpack.c.h.b16 %v3982
  %v4422 = vunpack.c.l.b16 %v3983
  %v4423 = vunpack.c.l.b16 %v3984
  %v4424 = vunpack.c.h.b16 %v3984
  %v4425 = vunpack.c.l.b16 %v3985
  %v4426 = vunpack.c.h.b16 %v3985
  %v4427 = vunpack.c.l.b16 %v3986
  %v4428 = vunpack.c.l.b16 %v3987
  %v4429 = vunpack.c.h.b16 %v3987
  %v4430 = vunpack.c.l.b16 %v3988
  %v4431 = vunpack.c.h.b16 %v3988
  %v4432 = vunpack.c.l.b16 %v3989
  %v4433 = vunpack.c.l.b16 %v3990
  %v4434 = vunpack.c.h.b16 %v3990
  %v4435 = vunpack.c.l.b16 %v3991
  %v4436 = vunpack.c.h.b16 %v3991
  %v4437 = vunpack.c.l.b16 %v3992
  %v4438 = vunpack.c.l.b16 %v3993
  %v4439 = vunpack.c.h.b16 %v3993
  %v4440 = vunpack.c.l.b16 %v3994
  %v4441 = vunpack.c.h.b16 %v3994
  %v4442 = vunpack.c.l.b16 %v3995
  %v4443 = vunpack.c.l.b16 %v3996
  %v4444 = vunpack.c.h.b16 %v3996
  %v4445 = vunpack.c.l.b16 %v3997
  %v4446 = vunpack.c.h.b16 %v3997
  %v4447 = vunpack.c.l.b16 %v3998
  %v4448 = vunpack.c.l.b16 %v3999
  %v4449 = vunpack.c.h.b16 %v3999
  %v4450 = vunpack.c.l.b16 %v4000
  %v4451 = vunpack.c.h.b16 %v4000
  %v4452 = vunpack.c.l.b16 %v4001
  %v4453 = vunpack.c.l.b16 %v4002
  %v4454 = vunpack.c.h.b16 %v4002
  %v4455 = vunpack.c.l.b16 %v4003
  %v4456 = vunpack.c.h.b16 %v4003
  %v4457 = vunpack.c.l.b16 %v4004
  %v4458 = vunpack.c.l.b16 %v4005
  %v4459 = vunpack.c.h.b16 %v4005
  %v4460 = vunpack.c.l.b16 %v4006
  %v4461 = vunpack.c.h.b16 %v4006
  %v4462 = vunpack.c.l.b16 %v4007
  %v4463 = vunpack.c.l.b16 %v4008
  %v4464 = vunpack.c.h.b16 %v4008
  %v4465 = vunpack.c.l.b16 %v4009
  %v4466 = vunpack.c.h.b16 %v4009
  %v4467 = vunpack.c.l.b16 %v4010
  %v4468 = vunpack.c.l.b16 %v4011
  %v4469 = vunpack.c.h.b16 %v4011
  %v4470 = vunpack.c.l.b16 %v4012
  %v4471 = vunpack.c.h.b16 %v4012
  %v4472 = vunpack.c.l.b16 %v4013
  %v4473 = vunpack.c.l.b16 %v4014
  %v4474 = vunpack.c.h.b16 %v4014
  %v4475 = vunpack.c.l.b16 %v4015
  %v4476 = vunpack.c.h.b16 %v4015
  %v4477 = vunpack.c.l.b16 %v4016
  %v4478 = vunpack.c.l.b16 %v4017
  %v4479 = vunpack.c.h.b16 %v4017
  %v4480 = vunpack.c.l.b16 %v4018
  %v4481 = vunpack.c.h.b16 %v4018
  %v4482 = vunpack.c.l.b16 %v4019
  %v4483 = vunpack.c.l.b16 %v4020
  %v4484 = vunpack.c.h.b16 %v4020
  %v4485 = vunpack.c.l.b16 %v4021
  %v4486 = vunpack.c.h.b16 %v4021
  %v4487 = vunpack.c.l.b16 %v4022
  %v4488 = vunpack.c.l.b16 %v4023
  %v4489 = vunpack.c.h.b16 %v4023
  %v4490 = vunpack.c.l.b16 %v4024
  %v4491 = vunpack.c.h.b16 %v4024
  %v4492 = vunpack.c.l.b16 %v4025
  %v4493 = vunpack.c.l.b16 %v4026
  %v4494 = vunpack.c.h.b16 %v4026
  %v4495 = vunpack.c.l.b16 %v4027
  %v4496 = vunpack.c.h.b16 %v4027
  %v4497 = vunpack.c.l.b16 %v4028
  %v4498 = vunpack.c.l.b16 %v4029
  %v4499 = vunpack.c.h.b16 %v4029
  %v4500 = vunpack.c.l.b16 %v4030
  %v4501 = vunpack.c.h.b16 %v4030
  %v4502 = vunpack.c.l.b16 %v4031
  %v4503 = vunpack.c.l.b16 %v4032
  %v4504 = vunpack.c.h.b16 %v4032
  %v4505 = vunpack.c.l.b16 %v4033
  %v4506 = vunpack.c.h.b16 %v4033
  %v4507 = vunpack.c.l.b16 %v4034
  %v4508 = vunpack.c.l.b16 %v4035
  %v4509 = vunpack.c.h.b16 %v4035
  %v4510 = vunpack.c.l.b16 %v4036
  %v4511 = vunpack.c.h.b16 %v4036
  %v4512 = vunpack.c.l.b16 %v4037
  %v4513 = vunpack.c.l.b16 %v4038
  %v4514 = vunpack.c.h.b16 %v4038
  %v4515 = vunpack.c.l.b16 %v4039
  %v4516 = vunpack.c.h.b16 %v4039
  %v4517 = vunpack.c.l.b16 %v4040
  %v4518 = vunpack.c.l.b16 %v4041
  %v4519 = vunpack.c.h.b16 %v4041
  %v4520 = vunpack.c.l.b16 %v4042
  %v4521 = vunpack.c.h.b16 %v4042
  %v4522 = vunpack.c.l.b16 %v4043
  %v4523 = vunpack.c.l.b16 %v4044
  %v4524 = vunpack.c.h.b16 %v4044
  %v4525 = vunpack.c.l.b16 %v4045
  %v4526 = vunpack.c.h.b16 %v4045
  %v4527 = vunpack.c.l.b16 %v4046
  %v4528 = vunpack.c.l.b16 %v4047
  %v4529 = vunpack.c.h.b16 %v4047
  %v4530 = vunpack.c.l.b16 %v4048
  %v4531 = vunpack.c.h.b16 %v4048
  %v4532 = vunpack.c.l.b16 %v4049
  %v4533 = vunpack.c.l.b16 %v4050
  %v4534 = vunpack.c.h.b16 %v4050
  %v4535 = vunpack.c.l.b16 %v4051
  %v4536 = vunpack.c.h.b16 %v4051
  %v4537 = vunpack.c.l.b16 %v4052
  %v4538 = vunpack.c.l.b16 %v4053
  %v4539 = vunpack.c.h.b16 %v4053
  %v4540 = vunpack.c.l.b16 %v4054
  %v4541 = vunpack.c.h.b16 %v4054
  %v4542 = vunpack.c.l.b16 %v4055
  %v4543 = vunpack.c.l.b16 %v4056
  %v4544 = vunpack.c.h.b16 %v4056
  %v4545 = vunpack.c.l.b16 %v4057
  %v4546 = vunpack.c.h.b16 %v4057
  %v4547 = vunpack.c.l.b16 %v4058
  %v4548 = vunpack.c.l.b16 %v4059
  %v4549 = vunpack.c.h.b16 %v4059
  %v4550 = vunpack.c.l.b16 %v4060
  %v4551 = vunpack.c.h.b16 %v4060
  %v4552 = vunpack.c.l.b16 %v4061
  %v4553 = vunpack.c.l.b16 %v4062
  %v4554 = vunpack.c.h.b16 %v4062
  %v4555 = vunpack.c.l.b16 %v4063
  %v4556 = vunpack.c.h.b16 %v4063
  %v4557 = vunpack.c.l.b16 %v4064
  %v4558 = vunpack.c.l.b16 %v4065
  %v4559 = vunpack.c.h.b16 %v4065
  %v4560 = vunpack.c.l.b16 %v4066
  %v4561 = vunpack.c.h.b16 %v4066
  %v4562 = vunpack.c.l.b16 %v4067
  %v4563 = vunpack.c.l.b16 %v4068
  %v4564 = vunpack.c.h.b16 %v4068
  %v4565 = vunpack.c.l.b16 %v4069
  %v4566 = vunpack.c.h.b16 %v4069
  %v4567 = vunpack.c.l.b16 %v4070
  %v4568 = vunpack.c.l.b16 %v4071
  %v4569 = vunpack.c.h.b16 %v4071
  %v4570 = vunpack.c.l.b16 %v4072
  %v4571 = vunpack.c.h.b16 %v4072
  %v4572 = vunpack.c.l.b16 %v4073
  %v4573 = vunpack.c.l.b16 %v4074
  %v4574 = vunpack.c.h.b16 %v4074
  %v4575 = vunpack.c.l.b16 %v4075
  %v4576 = vunpack.c.h.b16 %v4075
  %v4577 = vunpack.c.l.b16 %v4076
  %v4578 = vunpack.c.l.b16 %v4077
  %v4579 = vunpack.c.h.b16 %v4077
  %v4580 = vunpack.c.l.b16 %v4078
  %v4581 = vunpack.c.h.b16 %v4078
  %v4582 = vunpack.c.l.b16 %v4079
  %v4583 = vunpack.c.l.b16 %v4080
  %v4584 = vunpack.c.h.b16 %v4080
  %v4585 = vunpack.c.l.b16 %v4081
  %v4586 = vunpack.c.h.b16 %v4081
  %v4587 = vunpack.c.l.b16 %v4082
  %v4588 = vunpack.c.l.b16 %v4083
  %v4589 = vunpack.c.h.b16 %v4083
  %v4590 = vunpack.c.l.b16 %v4084
  %v4591 = vunpack.c.h.b16 %v4084
  %v4592 = vunpack.c.l.b16 %v4085
  %v4593 = vunpack.c.l.b16 %v4086
  %v4594 = vunpack.c.h.b16 %v4086
  %v4595 = vunpack.c.l.b16 %v4087
  %v4596 = vunpack.c.h.b16 %v4087
  %v4597 = vunpack.c.l.b16 %v4088
  %v4598 = vunpack.c.l.b16 %v4089
  %v4599 = vunpack.c.h.b16 %v4089
  %v4600 = vunpack.c.l.b16 %v4090
  %v4601 = vunpack.c.h.b16 %v4090
  %v4602 = vunpack.c.l.b16 %v4091
  %v4603 = vunpack.c.l.b16 %v4092
  %v4604 = vunpack.c.h.b16 %v4092
  %v4605 = vunpack.c.l.b16 %v4093
  %v4606 = vunpack.c.h.b16 %v4093
  %v4607 = vunpack.c.l.b16 %v4094
  %v4608 = vunpack.c.l.b16 %v4095
  %v4609 = vunpack.c.h.b16 %v4095
  %v4610 = vunpack.c.l.b16 %v4096
  %v4611 = vunpack.c.h.b16 %v4096
  %v4612 = vunpack.c.l.b16 %v4097
  %v4613 = vunpack.c.l.b16 %v4098
  %v4614 = vunpack.c.h.b16 %v4098
  %v4615 = vunpack.c.l.b16 %v4099
  %v4616 = vunpack.c.h.b16 %v4099
  %v4617 = vunpack.c.l.b16 %v4100
  %v4618 = vunpack.c.l.b16 %v4101
  %v4619 = vunpack.c.h.b16 %v4101
  %v4620 = vunpack.c.l.b16 %v4102
  %v4621 = vunpack.c.h.b16 %v4102
  %v4622 = vunpack.c.l.b16 %v4103
  %v4623 = vunpack.c.l.b16 %v4104
  %v4624 = vunpack.c.h.b16 %v4104
  %v4625 = vunpack.c.l.b16 %v4105
  %v4626 = vunpack.c.h.b16 %v4105
  %v4627 = vunpack.c.l.b16 %v4106
  %v4628 = vunpack.c.l.b16 %v4107
  %v4629 = vunpack.c.h.b16 %v4107
  %v4630 = vunpack.c.l.b16 %v4108
  %v4631 = vunpack.c.h.b16 %v4108
  %v4632 = vunpack.c.l.b16 %v4109
  %v4633 = vunpack.c.l.b16 %v4110
  %v4634 = vunpack.c.h.b16 %v4110
  %v4635 = vunpack.c.l.b16 %v4111
  %v4636 = vunpack.c.h.b16 %v4111
  %v4637 = vunpack.c.l.b16 %v4112
  %v4638 = vunpack.c.l.b16 %v4113
  %v4639 = vunpack.c.h.b16 %v4113
  %v4640 = vunpack.c.l.b16 %v4114
  %v4641 = vunpack.c.h.b16 %v4114
  %v4642 = vunpack.c.l.b16 %v4115
  %v4643 = vunpack.c.l.b16 %v4116
  %v4644 = vunpack.c.h.b16 %v4116
  %v4645 = vunpack.c.l.b16 %v4117
  %v4646 = vunpack.c.h.b16 %v4117
  %v4647 = vunpack.c.l.b16 %v4118
  %v4648 = vunpack.c.l.b16 %v4119
  %v4649 = vunpack.c.h.b16 %v4119
  %v4650 = vunpack.c.l.b16 %v4120
  %v4651 = vunpack.c.h.b16 %v4120
  %v4652 = vunpack.c.l.b16 %v4121
  %v4653 = vunpack.c.l.b16 %v4122
  %v4654 = vunpack.c.h.b16 %v4122
  %v4655 = vunpack.c.l.b16 %v4123
  %v4656 = vunpack.c.h.b16 %v4123
  %v4657 = vunpack.c.l.b16 %v4124
  %v4658 = vunpack.c.l.b16 %v4125
  %v4659 = vunpack.c.h.b16 %v4125
  %v4660 = vunpack.c.l.b16 %v4126
  %v4661 = vunpack.c.h.b16 %v4126
  %v4662 = vunpack.c.l.b16 %v4127
  %v4663 = vunpack.c.l.b16 %v4128
  %v4664 = vunpack.c.h.b16 %v4128
  %v4665 = vunpack.c.l.b16 %v4129
  %v4666 = vunpack.c.h.b16 %v4129
  %v4667 = vunpack.c.l.b16 %v4130
  %v4668 = vunpack.c.l.b16 %v4131
  %v4669 = vunpack.c.h.b16 %v4131
  %v4670 = vunpack.c.l.b16 %v4132
  %v4671 = vunpack.c.h.b16 %v4132
  %v4672 = vunpack.c.l.b16 %v4133
  %v4673 = vpack.c.b16 %v4358, %v4353
  %v4674 = vpack.c.b16 %v4359, %v4354
  %v4675 = vpack.c.b16 %v4360, %v4355
  %v4676 = vpack.c.b16 %v4361, %v4356
  %v4677 = vpack.c.b16 %v4362, %v4357
  %v4678 = vpack.c.b16 %v4368, %v4363
  %v4679 = vpack.c.b16 %v4369, %v4364
  %v4680 = vpack.c.b16 %v4370, %v4365
  %v4681 = vpack.c.b16 %v4371, %v4366
  %v4682 = vpack.c.b16 %v4372, %v4367
  %v4683 = vpack.c.b16 %v4378, %v4373
  %v4684 = vpack.c.b16 %v4379, %v4374
  %v4685 = vpack.c.b16 %v4380, %v4375
  %v4686 = vpack.c.b16 %v4381, %v4376
  %v4687 = vpack.c.b16 %v4382, %v4377
  %v4688 = vpack.c.b16 %v4388, %v4383
  %v4689 = vpack.c.b16 %v4389, %v4384
  %v4690 = vpack.c.b16 %v4390, %v4385
  %v4691 = vpack.c.b16 %v4391, %v4386
  %v4692 = vpack.c.b16 %v4392, %v4387
  %v4693 = vpack.c.b16 %v4398, %v4393
  %v4694 = vpack.c.b16 %v4399, %v4394
  %v4695 = vpack.c.b16 %v4400, %v4395
  %v4696 = vpack.c.b16 %v4401, %v4396
  %v4697 = vpack.c.b16 %v4402, %v4397
  %v4698 = vpack.c.b16 %v4408, %v4403
  %v4699 = vpack.c.b16 %v4409, %v4404
  %v4700 = vpack.c.b16 %v4410, %v4405
  %v4701 = vpack.c.b16 %v4411, %v4406
  %v4702 = vpack.c.b16 %v4412, %v4407
  %v4703 = vpack.c.b16 %v4418, %v4413
  %v4704 = vpack.c.b16 %v4419, %v4414
  %v4705 = vpack.c.b16 %v4420, %v4415
  %v4706 = vpack.c.b16 %v4421, %v4416
  %v4707 = vpack.c.b16 %v4422, %v4417
  %v4708 = vpack.c.b16 %v4428, %v4423
  %v4709 = vpack.c.b16 %v4429, %v4424
  %v4710 = vpack.c.b16 %v4430, %v4425
  %v4711 = vpack.c.b16 %v4431, %v4426
  %v4712 = vpack.c.b16 %v4432, %v4427
  %v4713 = vpack.c.b16 %v4438, %v4433
  %v4714 = vpack.c.b16 %v4439, %v4434
  %v4715 = vpack.c.b16 %v4440, %v4435
  %v4716 = vpack.c.b16 %v4441, %v4436
  %v4717 = vpack.c.b16 %v4442, %v4437
  %v4718 = vpack.c.b16 %v4448, %v4443
  %v4719 = vpack.c.b16 %v4449, %v4444
  %v4720 = vpack.c.b16 %v4450, %v4445
  %v4721 = vpack.c.b16 %v4451, %v4446
  %v4722 = vpack.c.b16 %v4452, %v4447
  %v4723 = vpack.c.b16 %v4458, %v4453
  %v4724 = vpack.c.b16 %v4459, %v4454
  %v4725 = vpack.c.b16 %v4460, %v4455
  %v4726 = vpack.c.b16 %v4461, %v4456
  %v4727 = vpack.c.b16 %v4462, %v4457
  %v4728 = vpack.c.b16 %v4468, %v4463
  %v4729 = vpack.c.b16 %v4469, %v4464
  %v4730 = vpack.c.b16 %v4470, %v4465
  %v4731 = vpack.c.b16 %v4471, %v4466
  %v4732 = vpack.c.b16 %v4472, %v4467
  %v4733 = vpack.c.b16 %v4478, %v4473
  %v4734 = vpack.c.b16 %v4479, %v4474
  %v4735 = vpack.c.b16 %v4480, %v4475
  %v4736 = vpack.c.b16 %v4481, %v4476
  %v4737 = vpack.c.b16 %v4482, %v4477
  %v4738 = vpack.c.b16 %v4488, %v4483
  %v4739 = vpack.c.b16 %v4489, %v4484
  %v4740 = vpack.c.b16 %v4490, %v4485
  %v4741 = vpack.c.b16 %v4491, %v4486
  %v4742 = vpack.c.b16 %v4492, %v4487
  %v4743 = vpack.c.b16 %v4498, %v4493
  %v4744 = vpack.c.b16 %v4499, %v4494
  %v4745 = vpack.c.b16 %v4500, %v4495
  %v4746 = vpack.c.b16 %v4501, %v4496
  %v4747 = vpack.c.b16 %v4502, %v4497
  %v4748 = vpack.c.b16 %v4508, %v4503
  %v4749 = vpack.c.b16 %v4509, %v4504
  %v4750 = vpack.c.b16 %v4510, %v4505
  %v4751 = vpack.c.b16 %v4511, %v4506
  %v4752 = vpack.c.b16 %v4512, %v4507
  %v4753 = vpack.c.b16 %v4518, %v4513
  %v4754 = vpack.c.b16 %v4519, %v4514
  %v4755 = vpack.c.b16 %v4520, %v4515
  %v4756 = vpack.c.b16 %v4521, %v4516
  %v4757 = vpack.c.b16 %v4522, %v4517
  %v4758 = vpack.c.b16 %v4528, %v4523
  %v4759 = vpack.c.b16 %v4529, %v4524
  %v4760 = vpack.c.b16 %v4530, %v4525
  %v4761 = vpack.c.b16 %v4531, %v4526
  %v4762 = vpack.c.b16 %v4532, %v4527
  %v4763 = vpack.c.b16 %v4538, %v4533
  %v4764 = vpack.c.b16 %v4539, %v4534
  %v4765 = vpack.c.b16 %v4540, %v4535
  %v4766 = vpack.c.b16 %v4541, %v4536
  %v4767 = vpack.c.b16 %v4542, %v4537
  %v4768 = vpack.c.b16 %v4548, %v4543
  %v4769 = vpack.c.b16 %v4549, %v4544
  %v4770 = vpack.c.b16 %v4550, %v4545
  %v4771 = vpack.c.b16 %v4551, %v4546
  %v4772 = vpack.c.b16 %v4552, %v4547
  %v4773 = vpack.c.b16 %v4558, %v4553
  %v4774 = vpack.c.b16 %v4559, %v4554
  %v4775 = vpack.c.b16 %v4560, %v4555
  %v4776 = vpack.c.b16 %v4561, %v4556
  %v4777 = vpack.c.b16 %v4562, %v4557
  %v4778 = vpack.c.b16 %v4568, %v4563
  %v4779 = vpack.c.b16 %v4569, %v4564
  %v4780 = vpack.c.b16 %v4570, %v4565
  %v4781 = vpack.c.b16 %v4571, %v4566
  %v4782 = vpack.c.b16 %v4572, %v4567
  %v4783 = vpack.c.b16 %v4578, %v4573
  %v4784 = vpack.c.b16 %v4579, %v4574
  %v4785 = vpack.c.b16 %v4580, %v4575
  %v4786 = vpack.c.b16 %v4581, %v4576
  %v4787 = vpack.c.b16 %v4582, %v4577
  %v4788 = vpack.c.b16 %v4588, %v4583
  %v4789 = vpack.c.b16 %v4589, %v4584
  %v4790 = vpack.c.b16 %v4590, %v4585
  %v4791 = vpack.c.b16 %v4591, %v4586
  %v4792 = vpack.c.b16 %v4592, %v4587
  %v4793 = vpack.c.b16 %v4598, %v4593
  %v4794 = vpack.c.b16 %v4599, %v4594
  %v4795 = vpack.c.b16 %v4600, %v4595
  %v4796 = vpack.c.b16 %v4601, %v4596
  %v4797 = vpack.c.b16 %v4602, %v4597
  %v4798 = vpack.c.b16 %v4608, %v4603
  %v4799 = vpack.c.b16 %v4609, %v4604
  %v4800 = vpack.c.b16 %v4610, %v4605
  %v4801 = vpack.c.b16 %v4611, %v4606
  %v4802 = vpack.c.b16 %v4612, %v4607
  %v4803 = vpack.c.b16 %v4618, %v4613
  %v4804 = vpack.c.b16 %v4619, %v4614
  %v4805 = vpack.c.b16 %v4620, %v4615
  %v4806 = vpack.c.b16 %v4621, %v4616
  %v4807 = vpack.c.b16 %v4622, %v4617
  %v4808 = vpack.c.b16 %v4628, %v4623
  %v4809 = vpack.c.b16 %v4629, %v4624
  %v4810 = vpack.c.b16 %v4630, %v4625
  %v4811 = vpack.c.b16 %v4631, %v4626
  %v4812 = vpack.c.b16 %v4632, %v4627
  %v4813 = vpack.c.b16 %v4638, %v4633
  %v4814 = vpack.c.b16 %v4639, %v4634
  %v4815 = vpack.c.b16 %v4640, %v4635
  %v4816 = vpack.c.b16 %v4641, %v4636
  %v4817 = vpack.c.b16 %v4642, %v4637
  %v4818 = vpack.c.b16 %v4648, %v4643
  %v4819 = vpack.c.b16 %v4649, %v4644
  %v4820 = vpack.c.b16 %v4650, %v4645
  %v4821 = vpack.c.b16 %v4651, %v4646
  %v4822 = vpack.c.b16 %v4652, %v4647
  %v4823 = vpack.c.b16 %v4658, %v4653
  %v4824 = vpack.c.b16 %v4659, %v4654
  %v4825 = vpack.c.b16 %v4660, %v4655
  %v4826 = vpack.c.b16 %v4661, %v4656
  %v4827 = vpack.c.b16 %v4662, %v4657
  %v4828 = vpack.c.b16 %v4668, %v4663
  %v4829 = vpack.c.b16 %v4669, %v4664
  %v4830 = vpack.c.b16 %v4670, %v4665
  %v4831 = vpack.c.b16 %v4671, %v4666
  %v4832 = vpack.c.b16 %v4672, %v4667
  %4993 = vmatprep.subr.bf16.mxu0 %v4674
  %4994 = vmatpush1.bf16.msra.mxu0 %v4673
  %4995 = vmatprep.subr.bf16.mxu0 %v4679
  %4996 = vmatpush1.bf16.msra.mxu0 %v4678
  %4997 = vmatprep.subr.bf16.mxu0 %v4684
  %4998 = vmatpush1.bf16.msra.mxu0 %v4683
  %4999 = vmatprep.subr.bf16.mxu0 %v4689
  %5000 = vmatpush1.bf16.msra.mxu0 %v4688
  %5001 = vmatprep.subr.bf16.mxu0 %v4694
  %5002 = vmatpush1.bf16.msra.mxu0 %v4693
  %5003 = vmatprep.subr.bf16.mxu0 %v4699
  %5004 = vmatpush1.bf16.msra.mxu0 %v4698
  %5005 = vmatprep.subr.bf16.mxu0 %v4704
  %5006 = vmatpush1.bf16.msra.mxu0 %v4703
  %5007 = vmatprep.subr.bf16.mxu0 %v4709
  %5008 = vmatpush1.bf16.msra.mxu0 %v4708
  %5009 = vmatprep.subr.bf16.mxu0 %v4714
  %5010 = vmatpush1.bf16.msra.mxu0 %v4713
  %5011 = vmatprep.subr.bf16.mxu0 %v4719
  %5012 = vmatpush1.bf16.msra.mxu0 %v4718
  %5013 = vmatprep.subr.bf16.mxu0 %v4724
  %5014 = vmatpush1.bf16.msra.mxu0 %v4723
  %5015 = vmatprep.subr.bf16.mxu0 %v4729
  %5016 = vmatpush1.bf16.msra.mxu0 %v4728
  %5017 = vmatprep.subr.bf16.mxu0 %v4734
  %5018 = vmatpush1.bf16.msra.mxu0 %v4733
  %5019 = vmatprep.subr.bf16.mxu0 %v4739
  %5020 = vmatpush1.bf16.msra.mxu0 %v4738
  %5021 = vmatprep.subr.bf16.mxu0 %v4744
  %5022 = vmatpush1.bf16.msra.mxu0 %v4743
  %5023 = vmatprep.subr.bf16.mxu0 %v4749
  %5024 = vmatpush1.bf16.msra.mxu0 %v4748
  %5025 = vmatprep.mubr.bf16.mxu0 %v3939
  %5026 = vmatmul.mubr.bf16.gmra.mrb[0].mxu0 %v3938
  %v5027 = vpop.f32.mrb[0].mxu0
  %v5028 = vadd.f32 %v4139, %v5027
  %v5029 = vpop.f32.mrb[0].mxu0
  %v5030 = vadd.f32 %v4143, %v5029
  %v5031 = vpop.f32.mrb[0].mxu0
  %v5032 = vpop.f32.mrb[0].mxu0
  %5033 = vdwg.mxu0
  %5034 = vmatprep.subr.bf16.mxu0 %v4754
  %5035 = vmatpush1.bf16.msra.mxu0 %v4753
  %5036 = vmatprep.subr.bf16.mxu0 %v4759
  %5037 = vmatpush1.bf16.msra.mxu0 %v4758
  %5038 = vmatprep.subr.bf16.mxu0 %v4764
  %5039 = vmatpush1.bf16.msra.mxu0 %v4763
  %5040 = vmatprep.subr.bf16.mxu0 %v4769
  %5041 = vmatpush1.bf16.msra.mxu0 %v4768
  %5042 = vmatprep.subr.bf16.mxu0 %v4774
  %5043 = vmatpush1.bf16.msra.mxu0 %v4773
  %5044 = vmatprep.subr.bf16.mxu0 %v4779
  %5045 = vmatpush1.bf16.msra.mxu0 %v4778
  %5046 = vmatprep.subr.bf16.mxu0 %v4784
  %5047 = vmatpush1.bf16.msra.mxu0 %v4783
  %5048 = vmatprep.subr.bf16.mxu0 %v4789
  %5049 = vmatpush1.bf16.msra.mxu0 %v4788
  %5050 = vmatprep.subr.bf16.mxu0 %v4794
  %5051 = vmatpush1.bf16.msra.mxu0 %v4793
  %5052 = vmatprep.subr.bf16.mxu0 %v4799
  %5053 = vmatpush1.bf16.msra.mxu0 %v4798
  %5054 = vmatprep.subr.bf16.mxu0 %v4804
  %5055 = vmatpush1.bf16.msra.mxu0 %v4803
  %5056 = vmatprep.subr.bf16.mxu0 %v4809
  %5057 = vmatpush1.bf16.msra.mxu0 %v4808
  %5058 = vmatprep.subr.bf16.mxu0 %v4814
  %5059 = vmatpush1.bf16.msra.mxu0 %v4813
  %5060 = vmatprep.subr.bf16.mxu0 %v4819
  %5061 = vmatpush1.bf16.msra.mxu0 %v4818
  %5062 = vmatprep.subr.bf16.mxu0 %v4824
  %5063 = vmatpush1.bf16.msra.mxu0 %v4823
  %5064 = vmatprep.subr.bf16.mxu0 %v4829
  %5065 = vmatpush1.bf16.msra.mxu0 %v4828
  %5066 = vmatprep.mubr.bf16.mxu0 %v3941
  %5067 = vmatmul.mubr.bf16.gmra.mrb[0].mxu0 %v3940
  %v5068 = vpop.f32.mrb[0].mxu0
  %v5069 = vadd.f32 %v5028, %v5068
  %v5070 = vpop.f32.mrb[0].mxu0
  %v5071 = vadd.f32 %v5030, %v5070
  %v5072 = vpop.f32.mrb[0].mxu0
  %v5073 = vpop.f32.mrb[0].mxu0
  %5074 = vdwg.mxu0
  %5075 = vmatprep.subr.bf16.mxu0 %v4676
  %5076 = vmatpush1.bf16.msra.mxu0 %v4675
  %5077 = vmatprep.subr.bf16.mxu0 %v4681
  %5078 = vmatpush1.bf16.msra.mxu0 %v4680
  %5079 = vmatprep.subr.bf16.mxu0 %v4686
  %5080 = vmatpush1.bf16.msra.mxu0 %v4685
  %5081 = vmatprep.subr.bf16.mxu0 %v4691
  %5082 = vmatpush1.bf16.msra.mxu0 %v4690
  %5083 = vmatprep.subr.bf16.mxu0 %v4696
  %5084 = vmatpush1.bf16.msra.mxu0 %v4695
  %5085 = vmatprep.subr.bf16.mxu0 %v4701
  %5086 = vmatpush1.bf16.msra.mxu0 %v4700
  %5087 = vmatprep.subr.bf16.mxu0 %v4706
  %5088 = vmatpush1.bf16.msra.mxu0 %v4705
  %5089 = vmatprep.subr.bf16.mxu0 %v4711
  %5090 = vmatpush1.bf16.msra.mxu0 %v4710
  %5091 = vmatprep.subr.bf16.mxu0 %v4716
  %5092 = vmatpush1.bf16.msra.mxu0 %v4715
  %5093 = vmatprep.subr.bf16.mxu0 %v4721
  %5094 = vmatpush1.bf16.msra.mxu0 %v4720
  %5095 = vmatprep.subr.bf16.mxu0 %v4726
  %5096 = vmatpush1.bf16.msra.mxu0 %v4725
  %5097 = vmatprep.subr.bf16.mxu0 %v4731
  %5098 = vmatpush1.bf16.msra.mxu0 %v4730
  %5099 = vmatprep.subr.bf16.mxu0 %v4736
  %5100 = vmatpush1.bf16.msra.mxu0 %v4735
  %5101 = vmatprep.subr.bf16.mxu0 %v4741
  %5102 = vmatpush1.bf16.msra.mxu0 %v4740
  %5103 = vmatprep.subr.bf16.mxu0 %v4746
  %5104 = vmatpush1.bf16.msra.mxu0 %v4745
  %5105 = vmatprep.subr.bf16.mxu0 %v4751
  %5106 = vmatpush1.bf16.msra.mxu0 %v4750
  %5107 = vmatprep.mubr.bf16.mxu0 %v3939
  %5108 = vmatmul.mubr.bf16.gmra.mrb[0].mxu0 %v3938
  %v5109 = vpop.f32.mrb[0].mxu0
  %v5110 = vadd.f32 %v4147, %v5109
  %v5111 = vpop.f32.mrb[0].mxu0
  %v5112 = vadd.f32 %v4151, %v5111
  %v5113 = vpop.f32.mrb[0].mxu0
  %v5114 = vpop.f32.mrb[0].mxu0
  %5115 = vdwg.mxu0
  %5116 = vmatprep.subr.bf16.mxu0 %v4756
  %5117 = vmatpush1.bf16.msra.mxu0 %v4755
  %5118 = vmatprep.subr.bf16.mxu0 %v4761
  %5119 = vmatpush1.bf16.msra.mxu0 %v4760
  %5120 = vmatprep.subr.bf16.mxu0 %v4766
  %5121 = vmatpush1.bf16.msra.mxu0 %v4765
  %5122 = vmatprep.subr.bf16.mxu0 %v4771
  %5123 = vmatpush1.bf16.msra.mxu0 %v4770
  %5124 = vmatprep.subr.bf16.mxu0 %v4776
  %5125 = vmatpush1.bf16.msra.mxu0 %v4775
  %5126 = vmatprep.subr.bf16.mxu0 %v4781
  %5127 = vmatpush1.bf16.msra.mxu0 %v4780
  %5128 = vmatprep.subr.bf16.mxu0 %v4786
  %5129 = vmatpush1.bf16.msra.mxu0 %v4785
  %5130 = vmatprep.subr.bf16.mxu0 %v4791
  %5131 = vmatpush1.bf16.msra.mxu0 %v4790
  %5132 = vmatprep.subr.bf16.mxu0 %v4796
  %5133 = vmatpush1.bf16.msra.mxu0 %v4795
  %5134 = vmatprep.subr.bf16.mxu0 %v4801
  %5135 = vmatpush1.bf16.msra.mxu0 %v4800
  %5136 = vmatprep.subr.bf16.mxu0 %v4806
  %5137 = vmatpush1.bf16.msra.mxu0 %v4805
  %5138 = vmatprep.subr.bf16.mxu0 %v4811
  %5139 = vmatpush1.bf16.msra.mxu0 %v4810
  %5140 = vmatprep.subr.bf16.mxu0 %v4816
  %5141 = vmatpush1.bf16.msra.mxu0 %v4815
  %5142 = vmatprep.subr.bf16.mxu0 %v4821
  %5143 = vmatpush1.bf16.msra.mxu0 %v4820
  %5144 = vmatprep.subr.bf16.mxu0 %v4826
  %5145 = vmatpush1.bf16.msra.mxu0 %v4825
  %5146 = vmatprep.subr.bf16.mxu0 %v4831
  %5147 = vmatpush1.bf16.msra.mxu0 %v4830
  %5148 = vmatprep.mubr.bf16.mxu0 %v3941
  %5149 = vmatmul.mubr.bf16.gmra.mrb[0].mxu0 %v3940
  %v5150 = vpop.f32.mrb[0].mxu0
  %v5151 = vadd.f32 %v5110, %v5150
  %v5152 = vpop.f32.mrb[0].mxu0
  %v5153 = vadd.f32 %v5112, %v5152
  %v5154 = vpop.f32.mrb[0].mxu0
  %v5155 = vpop.f32.mrb[0].mxu0
  %5156 = vdwg.mxu0
  %5157 = vmatprep.subr.bf16.mxu0 0
  %5158 = vmatpush1.bf16.msra.mxu0 %v4677
  %5159 = vmatprep.subr.bf16.mxu0 0
  %5160 = vmatpush1.bf16.msra.mxu0 %v4682
  %5161 = vmatprep.subr.bf16.mxu0 0
  %5162 = vmatpush1.bf16.msra.mxu0 %v4687
  %5163 = vmatprep.subr.bf16.mxu0 0
  %5164 = vmatpush1.bf16.msra.mxu0 %v4692
  %5165 = vmatprep.subr.bf16.mxu0 0
  %5166 = vmatpush1.bf16.msra.mxu0 %v4697
  %5167 = vmatprep.subr.bf16.mxu0 0
  %5168 = vmatpush1.bf16.msra.mxu0 %v4702
  %5169 = vmatprep.subr.bf16.mxu0 0
  %5170 = vmatpush1.bf16.msra.mxu0 %v4707
  %5171 = vmatprep.subr.bf16.mxu0 0
  %5172 = vmatpush1.bf16.msra.mxu0 %v4712
  %5173 = vmatprep.subr.bf16.mxu0 0
  %5174 = vmatpush1.bf16.msra.mxu0 %v4717
  %5175 = vmatprep.subr.bf16.mxu0 0
  %5176 = vmatpush1.bf16.msra.mxu0 %v4722
  %5177 = vmatprep.subr.bf16.mxu0 0
  %5178 = vmatpush1.bf16.msra.mxu0 %v4727
  %5179 = vmatprep.subr.bf16.mxu0 0
  %5180 = vmatpush1.bf16.msra.mxu0 %v4732
  %5181 = vmatprep.subr.bf16.mxu0 0
  %5182 = vmatpush1.bf16.msra.mxu0 %v4737
  %5183 = vmatprep.subr.bf16.mxu0 0
  %5184 = vmatpush1.bf16.msra.mxu0 %v4742
  %5185 = vmatprep.subr.bf16.mxu0 0
  %5186 = vmatpush1.bf16.msra.mxu0 %v4747
  %5187 = vmatprep.subr.bf16.mxu0 0
  %5188 = vmatpush1.bf16.msra.mxu0 %v4752
  %5189 = vmatprep.mubr.bf16.mxu0 %v3939
  %5190 = vmatmul.mubr.bf16.gmra.mrb[0].mxu0 %v3938
  %v5191 = vpop.f32.mrb[0].mxu0
  %v5192 = vadd.f32 %v4155, %v5191
  %v5193 = vpop.f32.mrb[0].mxu0
  %v5194 = vpop.f32.mrb[0].mxu0
  %v5195 = vpop.f32.mrb[0].mxu0
  %5196 = vdwg.mxu0
  %5197 = vmatprep.subr.bf16.mxu0 0
  %5198 = vmatpush1.bf16.msra.mxu0 %v4757
  %5199 = vmatprep.subr.bf16.mxu0 0
  %5200 = vmatpush1.bf16.msra.mxu0 %v4762
  %5201 = vmatprep.subr.bf16.mxu0 0
  %5202 = vmatpush1.bf16.msra.mxu0 %v4767
  %5203 = vmatprep.subr.bf16.mxu0 0
  %5204 = vmatpush1.bf16.msra.mxu0 %v4772
  %5205 = vmatprep.subr.bf16.mxu0 0
  %5206 = vmatpush1.bf16.msra.mxu0 %v4777
  %5207 = vmatprep.subr.bf16.mxu0 0
  %5208 = vmatpush1.bf16.msra.mxu0 %v4782
  %5209 = vmatprep.subr.bf16.mxu0 0
  %5210 = vmatpush1.bf16.msra.mxu0 %v4787
  %5211 = vmatprep.subr.bf16.mxu0 0
  %5212 = vmatpush1.bf16.msra.mxu0 %v4792
  %5213 = vmatprep.subr.bf16.mxu0 0
  %5214 = vmatpush1.bf16.msra.mxu0 %v4797
  %5215 = vmatprep.subr.bf16.mxu0 0
  %5216 = vmatpush1.bf16.msra.mxu0 %v4802
  %5217 = vmatprep.subr.bf16.mxu0 0
  %5218 = vmatpush1.bf16.msra.mxu0 %v4807
  %5219 = vmatprep.subr.bf16.mxu0 0
  %5220 = vmatpush1.bf16.msra.mxu0 %v4812
  %5221 = vmatprep.subr.bf16.mxu0 0
  %5222 = vmatpush1.bf16.msra.mxu0 %v4817
  %5223 = vmatprep.subr.bf16.mxu0 0
  %5224 = vmatpush1.bf16.msra.mxu0 %v4822
  %5225 = vmatprep.subr.bf16.mxu0 0
  %5226 = vmatpush1.bf16.msra.mxu0 %v4827
  %5227 = vmatprep.subr.bf16.mxu0 0
  %5228 = vmatpush1.bf16.msra.mxu0 %v4832
  %5229 = vmatprep.mubr.bf16.mxu0 %v3941
  %5230 = vmatmul.mubr.bf16.gmra.mrb[0].mxu0 %v3940
  %v5231 = vpop.f32.mrb[0].mxu0
  %v5232 = vadd.f32 %v5192, %v5231
  %v5233 = vpop.f32.mrb[0].mxu0
  %v5234 = vpop.f32.mrb[0].mxu0
  %v5235 = vpop.f32.mrb[0].mxu0
  %5236 = vdwg.mxu0
  %v5237 = vmax.f32 %v5069, 0.0
  %v5238 = vmax.f32 %v5071, 0.0
  %v5239 = vmax.f32 %v5151, 0.0
  %v5240 = vmax.f32 %v5153, 0.0
  %v5241 = vmax.f32 %v5232, 0.0
  %v5242 = vpack.c.bf16 %v5237, %v5237
  %v5243 = vpack.c.bf16 %v5238, %v5238
  %v5244 = vpack.c.bf16 %v5239, %v5239
  %v5245 = vpack.c.bf16 %v5240, %v5240
  %v5246 = vpack.c.bf16 %v5241, %v5241
  %v5247 = vld [vmem:[%s12] sm:$0xf]
  %v5248 = vld [vmem:[%s12 + $0x4] sm:$0xf]
  %v5249 = vld [vmem:[%s12 + $0x8] sm:$0xf]
  %v5250 = vld [vmem:[%s12 + $0xc] sm:$0xf]
  %v5251 = vld [vmem:[%s12 + $0x10] sm:$0xf]
  %v5252 = vld [vmem:[%s12 + $0x14] sm:$0xf]
  %v5253 = vld [vmem:[%s12 + $0x18] sm:$0xf]
  %v5254 = vld [vmem:[%s12 + $0x1c] sm:$0xf]
  %v5255 = vld [vmem:[%s12 + $0x20] sm:$0xf]
  %v5256 = vld [vmem:[%s12 + $0x24] sm:$0xf]
  %v5257 = vld [vmem:[%s12 + $0x28] sm:$0xf]
  %v5258 = vld [vmem:[%s12 + $0x2c] sm:$0xf]
  %v5259 = vld [vmem:[%s12 + $0x30] sm:$0xf]
  %v5260 = vld [vmem:[%s12 + $0x34] sm:$0xf]
  %v5261 = vld [vmem:[%s12 + $0x38] sm:$0xf]
  %v5262 = vld [vmem:[%s12 + $0x3c] sm:$0xf]
  %v5263 = vld [vmem:[%s12 + $0x40] sm:$0xf]
  %v5264 = vld [vmem:[%s12 + $0x44] sm:$0xf]
  %v5265 = vld [vmem:[%s12 + $0x48] sm:$0xf]
  %v5266 = vld [vmem:[%s12 + $0x4c] sm:$0xf]
  %v5267 = vld [vmem:[%s12 + $0x50] sm:$0xf]
  %v5268 = vld [vmem:[%s12 + $0x54] sm:$0xf]
  %v5269 = vld [vmem:[%s12 + $0x58] sm:$0xf]
  %v5270 = vld [vmem:[%s12 + $0x5c] sm:$0xf]
  %v5271 = vld [vmem:[%s12 + $0x60] sm:$0xf]
  %v5272 = vld [vmem:[%s12 + $0x64] sm:$0xf]
  %v5273 = vld [vmem:[%s12 + $0x68] sm:$0xf]
  %v5274 = vld [vmem:[%s12 + $0x6c] sm:$0xf]
  %v5275 = vld [vmem:[%s12 + $0x70] sm:$0xf]
  %v5276 = vld [vmem:[%s12 + $0x74] sm:$0xf]
  %v5277 = vld [vmem:[%s12 + $0x78] sm:$0xf]
  %v5278 = vld [vmem:[%s12 + $0x7c] sm:$0xf]
  %v5279 = vld [vmem:[%s12 + $0x80] sm:$0xf]
  %v5280 = vld [vmem:[%s12 + $0x84] sm:$0xf]
  %v5281 = vld [vmem:[%s12 + $0x88] sm:$0xf]
  %v5282 = vld [vmem:[%s12 + $0x8c] sm:$0xf]
  %v5283 = vld [vmem:[%s12 + $0x90] sm:$0xf]
  %v5284 = vld [vmem:[%s12 + $0x94] sm:$0xf]
  %v5285 = vld [vmem:[%s12 + $0x98] sm:$0xf]
  %v5286 = vld [vmem:[%s12 + $0x9c] sm:$0xf]
  %v5287 = vld [vmem:[%s12 + $0xa0] sm:$0xf]
  %v5288 = vld [vmem:[%s12 + $0xa4] sm:$0xf]
  %v5289 = vld [vmem:[%s12 + $0xa8] sm:$0xf]
  %v5290 = vld [vmem:[%s12 + $0xac] sm:$0xf]
  %v5291 = vld [vmem:[%s12 + $0xb0] sm:$0xf]
  %v5292 = vld [vmem:[%s12 + $0xb4] sm:$0xf]
  %v5293 = vld [vmem:[%s12 + $0xb8] sm:$0xf]
  %v5294 = vld [vmem:[%s12 + $0xbc] sm:$0xf]
  %v5295 = vld [vmem:[%s12 + $0xc0] sm:$0xf]
  %v5296 = vld [vmem:[%s12 + $0xc4] sm:$0xf]
  %v5297 = vld [vmem:[%s12 + $0xc8] sm:$0xf]
  %v5298 = vld [vmem:[%s12 + $0xcc] sm:$0xf]
  %v5299 = vld [vmem:[%s12 + $0xd0] sm:$0xf]
  %v5300 = vld [vmem:[%s12 + $0xd4] sm:$0xf]
  %v5301 = vld [vmem:[%s12 + $0xd8] sm:$0xf]
  %v5302 = vld [vmem:[%s12 + $0xdc] sm:$0xf]
  %v5303 = vld [vmem:[%s12 + $0xe0] sm:$0xf]
  %v5304 = vld [vmem:[%s12 + $0xe4] sm:$0xf]
  %v5305 = vld [vmem:[%s12 + $0xe8] sm:$0xf]
  %v5306 = vld [vmem:[%s12 + $0xec] sm:$0xf]
  %v5307 = vld [vmem:[%s12 + $0xf0] sm:$0xf]
  %v5308 = vld [vmem:[%s12 + $0xf4] sm:$0xf]
  %v5309 = vld [vmem:[%s12 + $0xf8] sm:$0xf]
  %v5310 = vld [vmem:[%s12 + $0xfc] sm:$0xf]
  %v5311 = vld [vmem:[%s12 + $0x100] sm:$0xf]
  %v5312 = vld [vmem:[%s12 + $0x104] sm:$0xf]
  %v5313 = vld [vmem:[%s12 + $0x108] sm:$0xf]
  %v5314 = vld [vmem:[%s12 + $0x10c] sm:$0xf]
  %v5315 = vld [vmem:[%s12 + $0x110] sm:$0xf]
  %v5316 = vld [vmem:[%s12 + $0x114] sm:$0xf]
  %v5317 = vld [vmem:[%s12 + $0x118] sm:$0xf]
  %v5318 = vld [vmem:[%s12 + $0x11c] sm:$0xf]
  %v5319 = vld [vmem:[%s12 + $0x120] sm:$0xf]
  %v5320 = vld [vmem:[%s12 + $0x124] sm:$0xf]
  %v5321 = vld [vmem:[%s12 + $0x128] sm:$0xf]
  %v5322 = vld [vmem:[%s12 + $0x12c] sm:$0xf]
  %v5323 = vld [vmem:[%s12 + $0x130] sm:$0xf]
  %v5324 = vld [vmem:[%s12 + $0x134] sm:$0xf]
  %v5325 = vld [vmem:[%s12 + $0x138] sm:$0xf]
  %v5326 = vld [vmem:[%s12 + $0x13c] sm:$0xf]
  %v5327 = vld [vmem:[%s13] sm:$0x1]
  %v5329 = vlaneseq
  %v5330 = vshrl.u32 %v5329, 7
  %v5331 = vsub.s32 0, %v5330
  %v5332 = vrot.slane %v5327, %v5331
  %v5414 = vunpack.c.l.b16 %v5247
  %v5415 = vunpack.c.l.b16 %v5248
  %v5416 = vunpack.c.l.b16 %v5249
  %v5417 = vunpack.c.l.b16 %v5250
  %v5418 = vunpack.c.l.b16 %v5251
  %v5419 = vunpack.c.l.b16 %v5252
  %v5420 = vunpack.c.l.b16 %v5253
  %v5421 = vunpack.c.l.b16 %v5254
  %v5422 = vunpack.c.l.b16 %v5255
  %v5423 = vunpack.c.l.b16 %v5256
  %v5424 = vunpack.c.l.b16 %v5257
  %v5425 = vunpack.c.l.b16 %v5258
  %v5426 = vunpack.c.l.b16 %v5259
  %v5427 = vunpack.c.l.b16 %v5260
  %v5428 = vunpack.c.l.b16 %v5261
  %v5429 = vunpack.c.l.b16 %v5262
  %v5430 = vunpack.c.l.b16 %v5263
  %v5431 = vunpack.c.l.b16 %v5264
  %v5432 = vunpack.c.l.b16 %v5265
  %v5433 = vunpack.c.l.b16 %v5266
  %v5434 = vunpack.c.l.b16 %v5267
  %v5435 = vunpack.c.l.b16 %v5268
  %v5436 = vunpack.c.l.b16 %v5269
  %v5437 = vunpack.c.l.b16 %v5270
  %v5438 = vunpack.c.l.b16 %v5271
  %v5439 = vunpack.c.l.b16 %v5272
  %v5440 = vunpack.c.l.b16 %v5273
  %v5441 = vunpack.c.l.b16 %v5274
  %v5442 = vunpack.c.l.b16 %v5275
  %v5443 = vunpack.c.l.b16 %v5276
  %v5444 = vunpack.c.l.b16 %v5277
  %v5445 = vunpack.c.l.b16 %v5278
  %v5446 = vunpack.c.l.b16 %v5279
  %v5447 = vunpack.c.l.b16 %v5280
  %v5448 = vunpack.c.l.b16 %v5281
  %v5449 = vunpack.c.l.b16 %v5282
  %v5450 = vunpack.c.l.b16 %v5283
  %v5451 = vunpack.c.l.b16 %v5284
  %v5452 = vunpack.c.l.b16 %v5285
  %v5453 = vunpack.c.l.b16 %v5286
  %v5454 = vunpack.c.l.b16 %v5287
  %v5455 = vunpack.c.l.b16 %v5288
  %v5456 = vunpack.c.l.b16 %v5289
  %v5457 = vunpack.c.l.b16 %v5290
  %v5458 = vunpack.c.l.b16 %v5291
  %v5459 = vunpack.c.l.b16 %v5292
  %v5460 = vunpack.c.l.b16 %v5293
  %v5461 = vunpack.c.l.b16 %v5294
  %v5462 = vunpack.c.l.b16 %v5295
  %v5463 = vunpack.c.l.b16 %v5296
  %v5464 = vunpack.c.l.b16 %v5297
  %v5465 = vunpack.c.l.b16 %v5298
  %v5466 = vunpack.c.l.b16 %v5299
  %v5467 = vunpack.c.l.b16 %v5300
  %v5468 = vunpack.c.l.b16 %v5301
  %v5469 = vunpack.c.l.b16 %v5302
  %v5470 = vunpack.c.l.b16 %v5303
  %v5471 = vunpack.c.l.b16 %v5304
  %v5472 = vunpack.c.l.b16 %v5305
  %v5473 = vunpack.c.l.b16 %v5306
  %v5474 = vunpack.c.l.b16 %v5307
  %v5475 = vunpack.c.l.b16 %v5308
  %v5476 = vunpack.c.l.b16 %v5309
  %v5477 = vunpack.c.l.b16 %v5310
  %v5478 = vunpack.c.l.b16 %v5311
  %v5479 = vunpack.c.l.b16 %v5312
  %v5480 = vunpack.c.l.b16 %v5313
  %v5481 = vunpack.c.l.b16 %v5314
  %v5482 = vunpack.c.l.b16 %v5315
  %v5483 = vunpack.c.l.b16 %v5316
  %v5484 = vunpack.c.l.b16 %v5317
  %v5485 = vunpack.c.l.b16 %v5318
  %v5486 = vunpack.c.l.b16 %v5319
  %v5487 = vunpack.c.l.b16 %v5320
  %v5488 = vunpack.c.l.b16 %v5321
  %v5489 = vunpack.c.l.b16 %v5322
  %v5490 = vunpack.c.l.b16 %v5323
  %v5491 = vunpack.c.l.b16 %v5324
  %v5492 = vunpack.c.l.b16 %v5325
  %v5493 = vunpack.c.l.b16 %v5326
  %v5494 = vpack.c.b16 %v5415, %v5414
  %v5495 = vpack.c.b16 %v5417, %v5416
  %v5496 = vpack.c.b16 %v5419, %v5418
  %v5497 = vpack.c.b16 %v5421, %v5420
  %v5498 = vpack.c.b16 %v5423, %v5422
  %v5499 = vpack.c.b16 %v5425, %v5424
  %v5500 = vpack.c.b16 %v5427, %v5426
  %v5501 = vpack.c.b16 %v5429, %v5428
  %v5502 = vpack.c.b16 %v5431, %v5430
  %v5503 = vpack.c.b16 %v5433, %v5432
  %v5504 = vpack.c.b16 %v5435, %v5434
  %v5505 = vpack.c.b16 %v5437, %v5436
  %v5506 = vpack.c.b16 %v5439, %v5438
  %v5507 = vpack.c.b16 %v5441, %v5440
  %v5508 = vpack.c.b16 %v5443, %v5442
  %v5509 = vpack.c.b16 %v5445, %v5444
  %v5510 = vpack.c.b16 %v5447, %v5446
  %v5511 = vpack.c.b16 %v5449, %v5448
  %v5512 = vpack.c.b16 %v5451, %v5450
  %v5513 = vpack.c.b16 %v5453, %v5452
  %v5514 = vpack.c.b16 %v5455, %v5454
  %v5515 = vpack.c.b16 %v5457, %v5456
  %v5516 = vpack.c.b16 %v5459, %v5458
  %v5517 = vpack.c.b16 %v5461, %v5460
  %v5518 = vpack.c.b16 %v5463, %v5462
  %v5519 = vpack.c.b16 %v5465, %v5464
  %v5520 = vpack.c.b16 %v5467, %v5466
  %v5521 = vpack.c.b16 %v5469, %v5468
  %v5522 = vpack.c.b16 %v5471, %v5470
  %v5523 = vpack.c.b16 %v5473, %v5472
  %v5524 = vpack.c.b16 %v5475, %v5474
  %v5525 = vpack.c.b16 %v5477, %v5476
  %v5526 = vpack.c.b16 %v5479, %v5478
  %v5527 = vpack.c.b16 %v5481, %v5480
  %v5528 = vpack.c.b16 %v5483, %v5482
  %v5529 = vpack.c.b16 %v5485, %v5484
  %v5530 = vpack.c.b16 %v5487, %v5486
  %v5531 = vpack.c.b16 %v5489, %v5488
  %v5532 = vpack.c.b16 %v5491, %v5490
  %v5533 = vpack.c.b16 %v5493, %v5492
  %5574 = vmatprep.subr.bf16.mxu0 0
  %5575 = vmatpush1.bf16.msra.mxu0 %v5494
  %5576 = vmatprep.subr.bf16.mxu0 0
  %5577 = vmatpush1.bf16.msra.mxu0 %v5495
  %5578 = vmatprep.subr.bf16.mxu0 0
  %5579 = vmatpush1.bf16.msra.mxu0 %v5496
  %5580 = vmatprep.subr.bf16.mxu0 0
  %5581 = vmatpush1.bf16.msra.mxu0 %v5497
  %5582 = vmatprep.subr.bf16.mxu0 0
  %5583 = vmatpush1.bf16.msra.mxu0 %v5498
  %5584 = vmatprep.subr.bf16.mxu0 0
  %5585 = vmatpush1.bf16.msra.mxu0 %v5499
  %5586 = vmatprep.subr.bf16.mxu0 0
  %5587 = vmatpush1.bf16.msra.mxu0 %v5500
  %5588 = vmatprep.subr.bf16.mxu0 0
  %5589 = vmatpush1.bf16.msra.mxu0 %v5501
  %5590 = vmatprep.subr.bf16.mxu0 0
  %5591 = vmatpush1.bf16.msra.mxu0 %v5502
  %5592 = vmatprep.subr.bf16.mxu0 0
  %5593 = vmatpush1.bf16.msra.mxu0 %v5503
  %5594 = vmatprep.subr.bf16.mxu0 0
  %5595 = vmatpush1.bf16.msra.mxu0 %v5504
  %5596 = vmatprep.subr.bf16.mxu0 0
  %5597 = vmatpush1.bf16.msra.mxu0 %v5505
  %5598 = vmatprep.subr.bf16.mxu0 0
  %5599 = vmatpush1.bf16.msra.mxu0 %v5506
  %5600 = vmatprep.subr.bf16.mxu0 0
  %5601 = vmatpush1.bf16.msra.mxu0 %v5507
  %5602 = vmatprep.subr.bf16.mxu0 0
  %5603 = vmatpush1.bf16.msra.mxu0 %v5508
  %5604 = vmatprep.subr.bf16.mxu0 0
  %5605 = vmatpush1.bf16.msra.mxu0 %v5509
  %5606 = vmatprep.mubr.bf16.mxu0 %v5243
  %5607 = vmatmul.mubr.bf16.gmra.mrb[0].mxu0 %v5242
  %v5608 = vpop.f32.mrb[0].mxu0
  %v5609 = vadd.f32 %v5332, %v5608
  %v5610 = vpop.f32.mrb[0].mxu0
  %v5611 = vpop.f32.mrb[0].mxu0
  %v5612 = vpop.f32.mrb[0].mxu0
  %5613 = vdwg.mxu0
  %5614 = vmatprep.subr.bf16.mxu0 0
  %5615 = vmatpush1.bf16.msra.mxu0 %v5510
  %5616 = vmatprep.subr.bf16.mxu0 0
  %5617 = vmatpush1.bf16.msra.mxu0 %v5511
  %5618 = vmatprep.subr.bf16.mxu0 0
  %5619 = vmatpush1.bf16.msra.mxu0 %v5512
  %5620 = vmatprep.subr.bf16.mxu0 0
  %5621 = vmatpush1.bf16.msra.mxu0 %v5513
  %5622 = vmatprep.subr.bf16.mxu0 0
  %5623 = vmatpush1.bf16.msra.mxu0 %v5514
  %5624 = vmatprep.subr.bf16.mxu0 0
  %5625 = vmatpush1.bf16.msra.mxu0 %v5515
  %5626 = vmatprep.subr.bf16.mxu0 0
  %5627 = vmatpush1.bf16.msra.mxu0 %v5516
  %5628 = vmatprep.subr.bf16.mxu0 0
  %5629 = vmatpush1.bf16.msra.mxu0 %v5517
  %5630 = vmatprep.subr.bf16.mxu0 0
  %5631 = vmatpush1.bf16.msra.mxu0 %v5518
  %5632 = vmatprep.subr.bf16.mxu0 0
  %5633 = vmatpush1.bf16.msra.mxu0 %v5519
  %5634 = vmatprep.subr.bf16.mxu0 0
  %5635 = vmatpush1.bf16.msra.mxu0 %v5520
  %5636 = vmatprep.subr.bf16.mxu0 0
  %5637 = vmatpush1.bf16.msra.mxu0 %v5521
  %5638 = vmatprep.subr.bf16.mxu0 0
  %5639 = vmatpush1.bf16.msra.mxu0 %v5522
  %5640 = vmatprep.subr.bf16.mxu0 0
  %5641 = vmatpush1.bf16.msra.mxu0 %v5523
  %5642 = vmatprep.subr.bf16.mxu0 0
  %5643 = vmatpush1.bf16.msra.mxu0 %v5524
  %5644 = vmatprep.subr.bf16.mxu0 0
  %5645 = vmatpush1.bf16.msra.mxu0 %v5525
  %5646 = vmatprep.mubr.bf16.mxu0 %v5245
  %5647 = vmatmul.mubr.bf16.gmra.mrb[0].mxu0 %v5244
  %v5648 = vpop.f32.mrb[0].mxu0
  %v5649 = vadd.f32 %v5609, %v5648
  %v5650 = vpop.f32.mrb[0].mxu0
  %v5651 = vpop.f32.mrb[0].mxu0
  %v5652 = vpop.f32.mrb[0].mxu0
  %5653 = vdwg.mxu0
  %5654 = vmatprep.subr.bf16.mxu0 0
  %5655 = vmatpush1.bf16.msra.mxu0 %v5526
  %5656 = vmatprep.subr.bf16.mxu0 0
  %5657 = vmatpush1.bf16.msra.mxu0 %v5527
  %5658 = vmatprep.subr.bf16.mxu0 0
  %5659 = vmatpush1.bf16.msra.mxu0 %v5528
  %5660 = vmatprep.subr.bf16.mxu0 0
  %5661 = vmatpush1.bf16.msra.mxu0 %v5529
  %5662 = vmatprep.subr.bf16.mxu0 0
  %5663 = vmatpush1.bf16.msra.mxu0 %v5530
  %5664 = vmatprep.subr.bf16.mxu0 0
  %5665 = vmatpush1.bf16.msra.mxu0 %v5531
  %5666 = vmatprep.subr.bf16.mxu0 0
  %5667 = vmatpush1.bf16.msra.mxu0 %v5532
  %5668 = vmatprep.subr.bf16.mxu0 0
  %5669 = vmatpush1.bf16.msra.mxu0 %v5533
  %5670 = vmatprep.subr.bf16.mxu0 0
  %5671 = vmatpush1.bf16.msra.mxu0 0
  %5672 = vmatprep.subr.bf16.mxu0 0
  %5673 = vmatpush1.bf16.msra.mxu0 0
  %5674 = vmatprep.subr.bf16.mxu0 0
  %5675 = vmatpush1.bf16.msra.mxu0 0
  %5676 = vmatprep.subr.bf16.mxu0 0
  %5677 = vmatpush1.bf16.msra.mxu0 0
  %5678 = vmatprep.subr.bf16.mxu0 0
  %5679 = vmatpush1.bf16.msra.mxu0 0
  %5680 = vmatprep.subr.bf16.mxu0 0
  %5681 = vmatpush1.bf16.msra.mxu0 0
  %5682 = vmatprep.subr.bf16.mxu0 0
  %5683 = vmatpush1.bf16.msra.mxu0 0
  %5684 = vmatprep.subr.bf16.mxu0 0
  %5685 = vmatpush1.bf16.msra.mxu0 0
  %5686 = vmatprep.mubr.bf16.mxu0 0
  %5687 = vmatmul.mubr.bf16.gmra.mrb[0].mxu0 %v5246
  %v5688 = vpop.f32.mrb[0].mxu0
  %v5689 = vadd.f32 %v5649, %v5688
  %v5690 = vpop.f32.mrb[0].mxu0
  %v5691 = vpop.f32.mrb[0].mxu0
  %v5692 = vpop.f32.mrb[0].mxu0
  %5693 = vdwg.mxu0
  %5694 = vst [vmem:[%s14] sm:$0xff] %v5689
  // Predicated region
  $region58: #{convnet_forward.1} parent=0 // pred_check
    _
  $region59: #{convnet_forward.1} parent=0 // pred_check_branch
    %5696 = sbr.rel (0) target = $region61
  $region60: #{convnet_forward.1} parent=0 // pred_region
    _
  $region61: #{convnet_forward.1} parent=0 // pred_fallthru
    _
  // Predicated region
  $region62: #{convnet_forward.1} parent=0 // pred_check
    _
  $region63: #{convnet_forward.1} parent=0 // pred_check_branch
    %5698 = sbr.rel (0) target = $region65
  $region64: #{convnet_forward.1} parent=0 // pred_region
    _
  $region65: #{convnet_forward.1} parent=0 // pred_fallthru
    _

</llo_original>
